<compile_context>
chip_gen: v7x
topology: tpu7x:2x2x1
jax: 0.10.0
libtpu: 0.0.40
codegen_flags: <defaults>
</compile_context>

<pallas_src>
import functools
import math

import jax
import jax.numpy as jnp
from jax.experimental import pallas as pl
from jax.experimental.pallas import tpu as pltpu


def mab_kernel(q_ref, v_ref,
               wq_ref, bq_ref, wk_ref, bk_ref, wv_ref, bv_ref,
               wo_ref, bo_ref, wfc_ref, bfc_ref,
               o_ref, *, num_heads):
    """One batch-block grid step of the fused MAB forward pass (all heads)."""
    bb, T, D = q_ref.shape
    hd = D // num_heads
    cdt = q_ref.dtype                       # bf16 operands -> full-rate MXU

    # Pack the batch block into M so the big matmuls are (bb*T, D) @ (D, D).
    q2 = q_ref[...].reshape(bb * T, D)
    v2 = v_ref[...].reshape(bb * T, D)

    # Full-width projections.  The 1/sqrt(D) attention scale is pre-folded into Wq/bq.
    qp = (jnp.dot(q2, wq_ref[...], preferred_element_type=jnp.float32)
          + bq_ref[...].astype(jnp.float32))
    kp = (jnp.dot(v2, wk_ref[...], preferred_element_type=jnp.float32)
          + bk_ref[...].astype(jnp.float32))
    vp = (jnp.dot(v2, wv_ref[...], preferred_element_type=jnp.float32)
          + bv_ref[...].astype(jnp.float32))
    qp = qp.astype(cdt).reshape(bb, T, D)
    kp = kp.astype(cdt).reshape(bb, T, D)
    vp = vp.astype(cdt).reshape(bb, T, D)

    # Per-head scaled dot-product attention (mask=None, dropout=0).  num_heads is a
    # small compile-time constant, so a static Python loop with static lane slices
    # fully unrolls (equivalent to fori_loop(..., unroll=True) with static indices).
    head_outs = []
    for h in range(num_heads):
        sl = slice(h * hd, (h + 1) * hd)
        qh, kh, vh = qp[:, :, sl], kp[:, :, sl], vp[:, :, sl]
        s = jnp.einsum('bqd,bkd->bqk', qh, kh,
                       preferred_element_type=jnp.float32)        # (bb, T, T)
        s = s - jnp.max(s, axis=-1, keepdims=True)
        p = jnp.exp(s)
        l = jnp.sum(p, axis=-1, keepdims=True)
        # Deferred softmax normalization: normalize the (T, hd) output with an EUP
        # approx reciprocal instead of dividing the (T, T) score matrix on the VALU.
        oh = jnp.einsum('bqk,bkd->bqd', p.astype(cdt), vh,
                        preferred_element_type=jnp.float32)        # (bb, T, hd)
        oh = oh * pl.reciprocal(l, approx=True)
        head_outs.append(oh.astype(cdt))

    # concat over heads -> single output-projection matmul with K = D.
    o_cat = jnp.concatenate(head_outs, axis=-1).reshape(bb * T, D)
    attn = (jnp.dot(o_cat, wo_ref[...], preferred_element_type=jnp.float32)
            + bo_ref[...].astype(jnp.float32))

    # ln1 / ln2 are Identity (use_layer_norm=False).
    h1 = q2.astype(jnp.float32) + attn
    out = (h1
           + jnp.dot(h1.astype(cdt), wfc_ref[...],
                     preferred_element_type=jnp.float32)
           + bfc_ref[...].astype(jnp.float32))
    o_ref[...] = out.reshape(bb, T, D).astype(o_ref.dtype)


def mab_forward(q, v, params, *, num_heads, block_b=None,
                compute_dtype=jnp.bfloat16):
    """q, v: (B, T, D).  params = (wq, bq, wk, bk, wv, bv, wo, bo, wfc, bfc),
    weights stored (in_features, out_features) i.e. transposed vs. torch Linear."""
    wq, bq, wk, bk, wv, bv, wo, bo, wfc, bfc = params
    B, T, D = q.shape
    assert v.shape == (B, T, D)
    assert D % num_heads == 0, "dim must be divisible by num_heads"

    scale = 1.0 / math.sqrt(D)   # torch: / dim_v ** 0.5  (full dim, not head dim)

    # bf16 operands for the full-rate MXU paths; accumulation in-kernel stays f32.
    qc = q.astype(compute_dtype)
    vc = v.astype(compute_dtype)
    wq_c = (wq * scale).astype(compute_dtype)                     # fold scale into fc_q
    bq_c = (bq * scale).astype(compute_dtype).reshape(1, D)
    wk_c = wk.astype(compute_dtype)
    bk_c = bk.astype(compute_dtype).reshape(1, D)
    wv_c = wv.astype(compute_dtype)
    bv_c = bv.astype(compute_dtype).reshape(1, D)
    wo_c = wo.astype(compute_dtype)
    bo_c = bo.astype(compute_dtype).reshape(1, D)
    wfc_c = wfc.astype(compute_dtype)
    bfc_c = bfc.astype(compute_dtype).reshape(1, D)

    # Pick the batch block so block_b*T >= ~128 (sublane/MXU-dense M) while keeping at
    # least 2 grid steps when B allows, so the "parallel" axis can feed both TCs (v7x).
    if block_b is None:
        target = max(1, pl.cdiv(128, T))
        if B >= 2:
            target = max(1, min(target, B // 2))
        block_b = 1
        for cand in range(min(B, target), 0, -1):
            if B % cand == 0:
                block_b = cand
                break
    assert B % block_b == 0
    grid = (B // block_b,)

    # Explicit VMEM budget from actual per-step residency (stays << v7x's 64 MiB).
    isz = jnp.dtype(compute_dtype).itemsize
    blk_in = block_b * T * D * isz
    blk_out = block_b * T * D * 4
    w_bytes = (5 * D * D + 6 * D) * isz
    transients = 10 * block_b * T * D * 4 + 2 * block_b * T * T * 4
    est = 2 * (2 * blk_in + blk_out) + 2 * w_bytes + transients
    vmem_limit = int(min(max(2 * est, 16 << 20), 48 << 20))

    flops = 2 * B * T * D * (5 * D + 2 * T)
    bytes_accessed = (3 * B * T * D + 5 * D * D + 6 * D) * isz + B * T * D * 4

    row_spec = pl.BlockSpec((block_b, T, D), lambda i: (i, 0, 0))
    w_spec = pl.BlockSpec((D, D), lambda i: (0, 0))
    b_spec = pl.BlockSpec((1, D), lambda i: (0, 0))

    out = pl.pallas_call(
        functools.partial(mab_kernel, num_heads=num_heads),
        out_shape=jax.ShapeDtypeStruct((B, T, D), jnp.float32),
        grid_spec=pltpu.PrefetchScalarGridSpec(
            num_scalar_prefetch=0,
            grid=grid,
            in_specs=[
                row_spec,            # q block
                row_spec,            # v block
                w_spec, b_spec,      # fc_q (scale folded in)
                w_spec, b_spec,      # fc_k
                w_spec, b_spec,      # fc_v
                w_spec, b_spec,      # fc_o
                w_spec, b_spec,      # final fc
            ],
            out_specs=pl.BlockSpec((block_b, T, D), lambda i: (i, 0, 0)),
        ),
        compiler_params=pltpu.CompilerParams(
            dimension_semantics=("parallel",),
            vmem_limit_bytes=vmem_limit),
        cost_estimate=pl.CostEstimate(
            flops=flops,
            transcendentals=B * num_heads * T * T,
            bytes_accessed=bytes_accessed),
    )(qc, vc, wq_c, bq_c, wk_c, bk_c, wv_c, bv_c, wo_c, bo_c, wfc_c, bfc_c)
    return out


def init_params(key, dim, dtype=jnp.float32):
    """Matches the module init: xavier_normal_ (zero bias) for fc_q/fc_k/fc_v/fc_o,
    kaiming_normal_(mode='fan_out') (zero bias) for the final fc.
    Weights stored as (in, out) = torch_weight.T."""
    ks = jax.random.split(key, 5)
    xavier_std = math.sqrt(2.0 / (dim + dim))
    kaiming_std = math.sqrt(2.0 / dim)       # gain sqrt(2), fan_out = dim
    wq = jax.random.normal(ks[0], (dim, dim), dtype) * xavier_std
    wk = jax.random.normal(ks[1], (dim, dim), dtype) * xavier_std
    wv = jax.random.normal(ks[2], (dim, dim), dtype) * xavier_std
    wo = jax.random.normal(ks[3], (dim, dim), dtype) * xavier_std
    wfc = jax.random.normal(ks[4], (dim, dim), dtype) * kaiming_std
    zeros = jnp.zeros((dim,), dtype)
    return (wq, zeros, wk, zeros, wv, zeros, wo, zeros, wfc, zeros)


def mab_reference(q, v, params, num_heads):
    """Plain-JAX replica of MAB.forward (use_layer_norm=False, dropout=0, mask=None)."""
    wq, bq, wk, bk, wv, bv, wo, bo, wfc, bfc = params
    B, T, D = q.shape
    hd = D // num_heads
    hp = jax.lax.Precision.HIGHEST
    qp = jnp.dot(q, wq, precision=hp) + bq
    kp = jnp.dot(v, wk, precision=hp) + bk
    vp = jnp.dot(v, wv, precision=hp) + bv

    def split_heads(x):
        return x.reshape(B, T, num_heads, hd).transpose(0, 2, 1, 3)   # (B, H, T, hd)

    qh, kh, vh = split_heads(qp), split_heads(kp), split_heads(vp)
    a = jnp.einsum('bhqd,bhkd->bhqk', qh, kh, precision=hp) / math.sqrt(D)
    a = jax.nn.softmax(a, axis=-1)
    o = jnp.einsum('bhqk,bhkd->bhqd', a, vh, precision=hp)
    o = o.transpose(0, 2, 1, 3).reshape(B, T, D)
    attn = jnp.dot(o, wo, precision=hp) + bo
    h1 = q + attn
    return h1 + jnp.dot(h1, wfc, precision=hp) + bfc


if __name__ == "__main__":
    # dim=128 -> lane-dense tiles; batch*seq packs to M=128 per grid step, grid=(2,).
    batch, seq, dim, num_heads = 16, 16, 128, 4

    key = jax.random.PRNGKey(0)
    kq, kv, kp = jax.random.split(key, 3)
    q = jax.random.normal(kq, (batch, seq, dim), jnp.float32)
    v = jax.random.normal(kv, (batch, seq, dim), jnp.float32)
    params = init_params(kp, dim)

    out = mab_forward(q, v, params, num_heads=num_heads)
    out = jax.block_until_ready(out)

    # Reference in f32 on the same bf16-rounded operands the kernel consumes.
    f32 = jnp.float32
    q_r = q.astype(jnp.bfloat16).astype(f32)
    v_r = v.astype(jnp.bfloat16).astype(f32)
    params_r = tuple(p.astype(jnp.bfloat16).astype(f32) for p in params)
    ref = mab_reference(q_r, v_r, params_r, num_heads)

    assert out.shape == (batch, seq, dim)
    max_err = float(jnp.max(jnp.abs(out - ref)))
    assert jnp.allclose(out, ref, atol=5e-2, rtol=5e-2), max_err

    print("KERNEL_OK")
</pallas_src>

<mosaic_0001>
module attributes {stable_mosaic.version = 11 : i64} {
  func.func @mab_kernel(%arg0: i32, %arg1: memref<8x16x128xbf16, #tpu.memory_space<vmem>>, %arg2: memref<8x16x128xbf16, #tpu.memory_space<vmem>>, %arg3: memref<128x128xbf16, #tpu.memory_space<vmem>>, %arg4: memref<1x128xbf16, #tpu.memory_space<vmem>>, %arg5: memref<128x128xbf16, #tpu.memory_space<vmem>>, %arg6: memref<1x128xbf16, #tpu.memory_space<vmem>>, %arg7: memref<128x128xbf16, #tpu.memory_space<vmem>>, %arg8: memref<1x128xbf16, #tpu.memory_space<vmem>>, %arg9: memref<128x128xbf16, #tpu.memory_space<vmem>>, %arg10: memref<1x128xbf16, #tpu.memory_space<vmem>>, %arg11: memref<128x128xbf16, #tpu.memory_space<vmem>>, %arg12: memref<1x128xbf16, #tpu.memory_space<vmem>>, %arg13: memref<8x16x128xf32, #tpu.memory_space<vmem>>) attributes {dimension_semantics = [#tpu.dimension_semantics<parallel>], iteration_bounds = array<i64: 2>, scalar_prefetch = 0 : i64, scratch_operands = 0 : i64, tpu.core_type = #tpu.core_type<tc>, window_params = [{transform_indices = @transform_0, window_bounds = array<i64: 8, 16, 128>}, {transform_indices = @transform_1, window_bounds = array<i64: 8, 16, 128>}, {pipeline_mode = #tpu.pipeline_mode<synchronous>, transform_indices = @transform_2, window_bounds = array<i64: 128, 128>}, {pipeline_mode = #tpu.pipeline_mode<synchronous>, transform_indices = @transform_3, window_bounds = array<i64: 1, 128>}, {pipeline_mode = #tpu.pipeline_mode<synchronous>, transform_indices = @transform_4, window_bounds = array<i64: 128, 128>}, {pipeline_mode = #tpu.pipeline_mode<synchronous>, transform_indices = @transform_5, window_bounds = array<i64: 1, 128>}, {pipeline_mode = #tpu.pipeline_mode<synchronous>, transform_indices = @transform_6, window_bounds = array<i64: 128, 128>}, {pipeline_mode = #tpu.pipeline_mode<synchronous>, transform_indices = @transform_7, window_bounds = array<i64: 1, 128>}, {pipeline_mode = #tpu.pipeline_mode<synchronous>, transform_indices = @transform_8, window_bounds = array<i64: 128, 128>}, {pipeline_mode = #tpu.pipeline_mode<synchronous>, transform_indices = @transform_9, window_bounds = array<i64: 1, 128>}, {pipeline_mode = #tpu.pipeline_mode<synchronous>, transform_indices = @transform_10, window_bounds = array<i64: 128, 128>}, {pipeline_mode = #tpu.pipeline_mode<synchronous>, transform_indices = @transform_11, window_bounds = array<i64: 1, 128>}, {transform_indices = @transform_12, window_bounds = array<i64: 8, 16, 128>}]} {
    %c0 = arith.constant 0 : index
    %c0_0 = arith.constant 0 : index
    %c0_1 = arith.constant 0 : index
    %0 = vector.load %arg1[%c0, %c0_0, %c0_1] : memref<8x16x128xbf16, #tpu.memory_space<vmem>>, vector<8x16x128xbf16>
    %1 = vector.shape_cast %0 : vector<8x16x128xbf16> to vector<128x128xbf16>
    %c0_2 = arith.constant 0 : index
    %c0_3 = arith.constant 0 : index
    %c0_4 = arith.constant 0 : index
    %2 = vector.load %arg2[%c0_2, %c0_3, %c0_4] : memref<8x16x128xbf16, #tpu.memory_space<vmem>>, vector<8x16x128xbf16>
    %3 = vector.shape_cast %2 : vector<8x16x128xbf16> to vector<128x128xbf16>
    %c0_5 = arith.constant 0 : index
    %c0_6 = arith.constant 0 : index
    %4 = vector.load %arg3[%c0_5, %c0_6] : memref<128x128xbf16, #tpu.memory_space<vmem>>, vector<128x128xbf16>
    %cst = arith.constant dense<0.000000e+00> : vector<128x128xf32>
    %5 = tpu.matmul %1, %4, %cst {dimension_numbers = #tpu.dot_dimension_numbers<[1], [0], [0], [1], [0, 0, 1, 1], [], []>} : vector<128x128xbf16>, vector<128x128xbf16>, vector<128x128xf32> -> vector<128x128xf32>
    %c0_7 = arith.constant 0 : index
    %c0_8 = arith.constant 0 : index
    %6 = vector.load %arg4[%c0_7, %c0_8] : memref<1x128xbf16, #tpu.memory_space<vmem>>, vector<1x128xbf16>
    %7 = arith.extf %6 : vector<1x128xbf16> to vector<1x128xf32>
    %8 = vector.broadcast %7 : vector<1x128xf32> to vector<128x128xf32>
    %9 = arith.addf %5, %8 : vector<128x128xf32>
    %c0_9 = arith.constant 0 : index
    %c0_10 = arith.constant 0 : index
    %10 = vector.load %arg5[%c0_9, %c0_10] : memref<128x128xbf16, #tpu.memory_space<vmem>>, vector<128x128xbf16>
    %cst_11 = arith.constant dense<0.000000e+00> : vector<128x128xf32>
    %11 = tpu.matmul %3, %10, %cst_11 {dimension_numbers = #tpu.dot_dimension_numbers<[1], [0], [0], [1], [0, 0, 1, 1], [], []>} : vector<128x128xbf16>, vector<128x128xbf16>, vector<128x128xf32> -> vector<128x128xf32>
    %c0_12 = arith.constant 0 : index
    %c0_13 = arith.constant 0 : index
    %12 = vector.load %arg6[%c0_12, %c0_13] : memref<1x128xbf16, #tpu.memory_space<vmem>>, vector<1x128xbf16>
    %13 = arith.extf %12 : vector<1x128xbf16> to vector<1x128xf32>
    %14 = vector.broadcast %13 : vector<1x128xf32> to vector<128x128xf32>
    %15 = arith.addf %11, %14 : vector<128x128xf32>
    %c0_14 = arith.constant 0 : index
    %c0_15 = arith.constant 0 : index
    %16 = vector.load %arg7[%c0_14, %c0_15] : memref<128x128xbf16, #tpu.memory_space<vmem>>, vector<128x128xbf16>
    %cst_16 = arith.constant dense<0.000000e+00> : vector<128x128xf32>
    %17 = tpu.matmul %3, %16, %cst_16 {dimension_numbers = #tpu.dot_dimension_numbers<[1], [0], [0], [1], [0, 0, 1, 1], [], []>} : vector<128x128xbf16>, vector<128x128xbf16>, vector<128x128xf32> -> vector<128x128xf32>
    %c0_17 = arith.constant 0 : index
    %c0_18 = arith.constant 0 : index
    %18 = vector.load %arg8[%c0_17, %c0_18] : memref<1x128xbf16, #tpu.memory_space<vmem>>, vector<1x128xbf16>
    %19 = arith.extf %18 : vector<1x128xbf16> to vector<1x128xf32>
    %20 = vector.broadcast %19 : vector<1x128xf32> to vector<128x128xf32>
    %21 = arith.addf %17, %20 : vector<128x128xf32>
    %22 = arith.truncf %9 : vector<128x128xf32> to vector<128x128xbf16>
    %23 = vector.shape_cast %22 : vector<128x128xbf16> to vector<8x16x128xbf16>
    %24 = arith.truncf %15 : vector<128x128xf32> to vector<128x128xbf16>
    %25 = vector.shape_cast %24 : vector<128x128xbf16> to vector<8x16x128xbf16>
    %26 = arith.truncf %21 : vector<128x128xf32> to vector<128x128xbf16>
    %27 = vector.shape_cast %26 : vector<128x128xbf16> to vector<8x16x128xbf16>
    %28 = vector.extract_strided_slice %23 {offsets = [0, 0, 0], sizes = [8, 16, 32], strides = [1, 1, 1]} : vector<8x16x128xbf16> to vector<8x16x32xbf16>
    %29 = vector.extract_strided_slice %25 {offsets = [0, 0, 0], sizes = [8, 16, 32], strides = [1, 1, 1]} : vector<8x16x128xbf16> to vector<8x16x32xbf16>
    %30 = vector.extract_strided_slice %27 {offsets = [0, 0, 0], sizes = [8, 16, 32], strides = [1, 1, 1]} : vector<8x16x128xbf16> to vector<8x16x32xbf16>
    "tpu.trace_start"() <{level = 10 : i32, message = "bqd,bkd->bqk"}> : () -> ()
    %cst_19 = arith.constant dense<0.000000e+00> : vector<8x16x16xf32>
    %31 = tpu.matmul %28, %29, %cst_19 {dimension_numbers = #tpu.dot_dimension_numbers<[2], [2], [1], [1], [0, 0, 0, 1, 1, 1], [0], [0]>} : vector<8x16x32xbf16>, vector<8x16x32xbf16>, vector<8x16x16xf32> -> vector<8x16x16xf32>
    "tpu.trace_stop"() : () -> ()
    %cst_20 = arith.constant dense<0xFF800000> : vector<8x16xf32>
    %32 = vector.multi_reduction <maximumf>, %31, %cst_20 [2] : vector<8x16x16xf32> to vector<8x16xf32>
    %33 = vector.shape_cast %32 : vector<8x16xf32> to vector<8x16x1xf32>
    %34 = vector.broadcast %33 : vector<8x16x1xf32> to vector<8x16x16xf32>
    %35 = arith.subf %31, %34 : vector<8x16x16xf32>
    %36 = math.exp %35 : vector<8x16x16xf32>
    %cst_21 = arith.constant dense<0.000000e+00> : vector<8x16xf32>
    %37 = vector.multi_reduction <add>, %36, %cst_21 [2] : vector<8x16x16xf32> to vector<8x16xf32>
    %38 = vector.shape_cast %37 : vector<8x16xf32> to vector<8x16x1xf32>
    %39 = arith.truncf %36 : vector<8x16x16xf32> to vector<8x16x16xbf16>
    "tpu.trace_start"() <{level = 10 : i32, message = "bqk,bkd->bqd"}> : () -> ()
    %cst_22 = arith.constant dense<0.000000e+00> : vector<8x16x32xf32>
    %40 = tpu.matmul %39, %30, %cst_22 {dimension_numbers = #tpu.dot_dimension_numbers<[2], [1], [1], [2], [0, 0, 0, 1, 1, 2], [0], [0]>} : vector<8x16x16xbf16>, vector<8x16x32xbf16>, vector<8x16x32xf32> -> vector<8x16x32xf32>
    "tpu.trace_stop"() : () -> ()
    %41 = tpu.reciprocal %38 {approx = true} : vector<8x16x1xf32> -> vector<8x16x1xf32>
    %42 = vector.broadcast %41 : vector<8x16x1xf32> to vector<8x16x32xf32>
    %43 = arith.mulf %40, %42 : vector<8x16x32xf32>
    %44 = arith.truncf %43 : vector<8x16x32xf32> to vector<8x16x32xbf16>
    %45 = vector.extract_strided_slice %23 {offsets = [0, 0, 32], sizes = [8, 16, 32], strides = [1, 1, 1]} : vector<8x16x128xbf16> to vector<8x16x32xbf16>
    %46 = vector.extract_strided_slice %25 {offsets = [0, 0, 32], sizes = [8, 16, 32], strides = [1, 1, 1]} : vector<8x16x128xbf16> to vector<8x16x32xbf16>
    %47 = vector.extract_strided_slice %27 {offsets = [0, 0, 32], sizes = [8, 16, 32], strides = [1, 1, 1]} : vector<8x16x128xbf16> to vector<8x16x32xbf16>
    "tpu.trace_start"() <{level = 10 : i32, message = "bqd,bkd->bqk"}> : () -> ()
    %cst_23 = arith.constant dense<0.000000e+00> : vector<8x16x16xf32>
    %48 = tpu.matmul %45, %46, %cst_23 {dimension_numbers = #tpu.dot_dimension_numbers<[2], [2], [1], [1], [0, 0, 0, 1, 1, 1], [0], [0]>} : vector<8x16x32xbf16>, vector<8x16x32xbf16>, vector<8x16x16xf32> -> vector<8x16x16xf32>
    "tpu.trace_stop"() : () -> ()
    %cst_24 = arith.constant dense<0xFF800000> : vector<8x16xf32>
    %49 = vector.multi_reduction <maximumf>, %48, %cst_24 [2] : vector<8x16x16xf32> to vector<8x16xf32>
    %50 = vector.shape_cast %49 : vector<8x16xf32> to vector<8x16x1xf32>
    %51 = vector.broadcast %50 : vector<8x16x1xf32> to vector<8x16x16xf32>
    %52 = arith.subf %48, %51 : vector<8x16x16xf32>
    %53 = math.exp %52 : vector<8x16x16xf32>
    %cst_25 = arith.constant dense<0.000000e+00> : vector<8x16xf32>
    %54 = vector.multi_reduction <add>, %53, %cst_25 [2] : vector<8x16x16xf32> to vector<8x16xf32>
    %55 = vector.shape_cast %54 : vector<8x16xf32> to vector<8x16x1xf32>
    %56 = arith.truncf %53 : vector<8x16x16xf32> to vector<8x16x16xbf16>
    "tpu.trace_start"() <{level = 10 : i32, message = "bqk,bkd->bqd"}> : () -> ()
    %cst_26 = arith.constant dense<0.000000e+00> : vector<8x16x32xf32>
    %57 = tpu.matmul %56, %47, %cst_26 {dimension_numbers = #tpu.dot_dimension_numbers<[2], [1], [1], [2], [0, 0, 0, 1, 1, 2], [0], [0]>} : vector<8x16x16xbf16>, vector<8x16x32xbf16>, vector<8x16x32xf32> -> vector<8x16x32xf32>
    "tpu.trace_stop"() : () -> ()
    %58 = tpu.reciprocal %55 {approx = true} : vector<8x16x1xf32> -> vector<8x16x1xf32>
    %59 = vector.broadcast %58 : vector<8x16x1xf32> to vector<8x16x32xf32>
    %60 = arith.mulf %57, %59 : vector<8x16x32xf32>
    %61 = arith.truncf %60 : vector<8x16x32xf32> to vector<8x16x32xbf16>
    %62 = vector.extract_strided_slice %23 {offsets = [0, 0, 64], sizes = [8, 16, 32], strides = [1, 1, 1]} : vector<8x16x128xbf16> to vector<8x16x32xbf16>
    %63 = vector.extract_strided_slice %25 {offsets = [0, 0, 64], sizes = [8, 16, 32], strides = [1, 1, 1]} : vector<8x16x128xbf16> to vector<8x16x32xbf16>
    %64 = vector.extract_strided_slice %27 {offsets = [0, 0, 64], sizes = [8, 16, 32], strides = [1, 1, 1]} : vector<8x16x128xbf16> to vector<8x16x32xbf16>
    "tpu.trace_start"() <{level = 10 : i32, message = "bqd,bkd->bqk"}> : () -> ()
    %cst_27 = arith.constant dense<0.000000e+00> : vector<8x16x16xf32>
    %65 = tpu.matmul %62, %63, %cst_27 {dimension_numbers = #tpu.dot_dimension_numbers<[2], [2], [1], [1], [0, 0, 0, 1, 1, 1], [0], [0]>} : vector<8x16x32xbf16>, vector<8x16x32xbf16>, vector<8x16x16xf32> -> vector<8x16x16xf32>
    "tpu.trace_stop"() : () -> ()
    %cst_28 = arith.constant dense<0xFF800000> : vector<8x16xf32>
    %66 = vector.multi_reduction <maximumf>, %65, %cst_28 [2] : vector<8x16x16xf32> to vector<8x16xf32>
    %67 = vector.shape_cast %66 : vector<8x16xf32> to vector<8x16x1xf32>
    %68 = vector.broadcast %67 : vector<8x16x1xf32> to vector<8x16x16xf32>
    %69 = arith.subf %65, %68 : vector<8x16x16xf32>
    %70 = math.exp %69 : vector<8x16x16xf32>
    %cst_29 = arith.constant dense<0.000000e+00> : vector<8x16xf32>
    %71 = vector.multi_reduction <add>, %70, %cst_29 [2] : vector<8x16x16xf32> to vector<8x16xf32>
    %72 = vector.shape_cast %71 : vector<8x16xf32> to vector<8x16x1xf32>
    %73 = arith.truncf %70 : vector<8x16x16xf32> to vector<8x16x16xbf16>
    "tpu.trace_start"() <{level = 10 : i32, message = "bqk,bkd->bqd"}> : () -> ()
    %cst_30 = arith.constant dense<0.000000e+00> : vector<8x16x32xf32>
    %74 = tpu.matmul %73, %64, %cst_30 {dimension_numbers = #tpu.dot_dimension_numbers<[2], [1], [1], [2], [0, 0, 0, 1, 1, 2], [0], [0]>} : vector<8x16x16xbf16>, vector<8x16x32xbf16>, vector<8x16x32xf32> -> vector<8x16x32xf32>
    "tpu.trace_stop"() : () -> ()
    %75 = tpu.reciprocal %72 {approx = true} : vector<8x16x1xf32> -> vector<8x16x1xf32>
    %76 = vector.broadcast %75 : vector<8x16x1xf32> to vector<8x16x32xf32>
    %77 = arith.mulf %74, %76 : vector<8x16x32xf32>
    %78 = arith.truncf %77 : vector<8x16x32xf32> to vector<8x16x32xbf16>
    %79 = vector.extract_strided_slice %23 {offsets = [0, 0, 96], sizes = [8, 16, 32], strides = [1, 1, 1]} : vector<8x16x128xbf16> to vector<8x16x32xbf16>
    %80 = vector.extract_strided_slice %25 {offsets = [0, 0, 96], sizes = [8, 16, 32], strides = [1, 1, 1]} : vector<8x16x128xbf16> to vector<8x16x32xbf16>
    %81 = vector.extract_strided_slice %27 {offsets = [0, 0, 96], sizes = [8, 16, 32], strides = [1, 1, 1]} : vector<8x16x128xbf16> to vector<8x16x32xbf16>
    "tpu.trace_start"() <{level = 10 : i32, message = "bqd,bkd->bqk"}> : () -> ()
    %cst_31 = arith.constant dense<0.000000e+00> : vector<8x16x16xf32>
    %82 = tpu.matmul %79, %80, %cst_31 {dimension_numbers = #tpu.dot_dimension_numbers<[2], [2], [1], [1], [0, 0, 0, 1, 1, 1], [0], [0]>} : vector<8x16x32xbf16>, vector<8x16x32xbf16>, vector<8x16x16xf32> -> vector<8x16x16xf32>
    "tpu.trace_stop"() : () -> ()
    %cst_32 = arith.constant dense<0xFF800000> : vector<8x16xf32>
    %83 = vector.multi_reduction <maximumf>, %82, %cst_32 [2] : vector<8x16x16xf32> to vector<8x16xf32>
    %84 = vector.shape_cast %83 : vector<8x16xf32> to vector<8x16x1xf32>
    %85 = vector.broadcast %84 : vector<8x16x1xf32> to vector<8x16x16xf32>
    %86 = arith.subf %82, %85 : vector<8x16x16xf32>
    %87 = math.exp %86 : vector<8x16x16xf32>
    %cst_33 = arith.constant dense<0.000000e+00> : vector<8x16xf32>
    %88 = vector.multi_reduction <add>, %87, %cst_33 [2] : vector<8x16x16xf32> to vector<8x16xf32>
    %89 = vector.shape_cast %88 : vector<8x16xf32> to vector<8x16x1xf32>
    %90 = arith.truncf %87 : vector<8x16x16xf32> to vector<8x16x16xbf16>
    "tpu.trace_start"() <{level = 10 : i32, message = "bqk,bkd->bqd"}> : () -> ()
    %cst_34 = arith.constant dense<0.000000e+00> : vector<8x16x32xf32>
    %91 = tpu.matmul %90, %81, %cst_34 {dimension_numbers = #tpu.dot_dimension_numbers<[2], [1], [1], [2], [0, 0, 0, 1, 1, 2], [0], [0]>} : vector<8x16x16xbf16>, vector<8x16x32xbf16>, vector<8x16x32xf32> -> vector<8x16x32xf32>
    "tpu.trace_stop"() : () -> ()
    %92 = tpu.reciprocal %89 {approx = true} : vector<8x16x1xf32> -> vector<8x16x1xf32>
    %93 = vector.broadcast %92 : vector<8x16x1xf32> to vector<8x16x32xf32>
    %94 = arith.mulf %91, %93 : vector<8x16x32xf32>
    %95 = arith.truncf %94 : vector<8x16x32xf32> to vector<8x16x32xbf16>
    %96 = tpu.concatenate %44, %61, %78, %95 in 2 : vector<8x16x32xbf16>, vector<8x16x32xbf16>, vector<8x16x32xbf16>, vector<8x16x32xbf16> -> vector<8x16x128xbf16>
    %97 = vector.shape_cast %96 : vector<8x16x128xbf16> to vector<128x128xbf16>
    %c0_35 = arith.constant 0 : index
    %c0_36 = arith.constant 0 : index
    %98 = vector.load %arg9[%c0_35, %c0_36] : memref<128x128xbf16, #tpu.memory_space<vmem>>, vector<128x128xbf16>
    %cst_37 = arith.constant dense<0.000000e+00> : vector<128x128xf32>
    %99 = tpu.matmul %97, %98, %cst_37 {dimension_numbers = #tpu.dot_dimension_numbers<[1], [0], [0], [1], [0, 0, 1, 1], [], []>} : vector<128x128xbf16>, vector<128x128xbf16>, vector<128x128xf32> -> vector<128x128xf32>
    %c0_38 = arith.constant 0 : index
    %c0_39 = arith.constant 0 : index
    %100 = vector.load %arg10[%c0_38, %c0_39] : memref<1x128xbf16, #tpu.memory_space<vmem>>, vector<1x128xbf16>
    %101 = arith.extf %100 : vector<1x128xbf16> to vector<1x128xf32>
    %102 = vector.broadcast %101 : vector<1x128xf32> to vector<128x128xf32>
    %103 = arith.addf %99, %102 : vector<128x128xf32>
    %104 = arith.extf %1 : vector<128x128xbf16> to vector<128x128xf32>
    %105 = arith.addf %104, %103 : vector<128x128xf32>
    %106 = arith.truncf %105 : vector<128x128xf32> to vector<128x128xbf16>
    %c0_40 = arith.constant 0 : index
    %c0_41 = arith.constant 0 : index
    %107 = vector.load %arg11[%c0_40, %c0_41] : memref<128x128xbf16, #tpu.memory_space<vmem>>, vector<128x128xbf16>
    %cst_42 = arith.constant dense<0.000000e+00> : vector<128x128xf32>
    %108 = tpu.matmul %106, %107, %cst_42 {dimension_numbers = #tpu.dot_dimension_numbers<[1], [0], [0], [1], [0, 0, 1, 1], [], []>} : vector<128x128xbf16>, vector<128x128xbf16>, vector<128x128xf32> -> vector<128x128xf32>
    %109 = arith.addf %105, %108 : vector<128x128xf32>
    %c0_43 = arith.constant 0 : index
    %c0_44 = arith.constant 0 : index
    %110 = vector.load %arg12[%c0_43, %c0_44] : memref<1x128xbf16, #tpu.memory_space<vmem>>, vector<1x128xbf16>
    %111 = arith.extf %110 : vector<1x128xbf16> to vector<1x128xf32>
    %112 = vector.broadcast %111 : vector<1x128xf32> to vector<128x128xf32>
    %113 = arith.addf %109, %112 : vector<128x128xf32>
    %114 = vector.shape_cast %113 : vector<128x128xf32> to vector<8x16x128xf32>
    %c0_45 = arith.constant 0 : index
    %c0_46 = arith.constant 0 : index
    %c0_47 = arith.constant 0 : index
    %115 = vector.load %arg13[%c0_45, %c0_46, %c0_47] : memref<8x16x128xf32, #tpu.memory_space<vmem>>, vector<8x16x128xf32>
    tpu.vector_store %arg13[%c0_45, %c0_46, %c0_47], %114 {strides = array<i32>} : memref<8x16x128xf32, #tpu.memory_space<vmem>>, vector<8x16x128xf32>,
    return
  }
  func.func @transform_0(%arg0: i32) -> (i32, i32, i32) {
    %c0_i32 = arith.constant 0 : i32
    %c0_i32_0 = arith.constant 0 : i32
    %c0_i32_1 = arith.constant 0 : i32
    return %arg0, %c0_i32, %c0_i32_0 : i32, i32, i32
  }
  func.func @transform_1(%arg0: i32) -> (i32, i32, i32) {
    %c0_i32 = arith.constant 0 : i32
    %c0_i32_0 = arith.constant 0 : i32
    %c0_i32_1 = arith.constant 0 : i32
    return %arg0, %c0_i32, %c0_i32_0 : i32, i32, i32
  }
  func.func @transform_2(%arg0: i32) -> (i32, i32) {
    %c0_i32 = arith.constant 0 : i32
    %c0_i32_0 = arith.constant 0 : i32
    %c0_i32_1 = arith.constant 0 : i32
    return %c0_i32, %c0_i32_0 : i32, i32
  }
  func.func @transform_3(%arg0: i32) -> (i32, i32) {
    %c0_i32 = arith.constant 0 : i32
    %c0_i32_0 = arith.constant 0 : i32
    %c0_i32_1 = arith.constant 0 : i32
    return %c0_i32, %c0_i32_0 : i32, i32
  }
  func.func @transform_4(%arg0: i32) -> (i32, i32) {
    %c0_i32 = arith.constant 0 : i32
    %c0_i32_0 = arith.constant 0 : i32
    %c0_i32_1 = arith.constant 0 : i32
    return %c0_i32, %c0_i32_0 : i32, i32
  }
  func.func @transform_5(%arg0: i32) -> (i32, i32) {
    %c0_i32 = arith.constant 0 : i32
    %c0_i32_0 = arith.constant 0 : i32
    %c0_i32_1 = arith.constant 0 : i32
    return %c0_i32, %c0_i32_0 : i32, i32
  }
  func.func @transform_6(%arg0: i32) -> (i32, i32) {
    %c0_i32 = arith.constant 0 : i32
    %c0_i32_0 = arith.constant 0 : i32
    %c0_i32_1 = arith.constant 0 : i32
    return %c0_i32, %c0_i32_0 : i32, i32
  }
  func.func @transform_7(%arg0: i32) -> (i32, i32) {
    %c0_i32 = arith.constant 0 : i32
    %c0_i32_0 = arith.constant 0 : i32
    %c0_i32_1 = arith.constant 0 : i32
    return %c0_i32, %c0_i32_0 : i32, i32
  }
  func.func @transform_8(%arg0: i32) -> (i32, i32) {
    %c0_i32 = arith.constant 0 : i32
    %c0_i32_0 = arith.constant 0 : i32
    %c0_i32_1 = arith.constant 0 : i32
    return %c0_i32, %c0_i32_0 : i32, i32
  }
  func.func @transform_9(%arg0: i32) -> (i32, i32) {
    %c0_i32 = arith.constant 0 : i32
    %c0_i32_0 = arith.constant 0 : i32
    %c0_i32_1 = arith.constant 0 : i32
    return %c0_i32, %c0_i32_0 : i32, i32
  }
  func.func @transform_10(%arg0: i32) -> (i32, i32) {
    %c0_i32 = arith.constant 0 : i32
    %c0_i32_0 = arith.constant 0 : i32
    %c0_i32_1 = arith.constant 0 : i32
    return %c0_i32, %c0_i32_0 : i32, i32
  }
  func.func @transform_11(%arg0: i32) -> (i32, i32) {
    %c0_i32 = arith.constant 0 : i32
    %c0_i32_0 = arith.constant 0 : i32
    %c0_i32_1 = arith.constant 0 : i32
    return %c0_i32, %c0_i32_0 : i32, i32
  }
  func.func @transform_12(%arg0: i32) -> (i32, i32, i32) {
    %c0_i32 = arith.constant 0 : i32
    %c0_i32_0 = arith.constant 0 : i32
    %c0_i32_1 = arith.constant 0 : i32
    return %arg0, %c0_i32, %c0_i32_0 : i32, i32, i32
  }
}

</mosaic_0001>

<llo_original>
// kernel: tpu_custom_call.1
$region0: #{tpu_custom_call.1}
  #allocation0 [shape = 'u32[]', space=smem, size = 0x4, offset = 0x4, fixed_abs, tag = 'smem constant byte address 0x4 - core index']
  #allocation1 [shape = 'u32[144,128]{1,0:T(1,128)}', space=vmem, size = 0x12000, scoped, tag = 'internal scratch']
  %s0 = inlined_call_operand.hbm [shape: bf16[16,16,128], index: 0, kind: input, shape index: {}]
  %s1 = inlined_call_operand.hbm [shape: bf16[16,16,128], index: 1, kind: input, shape index: {}]
  %s2 = inlined_call_operand.hbm [shape: bf16[128,128], index: 2, kind: input, shape index: {}]
  %s3 = inlined_call_operand.vmem [shape: bf16[1,128], index: 3, kind: input, shape index: {}]
  %s4 = inlined_call_operand.hbm [shape: bf16[128,128], index: 4, kind: input, shape index: {}]
  %s5 = inlined_call_operand.vmem [shape: bf16[1,128], index: 5, kind: input, shape index: {}]
  %s6 = inlined_call_operand.hbm [shape: bf16[128,128], index: 6, kind: input, shape index: {}]
  %s7 = inlined_call_operand.vmem [shape: bf16[1,128], index: 7, kind: input, shape index: {}]
  %s8 = inlined_call_operand.hbm [shape: bf16[128,128], index: 8, kind: input, shape index: {}]
  %s9 = inlined_call_operand.vmem [shape: bf16[1,128], index: 9, kind: input, shape index: {}]
  %s10 = inlined_call_operand.hbm [shape: bf16[128,128], index: 10, kind: input, shape index: {}]
  %s11 = inlined_call_operand.vmem [shape: bf16[1,128], index: 11, kind: input, shape index: {}]
  %s12 = inlined_call_operand.hbm [shape: f32[16,16,128], index: 12, kind: output, shape index: {}]
  %s13 = sld [smem:[#allocation0]]
  $region109: #{tpu_custom_call.1} parent=0
    _
  %s15 = ssub.s32 1, %s13
  %s16 = scalar_select 0, %s15, %s13
  $region1: #{tpu_custom_call.1} parent=0
    #allocation2 [shape = 'u8[65536]{0}', space=vmem, size = 0x10000, scoped, tag = 'input window, operand 0']
    #allocation3 [shape = 's32[2]{0}', space=sflag, size = 0x8, scoped, tag = 'scoped memory for tpu_custom_call.1']
    #allocation4 [shape = 's32[2]{0}', space=sflag, size = 0x8, scoped, tag = 'scoped memory for tpu_custom_call.1']
    #allocation5 [shape = 'u8[65536]{0}', space=vmem, size = 0x10000, scoped, tag = 'input window, operand 1']
    #allocation6 [shape = 's32[2]{0}', space=sflag, size = 0x8, scoped, tag = 'scoped memory for tpu_custom_call.1']
    #allocation7 [shape = 'u8[32768]{0}', space=vmem, size = 0x8000, scoped, tag = 'input window, operand 2, single buffered']
    #allocation8 [shape = 'u8[32768]{0}', space=vmem, size = 0x8000, scoped, tag = 'input window, operand 4, single buffered']
    #allocation9 [shape = 's32[1]{0}', space=sflag, size = 0x4, scoped, tag = 'scoped memory for tpu_custom_call.1']
    #allocation10 [shape = 'u8[32768]{0}', space=vmem, size = 0x8000, scoped, tag = 'input window, operand 6, single buffered']
    #allocation11 [shape = 'u8[32768]{0}', space=vmem, size = 0x8000, scoped, tag = 'input window, operand 8, single buffered']
    #allocation12 [shape = 's32[1]{0}', space=sflag, size = 0x4, scoped, tag = 'scoped memory for tpu_custom_call.1']
    #allocation13 [shape = 'u8[32768]{0}', space=vmem, size = 0x8000, scoped, tag = 'input window, operand 10, single buffered']
    #allocation14 [shape = 'u8[131072]{0}', space=vmem, size = 0x20000, scoped, tag = 'output window, operand 0']
    %17 = vsyncpa [#allocation3], 0
    %s18 = scalar_lea.sflag [#allocation3], 1
    %19 = vsyncpa %s18, 0
    %20 = vsyncpa [#allocation6], 0
    %s21 = scalar_lea.sflag [#allocation6], 1
    %22 = vsyncpa %s21, 0
    %23 = vsyncpa [#allocation9], 0
    %24 = vsyncpa [#allocation12], 0
    %25 = vsyncpa [#allocation4], 0
    %s26 = scalar_lea.sflag [#allocation4], 1
    %27 = vsyncpa %s26, 0
    loop: start=0, step=1, limit=4
    $region2: #{tpu_custom_call.1} parent=1 // loop_pre_header
      _
    $region3: #{tpu_custom_call.1} parent=1 // loop_header
      %s29 = sphi 0, %s33
      %p30 = scmp.ge.s32.totalorder %s29, 4
      %s39 = sphi 0, %s41
      %s42 = sphi 0, %s39
      %s43 = sphi 0, %s42
      %s59 = sphi 0, %s43
      %s65 = sphi 0, %s67
      %s68 = sphi 0, %s65
      %s69 = sphi 0, %s68
      %s85 = sphi 0, %s69
      %s89 = sphi 0, %s89
      %s91 = sphi 0, %s89
      %s92 = sphi 0, %s91
      %s106 = sphi 0, %s92
      %s110 = sphi 0, %s110
      %s112 = sphi 0, %s110
      %s113 = sphi 0, %s112
      %s127 = sphi 0, %s113
      %s131 = sphi 0, %s131
      %s133 = sphi 0, %s131
      %s134 = sphi 0, %s133
      %s148 = sphi 0, %s134
      %s152 = sphi 0, %s152
      %s154 = sphi 0, %s152
      %s155 = sphi 0, %s154
      %s169 = sphi 0, %s155
      %s173 = sphi 0, %s173
      %s175 = sphi 0, %s173
      %s176 = sphi 0, %s175
      %s190 = sphi 0, %s176
      %s194 = sphi 0, %s194
      %s196 = sphi 0, %s194
      %s197 = sphi 0, %s196
      %s211 = sphi 0, %s197
      %s215 = sphi 0, %s215
      %s217 = sphi 0, %s215
      %s218 = sphi 0, %s217
      %s232 = sphi 0, %s218
      %s236 = sphi 0, %s236
      %s238 = sphi 0, %s236
      %s239 = sphi 0, %s238
      %s253 = sphi 0, %s239
      %s257 = sphi 0, %s257
      %s259 = sphi 0, %s257
      %s260 = sphi 0, %s259
      %s274 = sphi 0, %s260
      %s278 = sphi 0, %s278
      %s280 = sphi 0, %s278
      %s281 = sphi 0, %s280
      %s295 = sphi 0, %s281
      %s301 = sphi 0, %s303
      %s304 = sphi 0, %s301
      %s305 = sphi 0, %s304
      %s321 = sphi 0, %s305
    $region4: #{tpu_custom_call.1} parent=1 // loop_header_branch
      %32 = sbr.rel (%p30) target = $region8
    $region5: #{tpu_custom_call.1} parent=1 // loop_body
      %s34 = ssub.s32 %s29, 1
      %s35 = ssub.s32 %s29, 2
      %s36 = sadd.s32 %s29, 1
      %s37 = ssub.s32 %s29, %s36
      %p38 = scmp.eq.s32.totalorder %s37, 0
      %s40 = sadd.s32 %s39, 1
      %s41 = scalar_select %p38, %s39, %s40
      %p44 = pneg %p38
      %p45 = scmp.eq.s32.totalorder %s29, 1
      %p46 = por %p44, %p45
      %p47 = scmp.ne.s32.totalorder %s39, %s42
      %p48 = scmp.eq.s32.totalorder %s29, 0
      %p49 = por %p47, %p48
      %p50 = scmp.ne.s32.totalorder %s39, %s42
      %p51 = scmp.eq.s32.totalorder %s34, 1
      %p52 = por %p50, %p51
      %p53 = scmp.ne.s32.totalorder %s42, %s43
      %p54 = scmp.eq.s32.totalorder %s34, 0
      %p55 = por %p53, %p54
      %p56 = scmp.ne.s32.totalorder %s42, %s43
      %p57 = scmp.eq.s32.totalorder %s35, 1
      %p58 = por %p56, %p57
      %p60 = scmp.ne.s32.totalorder %s43, %s59
      %p61 = scmp.eq.s32.totalorder %s35, 0
      %p62 = por %p60, %p61
      %s63 = ssub.s32 %s29, %s36
      %p64 = scmp.eq.s32.totalorder %s63, 0
      %s66 = sadd.s32 %s65, 1
      %s67 = scalar_select %p64, %s65, %s66
      %p70 = pneg %p64
      %p71 = scmp.eq.s32.totalorder %s29, 1
      %p72 = por %p70, %p71
      %p73 = scmp.ne.s32.totalorder %s65, %s68
      %p74 = scmp.eq.s32.totalorder %s29, 0
      %p75 = por %p73, %p74
      %p76 = scmp.ne.s32.totalorder %s65, %s68
      %p77 = scmp.eq.s32.totalorder %s34, 1
      %p78 = por %p76, %p77
      %p79 = scmp.ne.s32.totalorder %s68, %s69
      %p80 = scmp.eq.s32.totalorder %s34, 0
      %p81 = por %p79, %p80
      %p82 = scmp.ne.s32.totalorder %s68, %s69
      %p83 = scmp.eq.s32.totalorder %s35, 1
      %p84 = por %p82, %p83
      %p86 = scmp.ne.s32.totalorder %s69, %s85
      %p87 = scmp.eq.s32.totalorder %s35, 0
      %p88 = por %p86, %p87
      %s90 = sadd.s32 %s89, 1
      %p93 = scmp.eq.s32.totalorder %s29, 1
      %p94 = scmp.ne.s32.totalorder %s89, %s91
      %p95 = scmp.eq.s32.totalorder %s29, 0
      %p96 = por %p94, %p95
      %p97 = scmp.ne.s32.totalorder %s89, %s91
      %p98 = scmp.eq.s32.totalorder %s34, 1
      %p99 = por %p97, %p98
      %p100 = scmp.ne.s32.totalorder %s91, %s92
      %p101 = scmp.eq.s32.totalorder %s34, 0
      %p102 = por %p100, %p101
      %p103 = scmp.ne.s32.totalorder %s91, %s92
      %p104 = scmp.eq.s32.totalorder %s35, 1
      %p105 = por %p103, %p104
      %p107 = scmp.ne.s32.totalorder %s92, %s106
      %p108 = scmp.eq.s32.totalorder %s35, 0
      %p109 = por %p107, %p108
      %s111 = sadd.s32 %s110, 1
      %p114 = scmp.eq.s32.totalorder %s29, 1
      %p115 = scmp.ne.s32.totalorder %s110, %s112
      %p116 = scmp.eq.s32.totalorder %s29, 0
      %p117 = por %p115, %p116
      %p118 = scmp.ne.s32.totalorder %s110, %s112
      %p119 = scmp.eq.s32.totalorder %s34, 1
      %p120 = por %p118, %p119
      %p121 = scmp.ne.s32.totalorder %s112, %s113
      %p122 = scmp.eq.s32.totalorder %s34, 0
      %p123 = por %p121, %p122
      %p124 = scmp.ne.s32.totalorder %s112, %s113
      %p125 = scmp.eq.s32.totalorder %s35, 1
      %p126 = por %p124, %p125
      %p128 = scmp.ne.s32.totalorder %s113, %s127
      %p129 = scmp.eq.s32.totalorder %s35, 0
      %p130 = por %p128, %p129
      %s132 = sadd.s32 %s131, 1
      %p135 = scmp.eq.s32.totalorder %s29, 1
      %p136 = scmp.ne.s32.totalorder %s131, %s133
      %p137 = scmp.eq.s32.totalorder %s29, 0
      %p138 = por %p136, %p137
      %p139 = scmp.ne.s32.totalorder %s131, %s133
      %p140 = scmp.eq.s32.totalorder %s34, 1
      %p141 = por %p139, %p140
      %p142 = scmp.ne.s32.totalorder %s133, %s134
      %p143 = scmp.eq.s32.totalorder %s34, 0
      %p144 = por %p142, %p143
      %p145 = scmp.ne.s32.totalorder %s133, %s134
      %p146 = scmp.eq.s32.totalorder %s35, 1
      %p147 = por %p145, %p146
      %p149 = scmp.ne.s32.totalorder %s134, %s148
      %p150 = scmp.eq.s32.totalorder %s35, 0
      %p151 = por %p149, %p150
      %s153 = sadd.s32 %s152, 1
      %p156 = scmp.eq.s32.totalorder %s29, 1
      %p157 = scmp.ne.s32.totalorder %s152, %s154
      %p158 = scmp.eq.s32.totalorder %s29, 0
      %p159 = por %p157, %p158
      %p160 = scmp.ne.s32.totalorder %s152, %s154
      %p161 = scmp.eq.s32.totalorder %s34, 1
      %p162 = por %p160, %p161
      %p163 = scmp.ne.s32.totalorder %s154, %s155
      %p164 = scmp.eq.s32.totalorder %s34, 0
      %p165 = por %p163, %p164
      %p166 = scmp.ne.s32.totalorder %s154, %s155
      %p167 = scmp.eq.s32.totalorder %s35, 1
      %p168 = por %p166, %p167
      %p170 = scmp.ne.s32.totalorder %s155, %s169
      %p171 = scmp.eq.s32.totalorder %s35, 0
      %p172 = por %p170, %p171
      %s174 = sadd.s32 %s173, 1
      %p177 = scmp.eq.s32.totalorder %s29, 1
      %p178 = scmp.ne.s32.totalorder %s173, %s175
      %p179 = scmp.eq.s32.totalorder %s29, 0
      %p180 = por %p178, %p179
      %p181 = scmp.ne.s32.totalorder %s173, %s175
      %p182 = scmp.eq.s32.totalorder %s34, 1
      %p183 = por %p181, %p182
      %p184 = scmp.ne.s32.totalorder %s175, %s176
      %p185 = scmp.eq.s32.totalorder %s34, 0
      %p186 = por %p184, %p185
      %p187 = scmp.ne.s32.totalorder %s175, %s176
      %p188 = scmp.eq.s32.totalorder %s35, 1
      %p189 = por %p187, %p188
      %p191 = scmp.ne.s32.totalorder %s176, %s190
      %p192 = scmp.eq.s32.totalorder %s35, 0
      %p193 = por %p191, %p192
      %s195 = sadd.s32 %s194, 1
      %p198 = scmp.eq.s32.totalorder %s29, 1
      %p199 = scmp.ne.s32.totalorder %s194, %s196
      %p200 = scmp.eq.s32.totalorder %s29, 0
      %p201 = por %p199, %p200
      %p202 = scmp.ne.s32.totalorder %s194, %s196
      %p203 = scmp.eq.s32.totalorder %s34, 1
      %p204 = por %p202, %p203
      %p205 = scmp.ne.s32.totalorder %s196, %s197
      %p206 = scmp.eq.s32.totalorder %s34, 0
      %p207 = por %p205, %p206
      %p208 = scmp.ne.s32.totalorder %s196, %s197
      %p209 = scmp.eq.s32.totalorder %s35, 1
      %p210 = por %p208, %p209
      %p212 = scmp.ne.s32.totalorder %s197, %s211
      %p213 = scmp.eq.s32.totalorder %s35, 0
      %p214 = por %p212, %p213
      %s216 = sadd.s32 %s215, 1
      %p219 = scmp.eq.s32.totalorder %s29, 1
      %p220 = scmp.ne.s32.totalorder %s215, %s217
      %p221 = scmp.eq.s32.totalorder %s29, 0
      %p222 = por %p220, %p221
      %p223 = scmp.ne.s32.totalorder %s215, %s217
      %p224 = scmp.eq.s32.totalorder %s34, 1
      %p225 = por %p223, %p224
      %p226 = scmp.ne.s32.totalorder %s217, %s218
      %p227 = scmp.eq.s32.totalorder %s34, 0
      %p228 = por %p226, %p227
      %p229 = scmp.ne.s32.totalorder %s217, %s218
      %p230 = scmp.eq.s32.totalorder %s35, 1
      %p231 = por %p229, %p230
      %p233 = scmp.ne.s32.totalorder %s218, %s232
      %p234 = scmp.eq.s32.totalorder %s35, 0
      %p235 = por %p233, %p234
      %s237 = sadd.s32 %s236, 1
      %p240 = scmp.eq.s32.totalorder %s29, 1
      %p241 = scmp.ne.s32.totalorder %s236, %s238
      %p242 = scmp.eq.s32.totalorder %s29, 0
      %p243 = por %p241, %p242
      %p244 = scmp.ne.s32.totalorder %s236, %s238
      %p245 = scmp.eq.s32.totalorder %s34, 1
      %p246 = por %p244, %p245
      %p247 = scmp.ne.s32.totalorder %s238, %s239
      %p248 = scmp.eq.s32.totalorder %s34, 0
      %p249 = por %p247, %p248
      %p250 = scmp.ne.s32.totalorder %s238, %s239
      %p251 = scmp.eq.s32.totalorder %s35, 1
      %p252 = por %p250, %p251
      %p254 = scmp.ne.s32.totalorder %s239, %s253
      %p255 = scmp.eq.s32.totalorder %s35, 0
      %p256 = por %p254, %p255
      %s258 = sadd.s32 %s257, 1
      %p261 = scmp.eq.s32.totalorder %s29, 1
      %p262 = scmp.ne.s32.totalorder %s257, %s259
      %p263 = scmp.eq.s32.totalorder %s29, 0
      %p264 = por %p262, %p263
      %p265 = scmp.ne.s32.totalorder %s257, %s259
      %p266 = scmp.eq.s32.totalorder %s34, 1
      %p267 = por %p265, %p266
      %p268 = scmp.ne.s32.totalorder %s259, %s260
      %p269 = scmp.eq.s32.totalorder %s34, 0
      %p270 = por %p268, %p269
      %p271 = scmp.ne.s32.totalorder %s259, %s260
      %p272 = scmp.eq.s32.totalorder %s35, 1
      %p273 = por %p271, %p272
      %p275 = scmp.ne.s32.totalorder %s260, %s274
      %p276 = scmp.eq.s32.totalorder %s35, 0
      %p277 = por %p275, %p276
      %s279 = sadd.s32 %s278, 1
      %p282 = scmp.eq.s32.totalorder %s29, 1
      %p283 = scmp.ne.s32.totalorder %s278, %s280
      %p284 = scmp.eq.s32.totalorder %s29, 0
      %p285 = por %p283, %p284
      %p286 = scmp.ne.s32.totalorder %s278, %s280
      %p287 = scmp.eq.s32.totalorder %s34, 1
      %p288 = por %p286, %p287
      %p289 = scmp.ne.s32.totalorder %s280, %s281
      %p290 = scmp.eq.s32.totalorder %s34, 0
      %p291 = por %p289, %p290
      %p292 = scmp.ne.s32.totalorder %s280, %s281
      %p293 = scmp.eq.s32.totalorder %s35, 1
      %p294 = por %p292, %p293
      %p296 = scmp.ne.s32.totalorder %s281, %s295
      %p297 = scmp.eq.s32.totalorder %s35, 0
      %p298 = por %p296, %p297
      %s299 = ssub.s32 %s29, %s36
      %p300 = scmp.eq.s32.totalorder %s299, 0
      %s302 = sadd.s32 %s301, 1
      %s303 = scalar_select %p300, %s301, %s302
      %p306 = pneg %p300
      %p307 = scmp.eq.s32.totalorder %s29, 1
      %p308 = por %p306, %p307
      %p309 = scmp.ne.s32.totalorder %s301, %s304
      %p310 = scmp.eq.s32.totalorder %s29, 0
      %p311 = por %p309, %p310
      %p312 = scmp.ne.s32.totalorder %s301, %s304
      %p313 = scmp.eq.s32.totalorder %s34, 1
      %p314 = por %p312, %p313
      %p315 = scmp.ne.s32.totalorder %s304, %s305
      %p316 = scmp.eq.s32.totalorder %s34, 0
      %p317 = por %p315, %p316
      %p318 = scmp.ne.s32.totalorder %s304, %s305
      %p319 = scmp.eq.s32.totalorder %s35, 1
      %p320 = por %p318, %p319
      %p322 = scmp.ne.s32.totalorder %s305, %s321
      %p323 = scmp.eq.s32.totalorder %s35, 0
      %p324 = por %p322, %p323
      %p325 = scmp.le.s32.totalorder 1, %s29
      %p326 = scmp.lt.s32.totalorder %s29, 3
      %p327 = pnand %p325, %p326
      %p328 = pneg %p327
      // Predicated region
      $region9: #{tpu_custom_call.1} parent=5 // pred_check
        _
      $region10: #{tpu_custom_call.1} parent=5 // pred_check_branch
        %330 = sbr.rel (%p327) target = $region12
      $region11: #{tpu_custom_call.1} parent=5 // pred_region
        %s331 = ssub.s32 %s29, 1
        // Predicated region
        $region13: #{tpu_custom_call.1} parent=11 // pred_check
          %p332 = pneg %p102
        $region14: #{tpu_custom_call.1} parent=11 // pred_check_branch
          %334 = sbr.rel (%p332) target = $region16
        $region15: #{tpu_custom_call.1} parent=11 // pred_region
          %s336 = ssub.s32 1024, 1024
          %337 = vsyncadd [#allocation6], %s336
          %s338 = sshll.u32 [#allocation7], 4
          %s339 = int_to_ptr.vmem [resolvable:$true] %s338
          %344 = dma.hbm_to_vmem [thread:$0]  %s2, 1024, %s339, [#allocation6], 64, 64, 4
        $region16: #{tpu_custom_call.1} parent=11 // pred_fallthru
          _
        // Predicated region
        $region17: #{tpu_custom_call.1} parent=11 // pred_check
          %p345 = pneg %p123
        $region18: #{tpu_custom_call.1} parent=11 // pred_check_branch
          %347 = sbr.rel (%p345) target = $region20
        $region19: #{tpu_custom_call.1} parent=11 // pred_region
          _
        $region20: #{tpu_custom_call.1} parent=11 // pred_fallthru
          _
        // Predicated region
        $region21: #{tpu_custom_call.1} parent=11 // pred_check
          %p348 = pneg %p144
        $region22: #{tpu_custom_call.1} parent=11 // pred_check_branch
          %350 = sbr.rel (%p348) target = $region24
        $region23: #{tpu_custom_call.1} parent=11 // pred_region
          %s352 = ssub.s32 1024, 1024
          %353 = vsyncadd [#allocation9], %s352
          %s354 = sshll.u32 [#allocation8], 4
          %s355 = int_to_ptr.vmem [resolvable:$true] %s354
          %360 = dma.hbm_to_vmem [thread:$0]  %s4, 1024, %s355, [#allocation9], 64, 64, 4
        $region24: #{tpu_custom_call.1} parent=11 // pred_fallthru
          _
        // Predicated region
        $region25: #{tpu_custom_call.1} parent=11 // pred_check
          %p361 = pneg %p165
        $region26: #{tpu_custom_call.1} parent=11 // pred_check_branch
          %363 = sbr.rel (%p361) target = $region28
        $region27: #{tpu_custom_call.1} parent=11 // pred_region
          _
        $region28: #{tpu_custom_call.1} parent=11 // pred_fallthru
          _
        // Predicated region
        $region29: #{tpu_custom_call.1} parent=11 // pred_check
          %p364 = pneg %p186
        $region30: #{tpu_custom_call.1} parent=11 // pred_check_branch
          %366 = sbr.rel (%p364) target = $region32
        $region31: #{tpu_custom_call.1} parent=11 // pred_region
          %s368 = ssub.s32 1024, 1024
          %369 = vsyncadd [#allocation9], %s368
          %s370 = sshll.u32 [#allocation10], 4
          %s371 = int_to_ptr.vmem [resolvable:$true] %s370
          %376 = dma.hbm_to_vmem [thread:$0]  %s6, 1024, %s371, [#allocation9], 64, 64, 4
        $region32: #{tpu_custom_call.1} parent=11 // pred_fallthru
          _
        // Predicated region
        $region33: #{tpu_custom_call.1} parent=11 // pred_check
          %p377 = pneg %p207
        $region34: #{tpu_custom_call.1} parent=11 // pred_check_branch
          %379 = sbr.rel (%p377) target = $region36
        $region35: #{tpu_custom_call.1} parent=11 // pred_region
          _
        $region36: #{tpu_custom_call.1} parent=11 // pred_fallthru
          _
        // Predicated region
        $region37: #{tpu_custom_call.1} parent=11 // pred_check
          %p380 = pneg %p228
        $region38: #{tpu_custom_call.1} parent=11 // pred_check_branch
          %382 = sbr.rel (%p380) target = $region40
        $region39: #{tpu_custom_call.1} parent=11 // pred_region
          %s384 = ssub.s32 1024, 1024
          %385 = vsyncadd [#allocation12], %s384
          %s386 = sshll.u32 [#allocation11], 4
          %s387 = int_to_ptr.vmem [resolvable:$true] %s386
          %392 = dma.hbm_to_vmem [thread:$0]  %s8, 1024, %s387, [#allocation12], 64, 64, 4
        $region40: #{tpu_custom_call.1} parent=11 // pred_fallthru
          _
        // Predicated region
        $region41: #{tpu_custom_call.1} parent=11 // pred_check
          %p393 = pneg %p249
        $region42: #{tpu_custom_call.1} parent=11 // pred_check_branch
          %395 = sbr.rel (%p393) target = $region44
        $region43: #{tpu_custom_call.1} parent=11 // pred_region
          _
        $region44: #{tpu_custom_call.1} parent=11 // pred_fallthru
          _
        // Predicated region
        $region45: #{tpu_custom_call.1} parent=11 // pred_check
          %p396 = pneg %p270
        $region46: #{tpu_custom_call.1} parent=11 // pred_check_branch
          %398 = sbr.rel (%p396) target = $region48
        $region47: #{tpu_custom_call.1} parent=11 // pred_region
          %s400 = ssub.s32 1024, 1024
          %401 = vsyncadd [#allocation12], %s400
          %s402 = sshll.u32 [#allocation13], 4
          %s403 = int_to_ptr.vmem [resolvable:$true] %s402
          %408 = dma.hbm_to_vmem [thread:$0]  %s10, 1024, %s403, [#allocation12], 64, 64, 4
        $region48: #{tpu_custom_call.1} parent=11 // pred_fallthru
          _
        // Predicated region
        $region49: #{tpu_custom_call.1} parent=11 // pred_check
          %p409 = pneg %p291
        $region50: #{tpu_custom_call.1} parent=11 // pred_check_branch
          %411 = sbr.rel (%p409) target = $region52
        $region51: #{tpu_custom_call.1} parent=11 // pred_region
          _
        $region52: #{tpu_custom_call.1} parent=11 // pred_fallthru
          _
      $region12: #{tpu_custom_call.1} parent=5 // pred_fallthru
        _
      %p412 = scmp.lt.s32.totalorder %s29, 2
      // Predicated region
      $region53: #{tpu_custom_call.1} parent=5 // pred_check
        %p413 = pneg %p412
      $region54: #{tpu_custom_call.1} parent=5 // pred_check_branch
        %415 = sbr.rel (%p413) target = $region56
      $region55: #{tpu_custom_call.1} parent=5 // pred_region
        // Predicated region
        $region57: #{tpu_custom_call.1} parent=55 // pred_check
          %p416 = pneg %p49
        $region58: #{tpu_custom_call.1} parent=55 // pred_check_branch
          %418 = sbr.rel (%p416) target = $region60
        $region59: #{tpu_custom_call.1} parent=55 // pred_region
          %s419 = sand.u32 %s39, 1
          %s420 = scalar_lea.sflag [#allocation3], %s419
          %s421 = sand.u32 %s39, 1
          %s422 = smul.addr %s421, 64
          %s423 = scalar_lea.vmem [#allocation2], %s422
          %s424 = smul.u32 8, %s29
          %s426 = ssub.s32 1024, 1024
          %427 = vsyncadd %s420, %s426
          %s428 = smul.addr %s424, 2
          %s429 = smul.addr %s428, 64
          %s430 = scalar_lea.hbm %s0, %s429
          %s431 = sshll.u32 %s423, 4
          %s432 = int_to_ptr.vmem [resolvable:$true] %s431
          %437 = dma.hbm_to_vmem [thread:$0]  %s430, 1024, %s432, %s420, 64, 64, 4
        $region60: #{tpu_custom_call.1} parent=55 // pred_fallthru
          _
        // Predicated region
        $region61: #{tpu_custom_call.1} parent=55 // pred_check
          %p438 = pneg %p75
        $region62: #{tpu_custom_call.1} parent=55 // pred_check_branch
          %440 = sbr.rel (%p438) target = $region64
        $region63: #{tpu_custom_call.1} parent=55 // pred_region
          %s441 = sand.u32 %s29, 1
          %s442 = scalar_lea.sflag [#allocation6], %s441
          %s443 = sand.u32 %s65, 1
          %s444 = smul.addr %s443, 64
          %s445 = scalar_lea.vmem [#allocation5], %s444
          %s446 = smul.u32 8, %s29
          %s448 = ssub.s32 1024, 1024
          %449 = vsyncadd %s442, %s448
          %s450 = smul.addr %s446, 2
          %s451 = smul.addr %s450, 64
          %s452 = scalar_lea.hbm %s1, %s451
          %s453 = sshll.u32 %s445, 4
          %s454 = int_to_ptr.vmem [resolvable:$true] %s453
          %459 = dma.hbm_to_vmem [thread:$0]  %s452, 1024, %s454, %s442, 64, 64, 4
        $region64: #{tpu_custom_call.1} parent=55 // pred_fallthru
          _
      $region56: #{tpu_custom_call.1} parent=5 // pred_fallthru
        _
      %p460 = scmp.le.s32.totalorder 1, %s29
      %p461 = scmp.lt.s32.totalorder %s29, 3
      %p462 = pnand %p460, %p461
      %p463 = pneg %p462
      // Predicated region
      $region65: #{tpu_custom_call.1} parent=5 // pred_check
        _
      $region66: #{tpu_custom_call.1} parent=5 // pred_check_branch
        %465 = sbr.rel (%p462) target = $region68
      $region67: #{tpu_custom_call.1} parent=5 // pred_region
        %s466 = ssub.s32 %s29, 1
        %s467 = sand.u32 %s42, 1
        %s468 = scalar_lea.sflag [#allocation3], %s467
        %s469 = sand.u32 %s42, 1
        %s470 = smul.addr %s469, 64
        %s471 = scalar_lea.vmem [#allocation2], %s470
        // Predicated region
        $region69: #{tpu_custom_call.1} parent=67 // pred_check
          %p472 = pneg %p55
        $region70: #{tpu_custom_call.1} parent=67 // pred_check_branch
          %474 = sbr.rel (%p472) target = $region72
        $region71: #{tpu_custom_call.1} parent=67 // pred_region
          %475 = dma.done %s468, 1024
        $region72: #{tpu_custom_call.1} parent=67 // pred_fallthru
          _
        %s476 = sand.u32 %s34, 1
        %s477 = scalar_lea.sflag [#allocation6], %s476
        %s478 = sand.u32 %s68, 1
        %s479 = smul.addr %s478, 64
        %s480 = scalar_lea.vmem [#allocation5], %s479
        // Predicated region
        $region73: #{tpu_custom_call.1} parent=67 // pred_check
          %p481 = pneg %p81
        $region74: #{tpu_custom_call.1} parent=67 // pred_check_branch
          %483 = sbr.rel (%p481) target = $region76
        $region75: #{tpu_custom_call.1} parent=67 // pred_region
          %484 = dma.done %s477, 1024
        $region76: #{tpu_custom_call.1} parent=67 // pred_fallthru
          _
        // Predicated region
        $region77: #{tpu_custom_call.1} parent=67 // pred_check
          %p485 = pneg %p102
        $region78: #{tpu_custom_call.1} parent=67 // pred_check_branch
          %487 = sbr.rel (%p485) target = $region80
        $region79: #{tpu_custom_call.1} parent=67 // pred_region
          %488 = dma.done [#allocation6], 1024
        $region80: #{tpu_custom_call.1} parent=67 // pred_fallthru
          _
        // Predicated region
        $region81: #{tpu_custom_call.1} parent=67 // pred_check
          %p489 = pneg %p144
        $region82: #{tpu_custom_call.1} parent=67 // pred_check_branch
          %491 = sbr.rel (%p489) target = $region84
        $region83: #{tpu_custom_call.1} parent=67 // pred_region
          %492 = dma.done [#allocation9], 1024
        $region84: #{tpu_custom_call.1} parent=67 // pred_fallthru
          _
        // Predicated region
        $region85: #{tpu_custom_call.1} parent=67 // pred_check
          %p493 = pneg %p186
        $region86: #{tpu_custom_call.1} parent=67 // pred_check_branch
          %495 = sbr.rel (%p493) target = $region88
        $region87: #{tpu_custom_call.1} parent=67 // pred_region
          %496 = dma.done [#allocation9], 1024
        $region88: #{tpu_custom_call.1} parent=67 // pred_fallthru
          _
        // Predicated region
        $region89: #{tpu_custom_call.1} parent=67 // pred_check
          %p497 = pneg %p228
        $region90: #{tpu_custom_call.1} parent=67 // pred_check_branch
          %499 = sbr.rel (%p497) target = $region92
        $region91: #{tpu_custom_call.1} parent=67 // pred_region
          %500 = dma.done [#allocation12], 1024
        $region92: #{tpu_custom_call.1} parent=67 // pred_fallthru
          _
        // Predicated region
        $region93: #{tpu_custom_call.1} parent=67 // pred_check
          %p501 = pneg %p270
        $region94: #{tpu_custom_call.1} parent=67 // pred_check_branch
          %503 = sbr.rel (%p501) target = $region96
        $region95: #{tpu_custom_call.1} parent=67 // pred_region
          %504 = dma.done [#allocation12], 1024
        $region96: #{tpu_custom_call.1} parent=67 // pred_fallthru
          _
        %s505 = sand.u32 %s42, 1
        %s506 = scalar_lea.sflag [#allocation3], %s505
        %s507 = sand.u32 %s42, 1
        %s508 = smul.addr %s507, 64
        %s509 = scalar_lea.vmem [#allocation2], %s508
        %p510 = pneg %p55
        %p511 = pneg %p52
        %s512 = sand.u32 %s34, 1
        %s513 = scalar_lea.sflag [#allocation6], %s512
        %s514 = sand.u32 %s68, 1
        %s515 = smul.addr %s514, 64
        %s516 = scalar_lea.vmem [#allocation5], %s515
        %p517 = pneg %p81
        %p518 = pneg %p78
        %p519 = pneg %p102
        %p520 = pneg %p99
        %p521 = pneg %p123
        %p522 = pneg %p120
        %p523 = pneg %p144
        %p524 = pneg %p141
        %p525 = pneg %p165
        %p526 = pneg %p162
        %p527 = pneg %p186
        %p528 = pneg %p183
        %p529 = pneg %p207
        %p530 = pneg %p204
        %p531 = pneg %p228
        %p532 = pneg %p225
        %p533 = pneg %p249
        %p534 = pneg %p246
        %p535 = pneg %p270
        %p536 = pneg %p267
        %p537 = pneg %p291
        %p538 = pneg %p288
        %p539 = pneg %p317
        %p540 = pneg %p314
        %s541 = sand.u32 %s304, 1
        %s542 = scalar_lea.sflag [#allocation4], %s541
        %s543 = sand.u32 %s304, 1
        %s544 = smul.addr %s543, 128
        %s545 = scalar_lea.vmem [#allocation14], %s544
        %s546 = smul.u32 8, %s34
        %s547 = smul.u32 8, %s34
        %s548 = smul.u32 8, %s34
        %v550 = vld [vmem:[%s471] sm:$0xf]
        %v551 = vld [vmem:[%s471 + $0x4] sm:$0xf]
        %v552 = vld [vmem:[%s471 + $0x8] sm:$0xf]
        %v553 = vld [vmem:[%s471 + $0xc] sm:$0xf]
        %v554 = vld [vmem:[%s471 + $0x10] sm:$0xf]
        %v555 = vld [vmem:[%s471 + $0x14] sm:$0xf]
        %v556 = vld [vmem:[%s471 + $0x18] sm:$0xf]
        %v557 = vld [vmem:[%s471 + $0x1c] sm:$0xf]
        %v558 = vld [vmem:[%s471 + $0x20] sm:$0xf]
        %v559 = vld [vmem:[%s471 + $0x24] sm:$0xf]
        %v560 = vld [vmem:[%s471 + $0x28] sm:$0xf]
        %v561 = vld [vmem:[%s471 + $0x2c] sm:$0xf]
        %v562 = vld [vmem:[%s471 + $0x30] sm:$0xf]
        %v563 = vld [vmem:[%s471 + $0x34] sm:$0xf]
        %v564 = vld [vmem:[%s471 + $0x38] sm:$0xf]
        %v565 = vld [vmem:[%s471 + $0x3c] sm:$0xf]
        %v566 = vld [vmem:[%s480] sm:$0xf]
        %v567 = vld [vmem:[%s480 + $0x4] sm:$0xf]
        %v568 = vld [vmem:[%s480 + $0x8] sm:$0xf]
        %v569 = vld [vmem:[%s480 + $0xc] sm:$0xf]
        %v570 = vld [vmem:[%s480 + $0x10] sm:$0xf]
        %v571 = vld [vmem:[%s480 + $0x14] sm:$0xf]
        %v572 = vld [vmem:[%s480 + $0x18] sm:$0xf]
        %v573 = vld [vmem:[%s480 + $0x1c] sm:$0xf]
        %v574 = vld [vmem:[%s480 + $0x20] sm:$0xf]
        %v575 = vld [vmem:[%s480 + $0x24] sm:$0xf]
        %v576 = vld [vmem:[%s480 + $0x28] sm:$0xf]
        %v577 = vld [vmem:[%s480 + $0x2c] sm:$0xf]
        %v578 = vld [vmem:[%s480 + $0x30] sm:$0xf]
        %v579 = vld [vmem:[%s480 + $0x34] sm:$0xf]
        %v580 = vld [vmem:[%s480 + $0x38] sm:$0xf]
        %v581 = vld [vmem:[%s480 + $0x3c] sm:$0xf]
        %v582 = vld [vmem:[#allocation7] sm:$0xf]
        %v583 = vld [vmem:[#allocation7 + $0x4] sm:$0xf]
        %v584 = vld [vmem:[#allocation7 + $0x8] sm:$0xf]
        %v585 = vld [vmem:[#allocation7 + $0xc] sm:$0xf]
        %v586 = vld [vmem:[#allocation7 + $0x10] sm:$0xf]
        %v587 = vld [vmem:[#allocation7 + $0x14] sm:$0xf]
        %v588 = vld [vmem:[#allocation7 + $0x18] sm:$0xf]
        %v589 = vld [vmem:[#allocation7 + $0x1c] sm:$0xf]
        %v590 = vld [vmem:[#allocation7 + $0x20] sm:$0xf]
        %v591 = vld [vmem:[#allocation7 + $0x24] sm:$0xf]
        %v592 = vld [vmem:[#allocation7 + $0x28] sm:$0xf]
        %v593 = vld [vmem:[#allocation7 + $0x2c] sm:$0xf]
        %v594 = vld [vmem:[#allocation7 + $0x30] sm:$0xf]
        %v595 = vld [vmem:[#allocation7 + $0x34] sm:$0xf]
        %v596 = vld [vmem:[#allocation7 + $0x38] sm:$0xf]
        %v597 = vld [vmem:[#allocation7 + $0x3c] sm:$0xf]
        %v598 = vld [vmem:[%s3] sm:$0x1]
        %v599 = vunpack.c.l.bf16 %v598
        %v600 = vlaneseq
        %v601 = vshrl.u32 %v600, 7
        %v602 = vsub.s32 0, %v601
        %v603 = vrot.slane %v599, %v602
        %v620 = vunpack.c.l.b16 %v550
        %v621 = vunpack.c.l.b16 %v551
        %v622 = vunpack.c.l.b16 %v552
        %v623 = vunpack.c.l.b16 %v553
        %v624 = vunpack.c.l.b16 %v554
        %v625 = vunpack.c.l.b16 %v555
        %v626 = vunpack.c.l.b16 %v556
        %v627 = vunpack.c.l.b16 %v557
        %v628 = vunpack.c.l.b16 %v558
        %v629 = vunpack.c.l.b16 %v559
        %v630 = vunpack.c.l.b16 %v560
        %v631 = vunpack.c.l.b16 %v561
        %v632 = vunpack.c.l.b16 %v562
        %v633 = vunpack.c.l.b16 %v563
        %v634 = vunpack.c.l.b16 %v564
        %v635 = vunpack.c.l.b16 %v565
        %v636 = vpack.c.b16 %v621, %v620
        %v637 = vpack.c.b16 %v623, %v622
        %v638 = vpack.c.b16 %v625, %v624
        %v639 = vpack.c.b16 %v627, %v626
        %v640 = vpack.c.b16 %v629, %v628
        %v641 = vpack.c.b16 %v631, %v630
        %v642 = vpack.c.b16 %v633, %v632
        %v643 = vpack.c.b16 %v635, %v634
        %v668 = vunpack.c.l.b16 %v582
        %v669 = vunpack.c.l.b16 %v583
        %v670 = vunpack.c.l.b16 %v584
        %v671 = vunpack.c.l.b16 %v585
        %v672 = vunpack.c.l.b16 %v586
        %v673 = vunpack.c.l.b16 %v587
        %v674 = vunpack.c.l.b16 %v588
        %v675 = vunpack.c.l.b16 %v589
        %v676 = vunpack.c.l.b16 %v590
        %v677 = vunpack.c.l.b16 %v591
        %v678 = vunpack.c.l.b16 %v592
        %v679 = vunpack.c.l.b16 %v593
        %v680 = vunpack.c.l.b16 %v594
        %v681 = vunpack.c.l.b16 %v595
        %v682 = vunpack.c.l.b16 %v596
        %v683 = vunpack.c.l.b16 %v597
        %v684 = vpack.c.b16 %v669, %v668
        %v685 = vpack.c.b16 %v671, %v670
        %v686 = vpack.c.b16 %v673, %v672
        %v687 = vpack.c.b16 %v675, %v674
        %v688 = vpack.c.b16 %v677, %v676
        %v689 = vpack.c.b16 %v679, %v678
        %v690 = vpack.c.b16 %v681, %v680
        %v691 = vpack.c.b16 %v683, %v682
        %700 = vmatprep.subr.bf16.mxu0 0
        %701 = vmatpush1.bf16.msra.mxu0 %v684
        %702 = vmatprep.subr.bf16.mxu0 0
        %703 = vmatpush1.bf16.msra.mxu0 %v685
        %704 = vmatprep.subr.bf16.mxu0 0
        %705 = vmatpush1.bf16.msra.mxu0 %v686
        %706 = vmatprep.subr.bf16.mxu0 0
        %707 = vmatpush1.bf16.msra.mxu0 %v687
        %708 = vmatprep.subr.bf16.mxu0 0
        %709 = vmatpush1.bf16.msra.mxu0 %v688
        %710 = vmatprep.subr.bf16.mxu0 0
        %711 = vmatpush1.bf16.msra.mxu0 %v689
        %712 = vmatprep.subr.bf16.mxu0 0
        %713 = vmatpush1.bf16.msra.mxu0 %v690
        %714 = vmatprep.subr.bf16.mxu0 0
        %715 = vmatpush1.bf16.msra.mxu0 %v691
        %716 = vmatprep.subr.bf16.mxu0 0
        %717 = vmatpush1.bf16.msra.mxu0 0
        %718 = vmatprep.subr.bf16.mxu0 0
        %719 = vmatpush1.bf16.msra.mxu0 0
        %720 = vmatprep.subr.bf16.mxu0 0
        %721 = vmatpush1.bf16.msra.mxu0 0
        %722 = vmatprep.subr.bf16.mxu0 0
        %723 = vmatpush1.bf16.msra.mxu0 0
        %724 = vmatprep.subr.bf16.mxu0 0
        %725 = vmatpush1.bf16.msra.mxu0 0
        %726 = vmatprep.subr.bf16.mxu0 0
        %727 = vmatpush1.bf16.msra.mxu0 0
        %728 = vmatprep.subr.bf16.mxu0 0
        %729 = vmatpush1.bf16.msra.mxu0 0
        %730 = vmatprep.subr.bf16.mxu0 0
        %731 = vmatpush1.bf16.msra.mxu0 0
        %732 = vmatprep.mubr.bf16.mxu0 0
        %733 = vmatmul.mubr.bf16.gmra.mrb[0].mxu0 %v636
        %v734 = vpop.f32.mrb[0].mxu0
        %v735 = vadd.f32 %v603, %v734
        %v736 = vpop.f32.mrb[0].mxu0
        %v737 = vpop.f32.mrb[0].mxu0
        %v738 = vadd.f32 %v603, %v737
        %v739 = vpop.f32.mrb[0].mxu0
        %740 = vmatprep.mubr.bf16.mxu0 0
        %741 = vmatmul.mubr.bf16.gmra.mrb[0].mxu0 %v637
        %v742 = vpop.f32.mrb[0].mxu0
        %v743 = vadd.f32 %v603, %v742
        %v744 = vpop.f32.mrb[0].mxu0
        %v745 = vpop.f32.mrb[0].mxu0
        %v746 = vadd.f32 %v603, %v745
        %v747 = vpop.f32.mrb[0].mxu0
        %748 = vmatprep.mubr.bf16.mxu0 0
        %749 = vmatmul.mubr.bf16.gmra.mrb[0].mxu0 %v638
        %v750 = vpop.f32.mrb[0].mxu0
        %v751 = vadd.f32 %v603, %v750
        %v752 = vpop.f32.mrb[0].mxu0
        %v753 = vpop.f32.mrb[0].mxu0
        %v754 = vadd.f32 %v603, %v753
        %v755 = vpop.f32.mrb[0].mxu0
        %756 = vmatprep.mubr.bf16.mxu0 0
        %757 = vmatmul.mubr.bf16.gmra.mrb[0].mxu0 %v639
        %v758 = vpop.f32.mrb[0].mxu0
        %v759 = vadd.f32 %v603, %v758
        %v760 = vpop.f32.mrb[0].mxu0
        %v761 = vpop.f32.mrb[0].mxu0
        %v762 = vadd.f32 %v603, %v761
        %v763 = vpop.f32.mrb[0].mxu0
        %764 = vmatprep.mubr.bf16.mxu0 0
        %765 = vmatmul.mubr.bf16.gmra.mrb[0].mxu0 %v640
        %v766 = vpop.f32.mrb[0].mxu0
        %v767 = vadd.f32 %v603, %v766
        %v768 = vpop.f32.mrb[0].mxu0
        %v769 = vpop.f32.mrb[0].mxu0
        %v770 = vadd.f32 %v603, %v769
        %v771 = vpop.f32.mrb[0].mxu0
        %772 = vmatprep.mubr.bf16.mxu0 0
        %773 = vmatmul.mubr.bf16.gmra.mrb[0].mxu0 %v641
        %v774 = vpop.f32.mrb[0].mxu0
        %v775 = vadd.f32 %v603, %v774
        %v776 = vpop.f32.mrb[0].mxu0
        %v777 = vpop.f32.mrb[0].mxu0
        %v778 = vadd.f32 %v603, %v777
        %v779 = vpop.f32.mrb[0].mxu0
        %780 = vmatprep.mubr.bf16.mxu0 0
        %781 = vmatmul.mubr.bf16.gmra.mrb[0].mxu0 %v642
        %v782 = vpop.f32.mrb[0].mxu0
        %v783 = vadd.f32 %v603, %v782
        %v784 = vpop.f32.mrb[0].mxu0
        %v785 = vpop.f32.mrb[0].mxu0
        %v786 = vadd.f32 %v603, %v785
        %v787 = vpop.f32.mrb[0].mxu0
        %788 = vmatprep.mubr.bf16.mxu0 0
        %789 = vmatmul.mubr.bf16.gmra.mrb[0].mxu0 %v643
        %v790 = vpop.f32.mrb[0].mxu0
        %v791 = vadd.f32 %v603, %v790
        %v792 = vpop.f32.mrb[0].mxu0
        %v793 = vpop.f32.mrb[0].mxu0
        %v794 = vadd.f32 %v603, %v793
        %v795 = vpop.f32.mrb[0].mxu0
        %796 = vdwg.mxu0
        %v797 = vld [vmem:[#allocation8] sm:$0xf]
        %v798 = vld [vmem:[#allocation8 + $0x4] sm:$0xf]
        %v799 = vld [vmem:[#allocation8 + $0x8] sm:$0xf]
        %v800 = vld [vmem:[#allocation8 + $0xc] sm:$0xf]
        %v801 = vld [vmem:[#allocation8 + $0x10] sm:$0xf]
        %v802 = vld [vmem:[#allocation8 + $0x14] sm:$0xf]
        %v803 = vld [vmem:[#allocation8 + $0x18] sm:$0xf]
        %v804 = vld [vmem:[#allocation8 + $0x1c] sm:$0xf]
        %v805 = vld [vmem:[#allocation8 + $0x20] sm:$0xf]
        %v806 = vld [vmem:[#allocation8 + $0x24] sm:$0xf]
        %v807 = vld [vmem:[#allocation8 + $0x28] sm:$0xf]
        %v808 = vld [vmem:[#allocation8 + $0x2c] sm:$0xf]
        %v809 = vld [vmem:[#allocation8 + $0x30] sm:$0xf]
        %v810 = vld [vmem:[#allocation8 + $0x34] sm:$0xf]
        %v811 = vld [vmem:[#allocation8 + $0x38] sm:$0xf]
        %v812 = vld [vmem:[#allocation8 + $0x3c] sm:$0xf]
        %v813 = vld [vmem:[%s5] sm:$0x1]
        %v814 = vunpack.c.l.bf16 %v813
        %v815 = vlaneseq
        %v816 = vshrl.u32 %v815, 7
        %v817 = vsub.s32 0, %v816
        %v818 = vrot.slane %v814, %v817
        %v835 = vunpack.c.l.b16 %v566
        %v836 = vunpack.c.l.b16 %v567
        %v837 = vunpack.c.l.b16 %v568
        %v838 = vunpack.c.l.b16 %v569
        %v839 = vunpack.c.l.b16 %v570
        %v840 = vunpack.c.l.b16 %v571
        %v841 = vunpack.c.l.b16 %v572
        %v842 = vunpack.c.l.b16 %v573
        %v843 = vunpack.c.l.b16 %v574
        %v844 = vunpack.c.l.b16 %v575
        %v845 = vunpack.c.l.b16 %v576
        %v846 = vunpack.c.l.b16 %v577
        %v847 = vunpack.c.l.b16 %v578
        %v848 = vunpack.c.l.b16 %v579
        %v849 = vunpack.c.l.b16 %v580
        %v850 = vunpack.c.l.b16 %v581
        %v851 = vpack.c.b16 %v836, %v835
        %v852 = vpack.c.b16 %v838, %v837
        %v853 = vpack.c.b16 %v840, %v839
        %v854 = vpack.c.b16 %v842, %v841
        %v855 = vpack.c.b16 %v844, %v843
        %v856 = vpack.c.b16 %v846, %v845
        %v857 = vpack.c.b16 %v848, %v847
        %v858 = vpack.c.b16 %v850, %v849
        %v883 = vunpack.c.l.b16 %v797
        %v884 = vunpack.c.l.b16 %v798
        %v885 = vunpack.c.l.b16 %v799
        %v886 = vunpack.c.l.b16 %v800
        %v887 = vunpack.c.l.b16 %v801
        %v888 = vunpack.c.l.b16 %v802
        %v889 = vunpack.c.l.b16 %v803
        %v890 = vunpack.c.l.b16 %v804
        %v891 = vunpack.c.l.b16 %v805
        %v892 = vunpack.c.l.b16 %v806
        %v893 = vunpack.c.l.b16 %v807
        %v894 = vunpack.c.l.b16 %v808
        %v895 = vunpack.c.l.b16 %v809
        %v896 = vunpack.c.l.b16 %v810
        %v897 = vunpack.c.l.b16 %v811
        %v898 = vunpack.c.l.b16 %v812
        %v899 = vpack.c.b16 %v884, %v883
        %v900 = vpack.c.b16 %v886, %v885
        %v901 = vpack.c.b16 %v888, %v887
        %v902 = vpack.c.b16 %v890, %v889
        %v903 = vpack.c.b16 %v892, %v891
        %v904 = vpack.c.b16 %v894, %v893
        %v905 = vpack.c.b16 %v896, %v895
        %v906 = vpack.c.b16 %v898, %v897
        %915 = vmatprep.subr.bf16.mxu0 0
        %916 = vmatpush1.bf16.msra.mxu0 %v899
        %917 = vmatprep.subr.bf16.mxu0 0
        %918 = vmatpush1.bf16.msra.mxu0 %v900
        %919 = vmatprep.subr.bf16.mxu0 0
        %920 = vmatpush1.bf16.msra.mxu0 %v901
        %921 = vmatprep.subr.bf16.mxu0 0
        %922 = vmatpush1.bf16.msra.mxu0 %v902
        %923 = vmatprep.subr.bf16.mxu0 0
        %924 = vmatpush1.bf16.msra.mxu0 %v903
        %925 = vmatprep.subr.bf16.mxu0 0
        %926 = vmatpush1.bf16.msra.mxu0 %v904
        %927 = vmatprep.subr.bf16.mxu0 0
        %928 = vmatpush1.bf16.msra.mxu0 %v905
        %929 = vmatprep.subr.bf16.mxu0 0
        %930 = vmatpush1.bf16.msra.mxu0 %v906
        %931 = vmatprep.subr.bf16.mxu0 0
        %932 = vmatpush1.bf16.msra.mxu0 0
        %933 = vmatprep.subr.bf16.mxu0 0
        %934 = vmatpush1.bf16.msra.mxu0 0
        %935 = vmatprep.subr.bf16.mxu0 0
        %936 = vmatpush1.bf16.msra.mxu0 0
        %937 = vmatprep.subr.bf16.mxu0 0
        %938 = vmatpush1.bf16.msra.mxu0 0
        %939 = vmatprep.subr.bf16.mxu0 0
        %940 = vmatpush1.bf16.msra.mxu0 0
        %941 = vmatprep.subr.bf16.mxu0 0
        %942 = vmatpush1.bf16.msra.mxu0 0
        %943 = vmatprep.subr.bf16.mxu0 0
        %944 = vmatpush1.bf16.msra.mxu0 0
        %945 = vmatprep.subr.bf16.mxu0 0
        %946 = vmatpush1.bf16.msra.mxu0 0
        %947 = vmatprep.mubr.bf16.mxu0 0
        %948 = vmatmul.mubr.bf16.gmra.mrb[0].mxu0 %v851
        %v949 = vpop.f32.mrb[0].mxu0
        %v950 = vadd.f32 %v818, %v949
        %v951 = vpop.f32.mrb[0].mxu0
        %v952 = vpop.f32.mrb[0].mxu0
        %v953 = vadd.f32 %v818, %v952
        %v954 = vpop.f32.mrb[0].mxu0
        %955 = vmatprep.mubr.bf16.mxu0 0
        %956 = vmatmul.mubr.bf16.gmra.mrb[0].mxu0 %v852
        %v957 = vpop.f32.mrb[0].mxu0
        %v958 = vadd.f32 %v818, %v957
        %v959 = vpop.f32.mrb[0].mxu0
        %v960 = vpop.f32.mrb[0].mxu0
        %v961 = vadd.f32 %v818, %v960
        %v962 = vpop.f32.mrb[0].mxu0
        %963 = vmatprep.mubr.bf16.mxu0 0
        %964 = vmatmul.mubr.bf16.gmra.mrb[0].mxu0 %v853
        %v965 = vpop.f32.mrb[0].mxu0
        %v966 = vadd.f32 %v818, %v965
        %v967 = vpop.f32.mrb[0].mxu0
        %v968 = vpop.f32.mrb[0].mxu0
        %v969 = vadd.f32 %v818, %v968
        %v970 = vpop.f32.mrb[0].mxu0
        %971 = vmatprep.mubr.bf16.mxu0 0
        %972 = vmatmul.mubr.bf16.gmra.mrb[0].mxu0 %v854
        %v973 = vpop.f32.mrb[0].mxu0
        %v974 = vadd.f32 %v818, %v973
        %v975 = vpop.f32.mrb[0].mxu0
        %v976 = vpop.f32.mrb[0].mxu0
        %v977 = vadd.f32 %v818, %v976
        %v978 = vpop.f32.mrb[0].mxu0
        %979 = vmatprep.mubr.bf16.mxu0 0
        %980 = vmatmul.mubr.bf16.gmra.mrb[0].mxu0 %v855
        %v981 = vpop.f32.mrb[0].mxu0
        %v982 = vadd.f32 %v818, %v981
        %v983 = vpop.f32.mrb[0].mxu0
        %v984 = vpop.f32.mrb[0].mxu0
        %v985 = vadd.f32 %v818, %v984
        %v986 = vpop.f32.mrb[0].mxu0
        %987 = vmatprep.mubr.bf16.mxu0 0
        %988 = vmatmul.mubr.bf16.gmra.mrb[0].mxu0 %v856
        %v989 = vpop.f32.mrb[0].mxu0
        %v990 = vadd.f32 %v818, %v989
        %v991 = vpop.f32.mrb[0].mxu0
        %v992 = vpop.f32.mrb[0].mxu0
        %v993 = vadd.f32 %v818, %v992
        %v994 = vpop.f32.mrb[0].mxu0
        %995 = vmatprep.mubr.bf16.mxu0 0
        %996 = vmatmul.mubr.bf16.gmra.mrb[0].mxu0 %v857
        %v997 = vpop.f32.mrb[0].mxu0
        %v998 = vadd.f32 %v818, %v997
        %v999 = vpop.f32.mrb[0].mxu0
        %v1000 = vpop.f32.mrb[0].mxu0
        %v1001 = vadd.f32 %v818, %v1000
        %v1002 = vpop.f32.mrb[0].mxu0
        %1003 = vmatprep.mubr.bf16.mxu0 0
        %1004 = vmatmul.mubr.bf16.gmra.mrb[0].mxu0 %v858
        %v1005 = vpop.f32.mrb[0].mxu0
        %v1006 = vadd.f32 %v818, %v1005
        %v1007 = vpop.f32.mrb[0].mxu0
        %v1008 = vpop.f32.mrb[0].mxu0
        %v1009 = vadd.f32 %v818, %v1008
        %v1010 = vpop.f32.mrb[0].mxu0
        %1011 = vdwg.mxu0
        %v1012 = vld [vmem:[#allocation10] sm:$0xf]
        %v1013 = vld [vmem:[#allocation10 + $0x4] sm:$0xf]
        %v1014 = vld [vmem:[#allocation10 + $0x8] sm:$0xf]
        %v1015 = vld [vmem:[#allocation10 + $0xc] sm:$0xf]
        %v1016 = vld [vmem:[#allocation10 + $0x10] sm:$0xf]
        %v1017 = vld [vmem:[#allocation10 + $0x14] sm:$0xf]
        %v1018 = vld [vmem:[#allocation10 + $0x18] sm:$0xf]
        %v1019 = vld [vmem:[#allocation10 + $0x1c] sm:$0xf]
        %v1020 = vld [vmem:[#allocation10 + $0x20] sm:$0xf]
        %v1021 = vld [vmem:[#allocation10 + $0x24] sm:$0xf]
        %v1022 = vld [vmem:[#allocation10 + $0x28] sm:$0xf]
        %v1023 = vld [vmem:[#allocation10 + $0x2c] sm:$0xf]
        %v1024 = vld [vmem:[#allocation10 + $0x30] sm:$0xf]
        %v1025 = vld [vmem:[#allocation10 + $0x34] sm:$0xf]
        %v1026 = vld [vmem:[#allocation10 + $0x38] sm:$0xf]
        %v1027 = vld [vmem:[#allocation10 + $0x3c] sm:$0xf]
        %v1028 = vld [vmem:[%s7] sm:$0x1]
        %v1029 = vunpack.c.l.bf16 %v1028
        %v1030 = vlaneseq
        %v1031 = vshrl.u32 %v1030, 7
        %v1032 = vsub.s32 0, %v1031
        %v1033 = vrot.slane %v1029, %v1032
        %v1050 = vunpack.c.l.b16 %v1012
        %v1051 = vunpack.c.l.b16 %v1013
        %v1052 = vunpack.c.l.b16 %v1014
        %v1053 = vunpack.c.l.b16 %v1015
        %v1054 = vunpack.c.l.b16 %v1016
        %v1055 = vunpack.c.l.b16 %v1017
        %v1056 = vunpack.c.l.b16 %v1018
        %v1057 = vunpack.c.l.b16 %v1019
        %v1058 = vunpack.c.l.b16 %v1020
        %v1059 = vunpack.c.l.b16 %v1021
        %v1060 = vunpack.c.l.b16 %v1022
        %v1061 = vunpack.c.l.b16 %v1023
        %v1062 = vunpack.c.l.b16 %v1024
        %v1063 = vunpack.c.l.b16 %v1025
        %v1064 = vunpack.c.l.b16 %v1026
        %v1065 = vunpack.c.l.b16 %v1027
        %v1066 = vpack.c.b16 %v1051, %v1050
        %v1067 = vpack.c.b16 %v1053, %v1052
        %v1068 = vpack.c.b16 %v1055, %v1054
        %v1069 = vpack.c.b16 %v1057, %v1056
        %v1070 = vpack.c.b16 %v1059, %v1058
        %v1071 = vpack.c.b16 %v1061, %v1060
        %v1072 = vpack.c.b16 %v1063, %v1062
        %v1073 = vpack.c.b16 %v1065, %v1064
        %1082 = vmatprep.subr.bf16.mxu0 0
        %1083 = vmatpush1.bf16.msra.mxu0 %v1066
        %1084 = vmatprep.subr.bf16.mxu0 0
        %1085 = vmatpush1.bf16.msra.mxu0 %v1067
        %1086 = vmatprep.subr.bf16.mxu0 0
        %1087 = vmatpush1.bf16.msra.mxu0 %v1068
        %1088 = vmatprep.subr.bf16.mxu0 0
        %1089 = vmatpush1.bf16.msra.mxu0 %v1069
        %1090 = vmatprep.subr.bf16.mxu0 0
        %1091 = vmatpush1.bf16.msra.mxu0 %v1070
        %1092 = vmatprep.subr.bf16.mxu0 0
        %1093 = vmatpush1.bf16.msra.mxu0 %v1071
        %1094 = vmatprep.subr.bf16.mxu0 0
        %1095 = vmatpush1.bf16.msra.mxu0 %v1072
        %1096 = vmatprep.subr.bf16.mxu0 0
        %1097 = vmatpush1.bf16.msra.mxu0 %v1073
        %1098 = vmatprep.subr.bf16.mxu0 0
        %1099 = vmatpush1.bf16.msra.mxu0 0
        %1100 = vmatprep.subr.bf16.mxu0 0
        %1101 = vmatpush1.bf16.msra.mxu0 0
        %1102 = vmatprep.subr.bf16.mxu0 0
        %1103 = vmatpush1.bf16.msra.mxu0 0
        %1104 = vmatprep.subr.bf16.mxu0 0
        %1105 = vmatpush1.bf16.msra.mxu0 0
        %1106 = vmatprep.subr.bf16.mxu0 0
        %1107 = vmatpush1.bf16.msra.mxu0 0
        %1108 = vmatprep.subr.bf16.mxu0 0
        %1109 = vmatpush1.bf16.msra.mxu0 0
        %1110 = vmatprep.subr.bf16.mxu0 0
        %1111 = vmatpush1.bf16.msra.mxu0 0
        %1112 = vmatprep.subr.bf16.mxu0 0
        %1113 = vmatpush1.bf16.msra.mxu0 0
        %1114 = vmatprep.mubr.bf16.mxu0 0
        %1115 = vmatmul.mubr.bf16.gmra.mrb[0].mxu0 %v851
        %v1116 = vpop.f32.mrb[0].mxu0
        %v1117 = vadd.f32 %v1033, %v1116
        %v1118 = vpop.f32.mrb[0].mxu0
        %v1119 = vpop.f32.mrb[0].mxu0
        %v1120 = vadd.f32 %v1033, %v1119
        %v1121 = vpop.f32.mrb[0].mxu0
        %1122 = vmatprep.mubr.bf16.mxu0 0
        %1123 = vmatmul.mubr.bf16.gmra.mrb[0].mxu0 %v852
        %v1124 = vpop.f32.mrb[0].mxu0
        %v1125 = vadd.f32 %v1033, %v1124
        %v1126 = vpop.f32.mrb[0].mxu0
        %v1127 = vpop.f32.mrb[0].mxu0
        %v1128 = vadd.f32 %v1033, %v1127
        %v1129 = vpop.f32.mrb[0].mxu0
        %1130 = vmatprep.mubr.bf16.mxu0 0
        %1131 = vmatmul.mubr.bf16.gmra.mrb[0].mxu0 %v853
        %v1132 = vpop.f32.mrb[0].mxu0
        %v1133 = vadd.f32 %v1033, %v1132
        %v1134 = vpop.f32.mrb[0].mxu0
        %v1135 = vpop.f32.mrb[0].mxu0
        %v1136 = vadd.f32 %v1033, %v1135
        %v1137 = vpop.f32.mrb[0].mxu0
        %1138 = vmatprep.mubr.bf16.mxu0 0
        %1139 = vmatmul.mubr.bf16.gmra.mrb[0].mxu0 %v854
        %v1140 = vpop.f32.mrb[0].mxu0
        %v1141 = vadd.f32 %v1033, %v1140
        %v1142 = vpop.f32.mrb[0].mxu0
        %v1143 = vpop.f32.mrb[0].mxu0
        %v1144 = vadd.f32 %v1033, %v1143
        %v1145 = vpop.f32.mrb[0].mxu0
        %1146 = vmatprep.mubr.bf16.mxu0 0
        %1147 = vmatmul.mubr.bf16.gmra.mrb[0].mxu0 %v855
        %v1148 = vpop.f32.mrb[0].mxu0
        %v1149 = vadd.f32 %v1033, %v1148
        %v1150 = vpop.f32.mrb[0].mxu0
        %v1151 = vpop.f32.mrb[0].mxu0
        %v1152 = vadd.f32 %v1033, %v1151
        %v1153 = vpop.f32.mrb[0].mxu0
        %1154 = vmatprep.mubr.bf16.mxu0 0
        %1155 = vmatmul.mubr.bf16.gmra.mrb[0].mxu0 %v856
        %v1156 = vpop.f32.mrb[0].mxu0
        %v1157 = vadd.f32 %v1033, %v1156
        %v1158 = vpop.f32.mrb[0].mxu0
        %v1159 = vpop.f32.mrb[0].mxu0
        %v1160 = vadd.f32 %v1033, %v1159
        %v1161 = vpop.f32.mrb[0].mxu0
        %1162 = vmatprep.mubr.bf16.mxu0 0
        %1163 = vmatmul.mubr.bf16.gmra.mrb[0].mxu0 %v857
        %v1164 = vpop.f32.mrb[0].mxu0
        %v1165 = vadd.f32 %v1033, %v1164
        %v1166 = vpop.f32.mrb[0].mxu0
        %v1167 = vpop.f32.mrb[0].mxu0
        %v1168 = vadd.f32 %v1033, %v1167
        %v1169 = vpop.f32.mrb[0].mxu0
        %1170 = vmatprep.mubr.bf16.mxu0 0
        %1171 = vmatmul.mubr.bf16.gmra.mrb[0].mxu0 %v858
        %v1172 = vpop.f32.mrb[0].mxu0
        %v1173 = vadd.f32 %v1033, %v1172
        %v1174 = vpop.f32.mrb[0].mxu0
        %v1175 = vpop.f32.mrb[0].mxu0
        %v1176 = vadd.f32 %v1033, %v1175
        %v1177 = vpop.f32.mrb[0].mxu0
        %1178 = vdwg.mxu0
        %v1179 = vpack.c.bf16 %v738, %v735
        %v1180 = vpack.c.bf16 %v746, %v743
        %v1181 = vpack.c.bf16 %v754, %v751
        %v1182 = vpack.c.bf16 %v762, %v759
        %v1183 = vpack.c.bf16 %v770, %v767
        %v1184 = vpack.c.bf16 %v778, %v775
        %v1185 = vpack.c.bf16 %v786, %v783
        %v1186 = vpack.c.bf16 %v794, %v791
        %v1187 = vpack.c.bf16 %v953, %v950
        %v1188 = vpack.c.bf16 %v961, %v958
        %v1189 = vpack.c.bf16 %v969, %v966
        %v1190 = vpack.c.bf16 %v977, %v974
        %v1191 = vpack.c.bf16 %v985, %v982
        %v1192 = vpack.c.bf16 %v993, %v990
        %v1193 = vpack.c.bf16 %v1001, %v998
        %v1194 = vpack.c.bf16 %v1009, %v1006
        %v1195 = vpack.c.bf16 %v1120, %v1117
        %v1196 = vpack.c.bf16 %v1128, %v1125
        %v1197 = vpack.c.bf16 %v1136, %v1133
        %v1198 = vpack.c.bf16 %v1144, %v1141
        %v1199 = vpack.c.bf16 %v1152, %v1149
        %v1200 = vpack.c.bf16 %v1160, %v1157
        %v1201 = vpack.c.bf16 %v1168, %v1165
        %v1202 = vpack.c.bf16 %v1176, %v1173
        %vm1203 = vcmask 261120
        %v1205 = vsel %vm1203, %v1179, 0
        %v1208 = vsel %vm1203, %v1187, 0
        %1210 = vmatprep.subr.bf16.mxu0 0
        %1211 = vmatpush1.bf16.xpose.msra.mxu0 %v1208
        %1212 = vmatprep.subr.bf16.mxu0 0
        %1213 = vmatpush1.bf16.xpose.msra.mxu0 0
        %1214 = vmatprep.subr.bf16.mxu0 0
        %1215 = vmatpush1.bf16.xpose.msra.mxu0 0
        %1216 = vmatprep.subr.bf16.mxu0 0
        %1217 = vmatpush1.bf16.xpose.msra.mxu0 0
        %1218 = vmatprep.subr.bf16.mxu0 0
        %1219 = vmatpush1.bf16.xpose.msra.mxu0 0
        %1220 = vmatprep.subr.bf16.mxu0 0
        %1221 = vmatpush1.bf16.xpose.msra.mxu0 0
        %1222 = vmatprep.subr.bf16.mxu0 0
        %1223 = vmatpush1.bf16.xpose.msra.mxu0 0
        %1224 = vmatprep.subr.bf16.mxu0 0
        %1225 = vmatpush1.bf16.xpose.msra.mxu0 0
        %1226 = vmatprep.subr.bf16.mxu0 0
        %1227 = vmatpush1.bf16.xpose.msra.mxu0 0
        %1228 = vmatprep.subr.bf16.mxu0 0
        %1229 = vmatpush1.bf16.xpose.msra.mxu0 0
        %1230 = vmatprep.subr.bf16.mxu0 0
        %1231 = vmatpush1.bf16.xpose.msra.mxu0 0
        %1232 = vmatprep.subr.bf16.mxu0 0
        %1233 = vmatpush1.bf16.xpose.msra.mxu0 0
        %1234 = vmatprep.subr.bf16.mxu0 0
        %1235 = vmatpush1.bf16.xpose.msra.mxu0 0
        %1236 = vmatprep.subr.bf16.mxu0 0
        %1237 = vmatpush1.bf16.xpose.msra.mxu0 0
        %1238 = vmatprep.subr.bf16.mxu0 0
        %1239 = vmatpush1.bf16.xpose.msra.mxu0 0
        %1240 = vmatprep.subr.bf16.mxu0 0
        %1241 = vmatpush1.bf16.xpose.msra.mxu0 0
        %1242 = vmatprep.mubr.bf16.mxu0 0
        %1243 = vmatmul.mubr.bf16.gmra.mrb[0].mxu0 %v1205
        %v1244 = vpop.f32.mrb[0].mxu0
        %v1245 = vadd.f32 0.0, %v1244
        %v1246 = vpop.f32.mrb[0].mxu0
        %v1247 = vpop.f32.mrb[0].mxu0
        %v1248 = vadd.f32 0.0, %v1247
        %v1249 = vpop.f32.mrb[0].mxu0
        %1250 = vdwg.mxu0
        %v1252 = vsel %vm1203, %v1180, 0
        %v1255 = vsel %vm1203, %v1188, 0
        %1257 = vmatprep.subr.bf16.mxu0 0
        %1258 = vmatpush1.bf16.xpose.msra.mxu0 %v1255
        %1259 = vmatprep.subr.bf16.mxu0 0
        %1260 = vmatpush1.bf16.xpose.msra.mxu0 0
        %1261 = vmatprep.subr.bf16.mxu0 0
        %1262 = vmatpush1.bf16.xpose.msra.mxu0 0
        %1263 = vmatprep.subr.bf16.mxu0 0
        %1264 = vmatpush1.bf16.xpose.msra.mxu0 0
        %1265 = vmatprep.subr.bf16.mxu0 0
        %1266 = vmatpush1.bf16.xpose.msra.mxu0 0
        %1267 = vmatprep.subr.bf16.mxu0 0
        %1268 = vmatpush1.bf16.xpose.msra.mxu0 0
        %1269 = vmatprep.subr.bf16.mxu0 0
        %1270 = vmatpush1.bf16.xpose.msra.mxu0 0
        %1271 = vmatprep.subr.bf16.mxu0 0
        %1272 = vmatpush1.bf16.xpose.msra.mxu0 0
        %1273 = vmatprep.subr.bf16.mxu0 0
        %1274 = vmatpush1.bf16.xpose.msra.mxu0 0
        %1275 = vmatprep.subr.bf16.mxu0 0
        %1276 = vmatpush1.bf16.xpose.msra.mxu0 0
        %1277 = vmatprep.subr.bf16.mxu0 0
        %1278 = vmatpush1.bf16.xpose.msra.mxu0 0
        %1279 = vmatprep.subr.bf16.mxu0 0
        %1280 = vmatpush1.bf16.xpose.msra.mxu0 0
        %1281 = vmatprep.subr.bf16.mxu0 0
        %1282 = vmatpush1.bf16.xpose.msra.mxu0 0
        %1283 = vmatprep.subr.bf16.mxu0 0
        %1284 = vmatpush1.bf16.xpose.msra.mxu0 0
        %1285 = vmatprep.subr.bf16.mxu0 0
        %1286 = vmatpush1.bf16.xpose.msra.mxu0 0
        %1287 = vmatprep.subr.bf16.mxu0 0
        %1288 = vmatpush1.bf16.xpose.msra.mxu0 0
        %1289 = vmatprep.mubr.bf16.mxu0 0
        %1290 = vmatmul.mubr.bf16.gmra.mrb[0].mxu0 %v1252
        %v1291 = vpop.f32.mrb[0].mxu0
        %v1292 = vadd.f32 0.0, %v1291
        %v1293 = vpop.f32.mrb[0].mxu0
        %v1294 = vpop.f32.mrb[0].mxu0
        %v1295 = vadd.f32 0.0, %v1294
        %v1296 = vpop.f32.mrb[0].mxu0
        %1297 = vdwg.mxu0
        %v1299 = vsel %vm1203, %v1181, 0
        %v1302 = vsel %vm1203, %v1189, 0
        %1304 = vmatprep.subr.bf16.mxu0 0
        %1305 = vmatpush1.bf16.xpose.msra.mxu0 %v1302
        %1306 = vmatprep.subr.bf16.mxu0 0
        %1307 = vmatpush1.bf16.xpose.msra.mxu0 0
        %1308 = vmatprep.subr.bf16.mxu0 0
        %1309 = vmatpush1.bf16.xpose.msra.mxu0 0
        %1310 = vmatprep.subr.bf16.mxu0 0
        %1311 = vmatpush1.bf16.xpose.msra.mxu0 0
        %1312 = vmatprep.subr.bf16.mxu0 0
        %1313 = vmatpush1.bf16.xpose.msra.mxu0 0
        %1314 = vmatprep.subr.bf16.mxu0 0
        %1315 = vmatpush1.bf16.xpose.msra.mxu0 0
        %1316 = vmatprep.subr.bf16.mxu0 0
        %1317 = vmatpush1.bf16.xpose.msra.mxu0 0
        %1318 = vmatprep.subr.bf16.mxu0 0
        %1319 = vmatpush1.bf16.xpose.msra.mxu0 0
        %1320 = vmatprep.subr.bf16.mxu0 0
        %1321 = vmatpush1.bf16.xpose.msra.mxu0 0
        %1322 = vmatprep.subr.bf16.mxu0 0
        %1323 = vmatpush1.bf16.xpose.msra.mxu0 0
        %1324 = vmatprep.subr.bf16.mxu0 0
        %1325 = vmatpush1.bf16.xpose.msra.mxu0 0
        %1326 = vmatprep.subr.bf16.mxu0 0
        %1327 = vmatpush1.bf16.xpose.msra.mxu0 0
        %1328 = vmatprep.subr.bf16.mxu0 0
        %1329 = vmatpush1.bf16.xpose.msra.mxu0 0
        %1330 = vmatprep.subr.bf16.mxu0 0
        %1331 = vmatpush1.bf16.xpose.msra.mxu0 0
        %1332 = vmatprep.subr.bf16.mxu0 0
        %1333 = vmatpush1.bf16.xpose.msra.mxu0 0
        %1334 = vmatprep.subr.bf16.mxu0 0
        %1335 = vmatpush1.bf16.xpose.msra.mxu0 0
        %1336 = vmatprep.mubr.bf16.mxu0 0
        %1337 = vmatmul.mubr.bf16.gmra.mrb[0].mxu0 %v1299
        %v1338 = vpop.f32.mrb[0].mxu0
        %v1339 = vadd.f32 0.0, %v1338
        %v1340 = vpop.f32.mrb[0].mxu0
        %v1341 = vpop.f32.mrb[0].mxu0
        %v1342 = vadd.f32 0.0, %v1341
        %v1343 = vpop.f32.mrb[0].mxu0
        %1344 = vdwg.mxu0
        %v1346 = vsel %vm1203, %v1182, 0
        %v1349 = vsel %vm1203, %v1190, 0
        %1351 = vmatprep.subr.bf16.mxu0 0
        %1352 = vmatpush1.bf16.xpose.msra.mxu0 %v1349
        %1353 = vmatprep.subr.bf16.mxu0 0
        %1354 = vmatpush1.bf16.xpose.msra.mxu0 0
        %1355 = vmatprep.subr.bf16.mxu0 0
        %1356 = vmatpush1.bf16.xpose.msra.mxu0 0
        %1357 = vmatprep.subr.bf16.mxu0 0
        %1358 = vmatpush1.bf16.xpose.msra.mxu0 0
        %1359 = vmatprep.subr.bf16.mxu0 0
        %1360 = vmatpush1.bf16.xpose.msra.mxu0 0
        %1361 = vmatprep.subr.bf16.mxu0 0
        %1362 = vmatpush1.bf16.xpose.msra.mxu0 0
        %1363 = vmatprep.subr.bf16.mxu0 0
        %1364 = vmatpush1.bf16.xpose.msra.mxu0 0
        %1365 = vmatprep.subr.bf16.mxu0 0
        %1366 = vmatpush1.bf16.xpose.msra.mxu0 0
        %1367 = vmatprep.subr.bf16.mxu0 0
        %1368 = vmatpush1.bf16.xpose.msra.mxu0 0
        %1369 = vmatprep.subr.bf16.mxu0 0
        %1370 = vmatpush1.bf16.xpose.msra.mxu0 0
        %1371 = vmatprep.subr.bf16.mxu0 0
        %1372 = vmatpush1.bf16.xpose.msra.mxu0 0
        %1373 = vmatprep.subr.bf16.mxu0 0
        %1374 = vmatpush1.bf16.xpose.msra.mxu0 0
        %1375 = vmatprep.subr.bf16.mxu0 0
        %1376 = vmatpush1.bf16.xpose.msra.mxu0 0
        %1377 = vmatprep.subr.bf16.mxu0 0
        %1378 = vmatpush1.bf16.xpose.msra.mxu0 0
        %1379 = vmatprep.subr.bf16.mxu0 0
        %1380 = vmatpush1.bf16.xpose.msra.mxu0 0
        %1381 = vmatprep.subr.bf16.mxu0 0
        %1382 = vmatpush1.bf16.xpose.msra.mxu0 0
        %1383 = vmatprep.mubr.bf16.mxu0 0
        %1384 = vmatmul.mubr.bf16.gmra.mrb[0].mxu0 %v1346
        %v1385 = vpop.f32.mrb[0].mxu0
        %v1386 = vadd.f32 0.0, %v1385
        %v1387 = vpop.f32.mrb[0].mxu0
        %v1388 = vpop.f32.mrb[0].mxu0
        %v1389 = vadd.f32 0.0, %v1388
        %v1390 = vpop.f32.mrb[0].mxu0
        %1391 = vdwg.mxu0
        %v1393 = vsel %vm1203, %v1183, 0
        %v1396 = vsel %vm1203, %v1191, 0
        %1398 = vmatprep.subr.bf16.mxu0 0
        %1399 = vmatpush1.bf16.xpose.msra.mxu0 %v1396
        %1400 = vmatprep.subr.bf16.mxu0 0
        %1401 = vmatpush1.bf16.xpose.msra.mxu0 0
        %1402 = vmatprep.subr.bf16.mxu0 0
        %1403 = vmatpush1.bf16.xpose.msra.mxu0 0
        %1404 = vmatprep.subr.bf16.mxu0 0
        %1405 = vmatpush1.bf16.xpose.msra.mxu0 0
        %1406 = vmatprep.subr.bf16.mxu0 0
        %1407 = vmatpush1.bf16.xpose.msra.mxu0 0
        %1408 = vmatprep.subr.bf16.mxu0 0
        %1409 = vmatpush1.bf16.xpose.msra.mxu0 0
        %1410 = vmatprep.subr.bf16.mxu0 0
        %1411 = vmatpush1.bf16.xpose.msra.mxu0 0
        %1412 = vmatprep.subr.bf16.mxu0 0
        %1413 = vmatpush1.bf16.xpose.msra.mxu0 0
        %1414 = vmatprep.subr.bf16.mxu0 0
        %1415 = vmatpush1.bf16.xpose.msra.mxu0 0
        %1416 = vmatprep.subr.bf16.mxu0 0
        %1417 = vmatpush1.bf16.xpose.msra.mxu0 0
        %1418 = vmatprep.subr.bf16.mxu0 0
        %1419 = vmatpush1.bf16.xpose.msra.mxu0 0
        %1420 = vmatprep.subr.bf16.mxu0 0
        %1421 = vmatpush1.bf16.xpose.msra.mxu0 0
        %1422 = vmatprep.subr.bf16.mxu0 0
        %1423 = vmatpush1.bf16.xpose.msra.mxu0 0
        %1424 = vmatprep.subr.bf16.mxu0 0
        %1425 = vmatpush1.bf16.xpose.msra.mxu0 0
        %1426 = vmatprep.subr.bf16.mxu0 0
        %1427 = vmatpush1.bf16.xpose.msra.mxu0 0
        %1428 = vmatprep.subr.bf16.mxu0 0
        %1429 = vmatpush1.bf16.xpose.msra.mxu0 0
        %1430 = vmatprep.mubr.bf16.mxu0 0
        %1431 = vmatmul.mubr.bf16.gmra.mrb[0].mxu0 %v1393
        %v1432 = vpop.f32.mrb[0].mxu0
        %v1433 = vadd.f32 0.0, %v1432
        %v1434 = vpop.f32.mrb[0].mxu0
        %v1435 = vpop.f32.mrb[0].mxu0
        %v1436 = vadd.f32 0.0, %v1435
        %v1437 = vpop.f32.mrb[0].mxu0
        %1438 = vdwg.mxu0
        %v1440 = vsel %vm1203, %v1184, 0
        %v1443 = vsel %vm1203, %v1192, 0
        %1445 = vmatprep.subr.bf16.mxu0 0
        %1446 = vmatpush1.bf16.xpose.msra.mxu0 %v1443
        %1447 = vmatprep.subr.bf16.mxu0 0
        %1448 = vmatpush1.bf16.xpose.msra.mxu0 0
        %1449 = vmatprep.subr.bf16.mxu0 0
        %1450 = vmatpush1.bf16.xpose.msra.mxu0 0
        %1451 = vmatprep.subr.bf16.mxu0 0
        %1452 = vmatpush1.bf16.xpose.msra.mxu0 0
        %1453 = vmatprep.subr.bf16.mxu0 0
        %1454 = vmatpush1.bf16.xpose.msra.mxu0 0
        %1455 = vmatprep.subr.bf16.mxu0 0
        %1456 = vmatpush1.bf16.xpose.msra.mxu0 0
        %1457 = vmatprep.subr.bf16.mxu0 0
        %1458 = vmatpush1.bf16.xpose.msra.mxu0 0
        %1459 = vmatprep.subr.bf16.mxu0 0
        %1460 = vmatpush1.bf16.xpose.msra.mxu0 0
        %1461 = vmatprep.subr.bf16.mxu0 0
        %1462 = vmatpush1.bf16.xpose.msra.mxu0 0
        %1463 = vmatprep.subr.bf16.mxu0 0
        %1464 = vmatpush1.bf16.xpose.msra.mxu0 0
        %1465 = vmatprep.subr.bf16.mxu0 0
        %1466 = vmatpush1.bf16.xpose.msra.mxu0 0
        %1467 = vmatprep.subr.bf16.mxu0 0
        %1468 = vmatpush1.bf16.xpose.msra.mxu0 0
        %1469 = vmatprep.subr.bf16.mxu0 0
        %1470 = vmatpush1.bf16.xpose.msra.mxu0 0
        %1471 = vmatprep.subr.bf16.mxu0 0
        %1472 = vmatpush1.bf16.xpose.msra.mxu0 0
        %1473 = vmatprep.subr.bf16.mxu0 0
        %1474 = vmatpush1.bf16.xpose.msra.mxu0 0
        %1475 = vmatprep.subr.bf16.mxu0 0
        %1476 = vmatpush1.bf16.xpose.msra.mxu0 0
        %1477 = vmatprep.mubr.bf16.mxu0 0
        %1478 = vmatmul.mubr.bf16.gmra.mrb[0].mxu0 %v1440
        %v1479 = vpop.f32.mrb[0].mxu0
        %v1480 = vadd.f32 0.0, %v1479
        %v1481 = vpop.f32.mrb[0].mxu0
        %v1482 = vpop.f32.mrb[0].mxu0
        %v1483 = vadd.f32 0.0, %v1482
        %v1484 = vpop.f32.mrb[0].mxu0
        %1485 = vdwg.mxu0
        %v1487 = vsel %vm1203, %v1185, 0
        %v1490 = vsel %vm1203, %v1193, 0
        %1492 = vmatprep.subr.bf16.mxu0 0
        %1493 = vmatpush1.bf16.xpose.msra.mxu0 %v1490
        %1494 = vmatprep.subr.bf16.mxu0 0
        %1495 = vmatpush1.bf16.xpose.msra.mxu0 0
        %1496 = vmatprep.subr.bf16.mxu0 0
        %1497 = vmatpush1.bf16.xpose.msra.mxu0 0
        %1498 = vmatprep.subr.bf16.mxu0 0
        %1499 = vmatpush1.bf16.xpose.msra.mxu0 0
        %1500 = vmatprep.subr.bf16.mxu0 0
        %1501 = vmatpush1.bf16.xpose.msra.mxu0 0
        %1502 = vmatprep.subr.bf16.mxu0 0
        %1503 = vmatpush1.bf16.xpose.msra.mxu0 0
        %1504 = vmatprep.subr.bf16.mxu0 0
        %1505 = vmatpush1.bf16.xpose.msra.mxu0 0
        %1506 = vmatprep.subr.bf16.mxu0 0
        %1507 = vmatpush1.bf16.xpose.msra.mxu0 0
        %1508 = vmatprep.subr.bf16.mxu0 0
        %1509 = vmatpush1.bf16.xpose.msra.mxu0 0
        %1510 = vmatprep.subr.bf16.mxu0 0
        %1511 = vmatpush1.bf16.xpose.msra.mxu0 0
        %1512 = vmatprep.subr.bf16.mxu0 0
        %1513 = vmatpush1.bf16.xpose.msra.mxu0 0
        %1514 = vmatprep.subr.bf16.mxu0 0
        %1515 = vmatpush1.bf16.xpose.msra.mxu0 0
        %1516 = vmatprep.subr.bf16.mxu0 0
        %1517 = vmatpush1.bf16.xpose.msra.mxu0 0
        %1518 = vmatprep.subr.bf16.mxu0 0
        %1519 = vmatpush1.bf16.xpose.msra.mxu0 0
        %1520 = vmatprep.subr.bf16.mxu0 0
        %1521 = vmatpush1.bf16.xpose.msra.mxu0 0
        %1522 = vmatprep.subr.bf16.mxu0 0
        %1523 = vmatpush1.bf16.xpose.msra.mxu0 0
        %1524 = vmatprep.mubr.bf16.mxu0 0
        %1525 = vmatmul.mubr.bf16.gmra.mrb[0].mxu0 %v1487
        %v1526 = vpop.f32.mrb[0].mxu0
        %v1527 = vadd.f32 0.0, %v1526
        %v1528 = vpop.f32.mrb[0].mxu0
        %v1529 = vpop.f32.mrb[0].mxu0
        %v1530 = vadd.f32 0.0, %v1529
        %v1531 = vpop.f32.mrb[0].mxu0
        %1532 = vdwg.mxu0
        %v1534 = vsel %vm1203, %v1186, 0
        %v1537 = vsel %vm1203, %v1194, 0
        %1539 = vmatprep.subr.bf16.mxu0 0
        %1540 = vmatpush1.bf16.xpose.msra.mxu0 %v1537
        %1541 = vmatprep.subr.bf16.mxu0 0
        %1542 = vmatpush1.bf16.xpose.msra.mxu0 0
        %1543 = vmatprep.subr.bf16.mxu0 0
        %1544 = vmatpush1.bf16.xpose.msra.mxu0 0
        %1545 = vmatprep.subr.bf16.mxu0 0
        %1546 = vmatpush1.bf16.xpose.msra.mxu0 0
        %1547 = vmatprep.subr.bf16.mxu0 0
        %1548 = vmatpush1.bf16.xpose.msra.mxu0 0
        %1549 = vmatprep.subr.bf16.mxu0 0
        %1550 = vmatpush1.bf16.xpose.msra.mxu0 0
        %1551 = vmatprep.subr.bf16.mxu0 0
        %1552 = vmatpush1.bf16.xpose.msra.mxu0 0
        %1553 = vmatprep.subr.bf16.mxu0 0
        %1554 = vmatpush1.bf16.xpose.msra.mxu0 0
        %1555 = vmatprep.subr.bf16.mxu0 0
        %1556 = vmatpush1.bf16.xpose.msra.mxu0 0
        %1557 = vmatprep.subr.bf16.mxu0 0
        %1558 = vmatpush1.bf16.xpose.msra.mxu0 0
        %1559 = vmatprep.subr.bf16.mxu0 0
        %1560 = vmatpush1.bf16.xpose.msra.mxu0 0
        %1561 = vmatprep.subr.bf16.mxu0 0
        %1562 = vmatpush1.bf16.xpose.msra.mxu0 0
        %1563 = vmatprep.subr.bf16.mxu0 0
        %1564 = vmatpush1.bf16.xpose.msra.mxu0 0
        %1565 = vmatprep.subr.bf16.mxu0 0
        %1566 = vmatpush1.bf16.xpose.msra.mxu0 0
        %1567 = vmatprep.subr.bf16.mxu0 0
        %1568 = vmatpush1.bf16.xpose.msra.mxu0 0
        %1569 = vmatprep.subr.bf16.mxu0 0
        %1570 = vmatpush1.bf16.xpose.msra.mxu0 0
        %1571 = vmatprep.mubr.bf16.mxu0 0
        %1572 = vmatmul.mubr.bf16.gmra.mrb[0].mxu0 %v1534
        %v1573 = vpop.f32.mrb[0].mxu0
        %v1574 = vadd.f32 0.0, %v1573
        %v1575 = vpop.f32.mrb[0].mxu0
        %v1576 = vpop.f32.mrb[0].mxu0
        %v1577 = vadd.f32 0.0, %v1576
        %v1578 = vpop.f32.mrb[0].mxu0
        %1579 = vdwg.mxu0
        %vm1580 = vcmask 130048
        %v1581 = vsel %vm1580, %v1245, -inf
        %1582 = vmax.xlane.f32.xlu0 %v1581
        %v1583 = vpop.xlane.xlu0 %1582
        %v1584 = vsel %vm1580, %v1248, -inf
        %1585 = vmax.xlane.f32.xlu0 %v1584
        %v1586 = vpop.xlane.xlu0 %1585
        %v1587 = vsel %vm1580, %v1292, -inf
        %1588 = vmax.xlane.f32.xlu0 %v1587
        %v1589 = vpop.xlane.xlu0 %1588
        %v1590 = vsel %vm1580, %v1295, -inf
        %1591 = vmax.xlane.f32.xlu0 %v1590
        %v1592 = vpop.xlane.xlu0 %1591
        %v1593 = vsel %vm1580, %v1339, -inf
        %1594 = vmax.xlane.f32.xlu0 %v1593
        %v1595 = vpop.xlane.xlu0 %1594
        %v1596 = vsel %vm1580, %v1342, -inf
        %1597 = vmax.xlane.f32.xlu0 %v1596
        %v1598 = vpop.xlane.xlu0 %1597
        %v1599 = vsel %vm1580, %v1386, -inf
        %1600 = vmax.xlane.f32.xlu0 %v1599
        %v1601 = vpop.xlane.xlu0 %1600
        %v1602 = vsel %vm1580, %v1389, -inf
        %1603 = vmax.xlane.f32.xlu0 %v1602
        %v1604 = vpop.xlane.xlu0 %1603
        %v1605 = vsel %vm1580, %v1433, -inf
        %1606 = vmax.xlane.f32.xlu0 %v1605
        %v1607 = vpop.xlane.xlu0 %1606
        %v1608 = vsel %vm1580, %v1436, -inf
        %1609 = vmax.xlane.f32.xlu0 %v1608
        %v1610 = vpop.xlane.xlu0 %1609
        %v1611 = vsel %vm1580, %v1480, -inf
        %1612 = vmax.xlane.f32.xlu0 %v1611
        %v1613 = vpop.xlane.xlu0 %1612
        %v1614 = vsel %vm1580, %v1483, -inf
        %1615 = vmax.xlane.f32.xlu0 %v1614
        %v1616 = vpop.xlane.xlu0 %1615
        %v1617 = vsel %vm1580, %v1527, -inf
        %1618 = vmax.xlane.f32.xlu0 %v1617
        %v1619 = vpop.xlane.xlu0 %1618
        %v1620 = vsel %vm1580, %v1530, -inf
        %1621 = vmax.xlane.f32.xlu0 %v1620
        %v1622 = vpop.xlane.xlu0 %1621
        %v1623 = vsel %vm1580, %v1574, -inf
        %1624 = vmax.xlane.f32.xlu0 %v1623
        %v1625 = vpop.xlane.xlu0 %1624
        %v1626 = vsel %vm1580, %v1577, -inf
        %1627 = vmax.xlane.f32.xlu0 %v1626
        %v1628 = vpop.xlane.xlu0 %1627
        %v1629 = vsub.f32 %v1245, %v1583
        %v1630 = vsub.f32 %v1248, %v1586
        %v1631 = vsub.f32 %v1292, %v1589
        %v1632 = vsub.f32 %v1295, %v1592
        %v1633 = vsub.f32 %v1339, %v1595
        %v1634 = vsub.f32 %v1342, %v1598
        %v1635 = vsub.f32 %v1386, %v1601
        %v1636 = vsub.f32 %v1389, %v1604
        %v1637 = vsub.f32 %v1433, %v1607
        %v1638 = vsub.f32 %v1436, %v1610
        %v1639 = vsub.f32 %v1480, %v1613
        %v1640 = vsub.f32 %v1483, %v1616
        %v1641 = vsub.f32 %v1527, %v1619
        %v1642 = vsub.f32 %v1530, %v1622
        %v1643 = vsub.f32 %v1574, %v1625
        %v1644 = vsub.f32 %v1577, %v1628
        %v1645 = vmul.f32 %v1629, 1.442695
        %v1646 = vpow.pop %v1645
        %v1647 = vmul.f32 %v1630, 1.442695
        %v1648 = vpow.pop %v1647
        %v1649 = vmul.f32 %v1631, 1.442695
        %v1650 = vpow.pop %v1649
        %v1651 = vmul.f32 %v1632, 1.442695
        %v1652 = vpow.pop %v1651
        %v1653 = vmul.f32 %v1633, 1.442695
        %v1654 = vpow.pop %v1653
        %v1655 = vmul.f32 %v1634, 1.442695
        %v1656 = vpow.pop %v1655
        %v1657 = vmul.f32 %v1635, 1.442695
        %v1658 = vpow.pop %v1657
        %v1659 = vmul.f32 %v1636, 1.442695
        %v1660 = vpow.pop %v1659
        %v1661 = vmul.f32 %v1637, 1.442695
        %v1662 = vpow.pop %v1661
        %v1663 = vmul.f32 %v1638, 1.442695
        %v1664 = vpow.pop %v1663
        %v1665 = vmul.f32 %v1639, 1.442695
        %v1666 = vpow.pop %v1665
        %v1667 = vmul.f32 %v1640, 1.442695
        %v1668 = vpow.pop %v1667
        %v1669 = vmul.f32 %v1641, 1.442695
        %v1670 = vpow.pop %v1669
        %v1671 = vmul.f32 %v1642, 1.442695
        %v1672 = vpow.pop %v1671
        %v1673 = vmul.f32 %v1643, 1.442695
        %v1674 = vpow.pop %v1673
        %v1675 = vmul.f32 %v1644, 1.442695
        %v1676 = vpow.pop %v1675
        %v1677 = vsel %vm1580, %v1646, 0.0
        %1678 = vadd.xlane.f32.xlu0 %v1677
        %v1679 = vpop.xlane.xlu0 %1678
        %v1680 = vsel %vm1580, %v1648, 0.0
        %1681 = vadd.xlane.f32.xlu0 %v1680
        %v1682 = vpop.xlane.xlu0 %1681
        %v1683 = vsel %vm1580, %v1650, 0.0
        %1684 = vadd.xlane.f32.xlu0 %v1683
        %v1685 = vpop.xlane.xlu0 %1684
        %v1686 = vsel %vm1580, %v1652, 0.0
        %1687 = vadd.xlane.f32.xlu0 %v1686
        %v1688 = vpop.xlane.xlu0 %1687
        %v1689 = vsel %vm1580, %v1654, 0.0
        %1690 = vadd.xlane.f32.xlu0 %v1689
        %v1691 = vpop.xlane.xlu0 %1690
        %v1692 = vsel %vm1580, %v1656, 0.0
        %1693 = vadd.xlane.f32.xlu0 %v1692
        %v1694 = vpop.xlane.xlu0 %1693
        %v1695 = vsel %vm1580, %v1658, 0.0
        %1696 = vadd.xlane.f32.xlu0 %v1695
        %v1697 = vpop.xlane.xlu0 %1696
        %v1698 = vsel %vm1580, %v1660, 0.0
        %1699 = vadd.xlane.f32.xlu0 %v1698
        %v1700 = vpop.xlane.xlu0 %1699
        %v1701 = vsel %vm1580, %v1662, 0.0
        %1702 = vadd.xlane.f32.xlu0 %v1701
        %v1703 = vpop.xlane.xlu0 %1702
        %v1704 = vsel %vm1580, %v1664, 0.0
        %1705 = vadd.xlane.f32.xlu0 %v1704
        %v1706 = vpop.xlane.xlu0 %1705
        %v1707 = vsel %vm1580, %v1666, 0.0
        %1708 = vadd.xlane.f32.xlu0 %v1707
        %v1709 = vpop.xlane.xlu0 %1708
        %v1710 = vsel %vm1580, %v1668, 0.0
        %1711 = vadd.xlane.f32.xlu0 %v1710
        %v1712 = vpop.xlane.xlu0 %1711
        %v1713 = vsel %vm1580, %v1670, 0.0
        %1714 = vadd.xlane.f32.xlu0 %v1713
        %v1715 = vpop.xlane.xlu0 %1714
        %v1716 = vsel %vm1580, %v1672, 0.0
        %1717 = vadd.xlane.f32.xlu0 %v1716
        %v1718 = vpop.xlane.xlu0 %1717
        %v1719 = vsel %vm1580, %v1674, 0.0
        %1720 = vadd.xlane.f32.xlu0 %v1719
        %v1721 = vpop.xlane.xlu0 %1720
        %v1722 = vsel %vm1580, %v1676, 0.0
        %1723 = vadd.xlane.f32.xlu0 %v1722
        %v1724 = vpop.xlane.xlu0 %1723
        %v1725 = vpack.c.bf16 %v1648, %v1646
        %v1726 = vpack.c.bf16 %v1652, %v1650
        %v1727 = vpack.c.bf16 %v1656, %v1654
        %v1728 = vpack.c.bf16 %v1660, %v1658
        %v1729 = vpack.c.bf16 %v1664, %v1662
        %v1730 = vpack.c.bf16 %v1668, %v1666
        %v1731 = vpack.c.bf16 %v1672, %v1670
        %v1732 = vpack.c.bf16 %v1676, %v1674
        %v1734 = vsel %vm1580, %v1725, 0
        %1736 = vmatprep.subr.bf16.mxu0 0
        %1737 = vmatpush1.bf16.msra.mxu0 %v1195
        %1738 = vmatprep.subr.bf16.mxu0 0
        %1739 = vmatpush1.bf16.msra.mxu0 0
        %1740 = vmatprep.subr.bf16.mxu0 0
        %1741 = vmatpush1.bf16.msra.mxu0 0
        %1742 = vmatprep.subr.bf16.mxu0 0
        %1743 = vmatpush1.bf16.msra.mxu0 0
        %1744 = vmatprep.subr.bf16.mxu0 0
        %1745 = vmatpush1.bf16.msra.mxu0 0
        %1746 = vmatprep.subr.bf16.mxu0 0
        %1747 = vmatpush1.bf16.msra.mxu0 0
        %1748 = vmatprep.subr.bf16.mxu0 0
        %1749 = vmatpush1.bf16.msra.mxu0 0
        %1750 = vmatprep.subr.bf16.mxu0 0
        %1751 = vmatpush1.bf16.msra.mxu0 0
        %1752 = vmatprep.subr.bf16.mxu0 0
        %1753 = vmatpush1.bf16.msra.mxu0 0
        %1754 = vmatprep.subr.bf16.mxu0 0
        %1755 = vmatpush1.bf16.msra.mxu0 0
        %1756 = vmatprep.subr.bf16.mxu0 0
        %1757 = vmatpush1.bf16.msra.mxu0 0
        %1758 = vmatprep.subr.bf16.mxu0 0
        %1759 = vmatpush1.bf16.msra.mxu0 0
        %1760 = vmatprep.subr.bf16.mxu0 0
        %1761 = vmatpush1.bf16.msra.mxu0 0
        %1762 = vmatprep.subr.bf16.mxu0 0
        %1763 = vmatpush1.bf16.msra.mxu0 0
        %1764 = vmatprep.subr.bf16.mxu0 0
        %1765 = vmatpush1.bf16.msra.mxu0 0
        %1766 = vmatprep.subr.bf16.mxu0 0
        %1767 = vmatpush1.bf16.msra.mxu0 0
        %1768 = vmatprep.mubr.bf16.mxu0 0
        %1769 = vmatmul.mubr.bf16.gmra.mrb[0].mxu0 %v1734
        %v1770 = vpop.f32.mrb[0].mxu0
        %v1771 = vadd.f32 0.0, %v1770
        %v1772 = vpop.f32.mrb[0].mxu0
        %v1773 = vpop.f32.mrb[0].mxu0
        %v1774 = vadd.f32 0.0, %v1773
        %v1775 = vpop.f32.mrb[0].mxu0
        %1776 = vdwg.mxu0
        %v1778 = vsel %vm1580, %v1726, 0
        %1780 = vmatprep.subr.bf16.mxu0 0
        %1781 = vmatpush1.bf16.msra.mxu0 %v1196
        %1782 = vmatprep.subr.bf16.mxu0 0
        %1783 = vmatpush1.bf16.msra.mxu0 0
        %1784 = vmatprep.subr.bf16.mxu0 0
        %1785 = vmatpush1.bf16.msra.mxu0 0
        %1786 = vmatprep.subr.bf16.mxu0 0
        %1787 = vmatpush1.bf16.msra.mxu0 0
        %1788 = vmatprep.subr.bf16.mxu0 0
        %1789 = vmatpush1.bf16.msra.mxu0 0
        %1790 = vmatprep.subr.bf16.mxu0 0
        %1791 = vmatpush1.bf16.msra.mxu0 0
        %1792 = vmatprep.subr.bf16.mxu0 0
        %1793 = vmatpush1.bf16.msra.mxu0 0
        %1794 = vmatprep.subr.bf16.mxu0 0
        %1795 = vmatpush1.bf16.msra.mxu0 0
        %1796 = vmatprep.subr.bf16.mxu0 0
        %1797 = vmatpush1.bf16.msra.mxu0 0
        %1798 = vmatprep.subr.bf16.mxu0 0
        %1799 = vmatpush1.bf16.msra.mxu0 0
        %1800 = vmatprep.subr.bf16.mxu0 0
        %1801 = vmatpush1.bf16.msra.mxu0 0
        %1802 = vmatprep.subr.bf16.mxu0 0
        %1803 = vmatpush1.bf16.msra.mxu0 0
        %1804 = vmatprep.subr.bf16.mxu0 0
        %1805 = vmatpush1.bf16.msra.mxu0 0
        %1806 = vmatprep.subr.bf16.mxu0 0
        %1807 = vmatpush1.bf16.msra.mxu0 0
        %1808 = vmatprep.subr.bf16.mxu0 0
        %1809 = vmatpush1.bf16.msra.mxu0 0
        %1810 = vmatprep.subr.bf16.mxu0 0
        %1811 = vmatpush1.bf16.msra.mxu0 0
        %1812 = vmatprep.mubr.bf16.mxu0 0
        %1813 = vmatmul.mubr.bf16.gmra.mrb[0].mxu0 %v1778
        %v1814 = vpop.f32.mrb[0].mxu0
        %v1815 = vadd.f32 0.0, %v1814
        %v1816 = vpop.f32.mrb[0].mxu0
        %v1817 = vpop.f32.mrb[0].mxu0
        %v1818 = vadd.f32 0.0, %v1817
        %v1819 = vpop.f32.mrb[0].mxu0
        %1820 = vdwg.mxu0
        %v1822 = vsel %vm1580, %v1727, 0
        %1824 = vmatprep.subr.bf16.mxu0 0
        %1825 = vmatpush1.bf16.msra.mxu0 %v1197
        %1826 = vmatprep.subr.bf16.mxu0 0
        %1827 = vmatpush1.bf16.msra.mxu0 0
        %1828 = vmatprep.subr.bf16.mxu0 0
        %1829 = vmatpush1.bf16.msra.mxu0 0
        %1830 = vmatprep.subr.bf16.mxu0 0
        %1831 = vmatpush1.bf16.msra.mxu0 0
        %1832 = vmatprep.subr.bf16.mxu0 0
        %1833 = vmatpush1.bf16.msra.mxu0 0
        %1834 = vmatprep.subr.bf16.mxu0 0
        %1835 = vmatpush1.bf16.msra.mxu0 0
        %1836 = vmatprep.subr.bf16.mxu0 0
        %1837 = vmatpush1.bf16.msra.mxu0 0
        %1838 = vmatprep.subr.bf16.mxu0 0
        %1839 = vmatpush1.bf16.msra.mxu0 0
        %1840 = vmatprep.subr.bf16.mxu0 0
        %1841 = vmatpush1.bf16.msra.mxu0 0
        %1842 = vmatprep.subr.bf16.mxu0 0
        %1843 = vmatpush1.bf16.msra.mxu0 0
        %1844 = vmatprep.subr.bf16.mxu0 0
        %1845 = vmatpush1.bf16.msra.mxu0 0
        %1846 = vmatprep.subr.bf16.mxu0 0
        %1847 = vmatpush1.bf16.msra.mxu0 0
        %1848 = vmatprep.subr.bf16.mxu0 0
        %1849 = vmatpush1.bf16.msra.mxu0 0
        %1850 = vmatprep.subr.bf16.mxu0 0
        %1851 = vmatpush1.bf16.msra.mxu0 0
        %1852 = vmatprep.subr.bf16.mxu0 0
        %1853 = vmatpush1.bf16.msra.mxu0 0
        %1854 = vmatprep.subr.bf16.mxu0 0
        %1855 = vmatpush1.bf16.msra.mxu0 0
        %1856 = vmatprep.mubr.bf16.mxu0 0
        %1857 = vmatmul.mubr.bf16.gmra.mrb[0].mxu0 %v1822
        %v1858 = vpop.f32.mrb[0].mxu0
        %v1859 = vadd.f32 0.0, %v1858
        %v1860 = vpop.f32.mrb[0].mxu0
        %v1861 = vpop.f32.mrb[0].mxu0
        %v1862 = vadd.f32 0.0, %v1861
        %v1863 = vpop.f32.mrb[0].mxu0
        %1864 = vdwg.mxu0
        %v1866 = vsel %vm1580, %v1728, 0
        %1868 = vmatprep.subr.bf16.mxu0 0
        %1869 = vmatpush1.bf16.msra.mxu0 %v1198
        %1870 = vmatprep.subr.bf16.mxu0 0
        %1871 = vmatpush1.bf16.msra.mxu0 0
        %1872 = vmatprep.subr.bf16.mxu0 0
        %1873 = vmatpush1.bf16.msra.mxu0 0
        %1874 = vmatprep.subr.bf16.mxu0 0
        %1875 = vmatpush1.bf16.msra.mxu0 0
        %1876 = vmatprep.subr.bf16.mxu0 0
        %1877 = vmatpush1.bf16.msra.mxu0 0
        %1878 = vmatprep.subr.bf16.mxu0 0
        %1879 = vmatpush1.bf16.msra.mxu0 0
        %1880 = vmatprep.subr.bf16.mxu0 0
        %1881 = vmatpush1.bf16.msra.mxu0 0
        %1882 = vmatprep.subr.bf16.mxu0 0
        %1883 = vmatpush1.bf16.msra.mxu0 0
        %1884 = vmatprep.subr.bf16.mxu0 0
        %1885 = vmatpush1.bf16.msra.mxu0 0
        %1886 = vmatprep.subr.bf16.mxu0 0
        %1887 = vmatpush1.bf16.msra.mxu0 0
        %1888 = vmatprep.subr.bf16.mxu0 0
        %1889 = vmatpush1.bf16.msra.mxu0 0
        %1890 = vmatprep.subr.bf16.mxu0 0
        %1891 = vmatpush1.bf16.msra.mxu0 0
        %1892 = vmatprep.subr.bf16.mxu0 0
        %1893 = vmatpush1.bf16.msra.mxu0 0
        %1894 = vmatprep.subr.bf16.mxu0 0
        %1895 = vmatpush1.bf16.msra.mxu0 0
        %1896 = vmatprep.subr.bf16.mxu0 0
        %1897 = vmatpush1.bf16.msra.mxu0 0
        %1898 = vmatprep.subr.bf16.mxu0 0
        %1899 = vmatpush1.bf16.msra.mxu0 0
        %1900 = vmatprep.mubr.bf16.mxu0 0
        %1901 = vmatmul.mubr.bf16.gmra.mrb[0].mxu0 %v1866
        %v1902 = vpop.f32.mrb[0].mxu0
        %v1903 = vadd.f32 0.0, %v1902
        %v1904 = vpop.f32.mrb[0].mxu0
        %v1905 = vpop.f32.mrb[0].mxu0
        %v1906 = vadd.f32 0.0, %v1905
        %v1907 = vpop.f32.mrb[0].mxu0
        %1908 = vdwg.mxu0
        %v1910 = vsel %vm1580, %v1729, 0
        %1912 = vmatprep.subr.bf16.mxu0 0
        %1913 = vmatpush1.bf16.msra.mxu0 %v1199
        %1914 = vmatprep.subr.bf16.mxu0 0
        %1915 = vmatpush1.bf16.msra.mxu0 0
        %1916 = vmatprep.subr.bf16.mxu0 0
        %1917 = vmatpush1.bf16.msra.mxu0 0
        %1918 = vmatprep.subr.bf16.mxu0 0
        %1919 = vmatpush1.bf16.msra.mxu0 0
        %1920 = vmatprep.subr.bf16.mxu0 0
        %1921 = vmatpush1.bf16.msra.mxu0 0
        %1922 = vmatprep.subr.bf16.mxu0 0
        %1923 = vmatpush1.bf16.msra.mxu0 0
        %1924 = vmatprep.subr.bf16.mxu0 0
        %1925 = vmatpush1.bf16.msra.mxu0 0
        %1926 = vmatprep.subr.bf16.mxu0 0
        %1927 = vmatpush1.bf16.msra.mxu0 0
        %1928 = vmatprep.subr.bf16.mxu0 0
        %1929 = vmatpush1.bf16.msra.mxu0 0
        %1930 = vmatprep.subr.bf16.mxu0 0
        %1931 = vmatpush1.bf16.msra.mxu0 0
        %1932 = vmatprep.subr.bf16.mxu0 0
        %1933 = vmatpush1.bf16.msra.mxu0 0
        %1934 = vmatprep.subr.bf16.mxu0 0
        %1935 = vmatpush1.bf16.msra.mxu0 0
        %1936 = vmatprep.subr.bf16.mxu0 0
        %1937 = vmatpush1.bf16.msra.mxu0 0
        %1938 = vmatprep.subr.bf16.mxu0 0
        %1939 = vmatpush1.bf16.msra.mxu0 0
        %1940 = vmatprep.subr.bf16.mxu0 0
        %1941 = vmatpush1.bf16.msra.mxu0 0
        %1942 = vmatprep.subr.bf16.mxu0 0
        %1943 = vmatpush1.bf16.msra.mxu0 0
        %1944 = vmatprep.mubr.bf16.mxu0 0
        %1945 = vmatmul.mubr.bf16.gmra.mrb[0].mxu0 %v1910
        %v1946 = vpop.f32.mrb[0].mxu0
        %v1947 = vadd.f32 0.0, %v1946
        %v1948 = vpop.f32.mrb[0].mxu0
        %v1949 = vpop.f32.mrb[0].mxu0
        %v1950 = vadd.f32 0.0, %v1949
        %v1951 = vpop.f32.mrb[0].mxu0
        %1952 = vdwg.mxu0
        %v1954 = vsel %vm1580, %v1730, 0
        %1956 = vmatprep.subr.bf16.mxu0 0
        %1957 = vmatpush1.bf16.msra.mxu0 %v1200
        %1958 = vmatprep.subr.bf16.mxu0 0
        %1959 = vmatpush1.bf16.msra.mxu0 0
        %1960 = vmatprep.subr.bf16.mxu0 0
        %1961 = vmatpush1.bf16.msra.mxu0 0
        %1962 = vmatprep.subr.bf16.mxu0 0
        %1963 = vmatpush1.bf16.msra.mxu0 0
        %1964 = vmatprep.subr.bf16.mxu0 0
        %1965 = vmatpush1.bf16.msra.mxu0 0
        %1966 = vmatprep.subr.bf16.mxu0 0
        %1967 = vmatpush1.bf16.msra.mxu0 0
        %1968 = vmatprep.subr.bf16.mxu0 0
        %1969 = vmatpush1.bf16.msra.mxu0 0
        %1970 = vmatprep.subr.bf16.mxu0 0
        %1971 = vmatpush1.bf16.msra.mxu0 0
        %1972 = vmatprep.subr.bf16.mxu0 0
        %1973 = vmatpush1.bf16.msra.mxu0 0
        %1974 = vmatprep.subr.bf16.mxu0 0
        %1975 = vmatpush1.bf16.msra.mxu0 0
        %1976 = vmatprep.subr.bf16.mxu0 0
        %1977 = vmatpush1.bf16.msra.mxu0 0
        %1978 = vmatprep.subr.bf16.mxu0 0
        %1979 = vmatpush1.bf16.msra.mxu0 0
        %1980 = vmatprep.subr.bf16.mxu0 0
        %1981 = vmatpush1.bf16.msra.mxu0 0
        %1982 = vmatprep.subr.bf16.mxu0 0
        %1983 = vmatpush1.bf16.msra.mxu0 0
        %1984 = vmatprep.subr.bf16.mxu0 0
        %1985 = vmatpush1.bf16.msra.mxu0 0
        %1986 = vmatprep.subr.bf16.mxu0 0
        %1987 = vmatpush1.bf16.msra.mxu0 0
        %1988 = vmatprep.mubr.bf16.mxu0 0
        %1989 = vmatmul.mubr.bf16.gmra.mrb[0].mxu0 %v1954
        %v1990 = vpop.f32.mrb[0].mxu0
        %v1991 = vadd.f32 0.0, %v1990
        %v1992 = vpop.f32.mrb[0].mxu0
        %v1993 = vpop.f32.mrb[0].mxu0
        %v1994 = vadd.f32 0.0, %v1993
        %v1995 = vpop.f32.mrb[0].mxu0
        %1996 = vdwg.mxu0
        %v1998 = vsel %vm1580, %v1731, 0
        %2000 = vmatprep.subr.bf16.mxu0 0
        %2001 = vmatpush1.bf16.msra.mxu0 %v1201
        %2002 = vmatprep.subr.bf16.mxu0 0
        %2003 = vmatpush1.bf16.msra.mxu0 0
        %2004 = vmatprep.subr.bf16.mxu0 0
        %2005 = vmatpush1.bf16.msra.mxu0 0
        %2006 = vmatprep.subr.bf16.mxu0 0
        %2007 = vmatpush1.bf16.msra.mxu0 0
        %2008 = vmatprep.subr.bf16.mxu0 0
        %2009 = vmatpush1.bf16.msra.mxu0 0
        %2010 = vmatprep.subr.bf16.mxu0 0
        %2011 = vmatpush1.bf16.msra.mxu0 0
        %2012 = vmatprep.subr.bf16.mxu0 0
        %2013 = vmatpush1.bf16.msra.mxu0 0
        %2014 = vmatprep.subr.bf16.mxu0 0
        %2015 = vmatpush1.bf16.msra.mxu0 0
        %2016 = vmatprep.subr.bf16.mxu0 0
        %2017 = vmatpush1.bf16.msra.mxu0 0
        %2018 = vmatprep.subr.bf16.mxu0 0
        %2019 = vmatpush1.bf16.msra.mxu0 0
        %2020 = vmatprep.subr.bf16.mxu0 0
        %2021 = vmatpush1.bf16.msra.mxu0 0
        %2022 = vmatprep.subr.bf16.mxu0 0
        %2023 = vmatpush1.bf16.msra.mxu0 0
        %2024 = vmatprep.subr.bf16.mxu0 0
        %2025 = vmatpush1.bf16.msra.mxu0 0
        %2026 = vmatprep.subr.bf16.mxu0 0
        %2027 = vmatpush1.bf16.msra.mxu0 0
        %2028 = vmatprep.subr.bf16.mxu0 0
        %2029 = vmatpush1.bf16.msra.mxu0 0
        %2030 = vmatprep.subr.bf16.mxu0 0
        %2031 = vmatpush1.bf16.msra.mxu0 0
        %2032 = vmatprep.mubr.bf16.mxu0 0
        %2033 = vmatmul.mubr.bf16.gmra.mrb[0].mxu0 %v1998
        %v2034 = vpop.f32.mrb[0].mxu0
        %v2035 = vadd.f32 0.0, %v2034
        %v2036 = vpop.f32.mrb[0].mxu0
        %v2037 = vpop.f32.mrb[0].mxu0
        %v2038 = vadd.f32 0.0, %v2037
        %v2039 = vpop.f32.mrb[0].mxu0
        %2040 = vdwg.mxu0
        %v2042 = vsel %vm1580, %v1732, 0
        %2044 = vmatprep.subr.bf16.mxu0 0
        %2045 = vmatpush1.bf16.msra.mxu0 %v1202
        %2046 = vmatprep.subr.bf16.mxu0 0
        %2047 = vmatpush1.bf16.msra.mxu0 0
        %2048 = vmatprep.subr.bf16.mxu0 0
        %2049 = vmatpush1.bf16.msra.mxu0 0
        %2050 = vmatprep.subr.bf16.mxu0 0
        %2051 = vmatpush1.bf16.msra.mxu0 0
        %2052 = vmatprep.subr.bf16.mxu0 0
        %2053 = vmatpush1.bf16.msra.mxu0 0
        %2054 = vmatprep.subr.bf16.mxu0 0
        %2055 = vmatpush1.bf16.msra.mxu0 0
        %2056 = vmatprep.subr.bf16.mxu0 0
        %2057 = vmatpush1.bf16.msra.mxu0 0
        %2058 = vmatprep.subr.bf16.mxu0 0
        %2059 = vmatpush1.bf16.msra.mxu0 0
        %2060 = vmatprep.subr.bf16.mxu0 0
        %2061 = vmatpush1.bf16.msra.mxu0 0
        %2062 = vmatprep.subr.bf16.mxu0 0
        %2063 = vmatpush1.bf16.msra.mxu0 0
        %2064 = vmatprep.subr.bf16.mxu0 0
        %2065 = vmatpush1.bf16.msra.mxu0 0
        %2066 = vmatprep.subr.bf16.mxu0 0
        %2067 = vmatpush1.bf16.msra.mxu0 0
        %2068 = vmatprep.subr.bf16.mxu0 0
        %2069 = vmatpush1.bf16.msra.mxu0 0
        %2070 = vmatprep.subr.bf16.mxu0 0
        %2071 = vmatpush1.bf16.msra.mxu0 0
        %2072 = vmatprep.subr.bf16.mxu0 0
        %2073 = vmatpush1.bf16.msra.mxu0 0
        %2074 = vmatprep.subr.bf16.mxu0 0
        %2075 = vmatpush1.bf16.msra.mxu0 0
        %2076 = vmatprep.mubr.bf16.mxu0 0
        %2077 = vmatmul.mubr.bf16.gmra.mrb[0].mxu0 %v2042
        %v2078 = vpop.f32.mrb[0].mxu0
        %v2079 = vadd.f32 0.0, %v2078
        %v2080 = vpop.f32.mrb[0].mxu0
        %v2081 = vpop.f32.mrb[0].mxu0
        %v2082 = vadd.f32 0.0, %v2081
        %v2083 = vpop.f32.mrb[0].mxu0
        %2084 = vdwg.mxu0
        %v2085 = vrcp.pop %v1679
        %v2086 = vrcp.pop %v1682
        %v2087 = vrcp.pop %v1685
        %v2088 = vrcp.pop %v1688
        %v2089 = vrcp.pop %v1691
        %v2090 = vrcp.pop %v1694
        %v2091 = vrcp.pop %v1697
        %v2092 = vrcp.pop %v1700
        %v2093 = vrcp.pop %v1703
        %v2094 = vrcp.pop %v1706
        %v2095 = vrcp.pop %v1709
        %v2096 = vrcp.pop %v1712
        %v2097 = vrcp.pop %v1715
        %v2098 = vrcp.pop %v1718
        %v2099 = vrcp.pop %v1721
        %v2100 = vrcp.pop %v1724
        %v2101 = vmul.f32 %v1771, %v2085
        %v2102 = vmul.f32 %v1774, %v2086
        %v2103 = vmul.f32 %v1815, %v2087
        %v2104 = vmul.f32 %v1818, %v2088
        %v2105 = vmul.f32 %v1859, %v2089
        %v2106 = vmul.f32 %v1862, %v2090
        %v2107 = vmul.f32 %v1903, %v2091
        %v2108 = vmul.f32 %v1906, %v2092
        %v2109 = vmul.f32 %v1947, %v2093
        %v2110 = vmul.f32 %v1950, %v2094
        %v2111 = vmul.f32 %v1991, %v2095
        %v2112 = vmul.f32 %v1994, %v2096
        %v2113 = vmul.f32 %v2035, %v2097
        %v2114 = vmul.f32 %v2038, %v2098
        %v2115 = vmul.f32 %v2079, %v2099
        %v2116 = vmul.f32 %v2082, %v2100
        %v2117 = vpack.c.bf16 %v2102, %v2101
        %v2118 = vpack.c.bf16 %v2104, %v2103
        %v2119 = vpack.c.bf16 %v2106, %v2105
        %v2120 = vpack.c.bf16 %v2108, %v2107
        %v2121 = vpack.c.bf16 %v2110, %v2109
        %v2122 = vpack.c.bf16 %v2112, %v2111
        %v2123 = vpack.c.bf16 %v2114, %v2113
        %v2124 = vpack.c.bf16 %v2116, %v2115
        %2126 = vrot.lane.b32.xlu0 %v1179, 96
        %v2127 = vpop.permute.xlu0 %2126
        %2129 = vrot.lane.b32.xlu0 %v1187, 96
        %v2130 = vpop.permute.xlu0 %2129
        %v2132 = vsel %vm1203, %v2127, 0
        %v2135 = vsel %vm1203, %v2130, 0
        %2137 = vmatprep.subr.bf16.mxu0 0
        %2138 = vmatpush1.bf16.xpose.msra.mxu0 %v2135
        %2139 = vmatprep.subr.bf16.mxu0 0
        %2140 = vmatpush1.bf16.xpose.msra.mxu0 0
        %2141 = vmatprep.subr.bf16.mxu0 0
        %2142 = vmatpush1.bf16.xpose.msra.mxu0 0
        %2143 = vmatprep.subr.bf16.mxu0 0
        %2144 = vmatpush1.bf16.xpose.msra.mxu0 0
        %2145 = vmatprep.subr.bf16.mxu0 0
        %2146 = vmatpush1.bf16.xpose.msra.mxu0 0
        %2147 = vmatprep.subr.bf16.mxu0 0
        %2148 = vmatpush1.bf16.xpose.msra.mxu0 0
        %2149 = vmatprep.subr.bf16.mxu0 0
        %2150 = vmatpush1.bf16.xpose.msra.mxu0 0
        %2151 = vmatprep.subr.bf16.mxu0 0
        %2152 = vmatpush1.bf16.xpose.msra.mxu0 0
        %2153 = vmatprep.subr.bf16.mxu0 0
        %2154 = vmatpush1.bf16.xpose.msra.mxu0 0
        %2155 = vmatprep.subr.bf16.mxu0 0
        %2156 = vmatpush1.bf16.xpose.msra.mxu0 0
        %2157 = vmatprep.subr.bf16.mxu0 0
        %2158 = vmatpush1.bf16.xpose.msra.mxu0 0
        %2159 = vmatprep.subr.bf16.mxu0 0
        %2160 = vmatpush1.bf16.xpose.msra.mxu0 0
        %2161 = vmatprep.subr.bf16.mxu0 0
        %2162 = vmatpush1.bf16.xpose.msra.mxu0 0
        %2163 = vmatprep.subr.bf16.mxu0 0
        %2164 = vmatpush1.bf16.xpose.msra.mxu0 0
        %2165 = vmatprep.subr.bf16.mxu0 0
        %2166 = vmatpush1.bf16.xpose.msra.mxu0 0
        %2167 = vmatprep.subr.bf16.mxu0 0
        %2168 = vmatpush1.bf16.xpose.msra.mxu0 0
        %2169 = vmatprep.mubr.bf16.mxu0 0
        %2170 = vmatmul.mubr.bf16.gmra.mrb[0].mxu0 %v2132
        %v2171 = vpop.f32.mrb[0].mxu0
        %v2172 = vadd.f32 0.0, %v2171
        %v2173 = vpop.f32.mrb[0].mxu0
        %v2174 = vpop.f32.mrb[0].mxu0
        %v2175 = vadd.f32 0.0, %v2174
        %v2176 = vpop.f32.mrb[0].mxu0
        %2177 = vdwg.mxu0
        %2179 = vrot.lane.b32.xlu0 %v1180, 96
        %v2180 = vpop.permute.xlu0 %2179
        %2182 = vrot.lane.b32.xlu0 %v1188, 96
        %v2183 = vpop.permute.xlu0 %2182
        %v2185 = vsel %vm1203, %v2180, 0
        %v2188 = vsel %vm1203, %v2183, 0
        %2190 = vmatprep.subr.bf16.mxu0 0
        %2191 = vmatpush1.bf16.xpose.msra.mxu0 %v2188
        %2192 = vmatprep.subr.bf16.mxu0 0
        %2193 = vmatpush1.bf16.xpose.msra.mxu0 0
        %2194 = vmatprep.subr.bf16.mxu0 0
        %2195 = vmatpush1.bf16.xpose.msra.mxu0 0
        %2196 = vmatprep.subr.bf16.mxu0 0
        %2197 = vmatpush1.bf16.xpose.msra.mxu0 0
        %2198 = vmatprep.subr.bf16.mxu0 0
        %2199 = vmatpush1.bf16.xpose.msra.mxu0 0
        %2200 = vmatprep.subr.bf16.mxu0 0
        %2201 = vmatpush1.bf16.xpose.msra.mxu0 0
        %2202 = vmatprep.subr.bf16.mxu0 0
        %2203 = vmatpush1.bf16.xpose.msra.mxu0 0
        %2204 = vmatprep.subr.bf16.mxu0 0
        %2205 = vmatpush1.bf16.xpose.msra.mxu0 0
        %2206 = vmatprep.subr.bf16.mxu0 0
        %2207 = vmatpush1.bf16.xpose.msra.mxu0 0
        %2208 = vmatprep.subr.bf16.mxu0 0
        %2209 = vmatpush1.bf16.xpose.msra.mxu0 0
        %2210 = vmatprep.subr.bf16.mxu0 0
        %2211 = vmatpush1.bf16.xpose.msra.mxu0 0
        %2212 = vmatprep.subr.bf16.mxu0 0
        %2213 = vmatpush1.bf16.xpose.msra.mxu0 0
        %2214 = vmatprep.subr.bf16.mxu0 0
        %2215 = vmatpush1.bf16.xpose.msra.mxu0 0
        %2216 = vmatprep.subr.bf16.mxu0 0
        %2217 = vmatpush1.bf16.xpose.msra.mxu0 0
        %2218 = vmatprep.subr.bf16.mxu0 0
        %2219 = vmatpush1.bf16.xpose.msra.mxu0 0
        %2220 = vmatprep.subr.bf16.mxu0 0
        %2221 = vmatpush1.bf16.xpose.msra.mxu0 0
        %2222 = vmatprep.mubr.bf16.mxu0 0
        %2223 = vmatmul.mubr.bf16.gmra.mrb[0].mxu0 %v2185
        %v2224 = vpop.f32.mrb[0].mxu0
        %v2225 = vadd.f32 0.0, %v2224
        %v2226 = vpop.f32.mrb[0].mxu0
        %v2227 = vpop.f32.mrb[0].mxu0
        %v2228 = vadd.f32 0.0, %v2227
        %v2229 = vpop.f32.mrb[0].mxu0
        %2230 = vdwg.mxu0
        %2232 = vrot.lane.b32.xlu0 %v1181, 96
        %v2233 = vpop.permute.xlu0 %2232
        %2235 = vrot.lane.b32.xlu0 %v1189, 96
        %v2236 = vpop.permute.xlu0 %2235
        %v2238 = vsel %vm1203, %v2233, 0
        %v2241 = vsel %vm1203, %v2236, 0
        %2243 = vmatprep.subr.bf16.mxu0 0
        %2244 = vmatpush1.bf16.xpose.msra.mxu0 %v2241
        %2245 = vmatprep.subr.bf16.mxu0 0
        %2246 = vmatpush1.bf16.xpose.msra.mxu0 0
        %2247 = vmatprep.subr.bf16.mxu0 0
        %2248 = vmatpush1.bf16.xpose.msra.mxu0 0
        %2249 = vmatprep.subr.bf16.mxu0 0
        %2250 = vmatpush1.bf16.xpose.msra.mxu0 0
        %2251 = vmatprep.subr.bf16.mxu0 0
        %2252 = vmatpush1.bf16.xpose.msra.mxu0 0
        %2253 = vmatprep.subr.bf16.mxu0 0
        %2254 = vmatpush1.bf16.xpose.msra.mxu0 0
        %2255 = vmatprep.subr.bf16.mxu0 0
        %2256 = vmatpush1.bf16.xpose.msra.mxu0 0
        %2257 = vmatprep.subr.bf16.mxu0 0
        %2258 = vmatpush1.bf16.xpose.msra.mxu0 0
        %2259 = vmatprep.subr.bf16.mxu0 0
        %2260 = vmatpush1.bf16.xpose.msra.mxu0 0
        %2261 = vmatprep.subr.bf16.mxu0 0
        %2262 = vmatpush1.bf16.xpose.msra.mxu0 0
        %2263 = vmatprep.subr.bf16.mxu0 0
        %2264 = vmatpush1.bf16.xpose.msra.mxu0 0
        %2265 = vmatprep.subr.bf16.mxu0 0
        %2266 = vmatpush1.bf16.xpose.msra.mxu0 0
        %2267 = vmatprep.subr.bf16.mxu0 0
        %2268 = vmatpush1.bf16.xpose.msra.mxu0 0
        %2269 = vmatprep.subr.bf16.mxu0 0
        %2270 = vmatpush1.bf16.xpose.msra.mxu0 0
        %2271 = vmatprep.subr.bf16.mxu0 0
        %2272 = vmatpush1.bf16.xpose.msra.mxu0 0
        %2273 = vmatprep.subr.bf16.mxu0 0
        %2274 = vmatpush1.bf16.xpose.msra.mxu0 0
        %2275 = vmatprep.mubr.bf16.mxu0 0
        %2276 = vmatmul.mubr.bf16.gmra.mrb[0].mxu0 %v2238
        %v2277 = vpop.f32.mrb[0].mxu0
        %v2278 = vadd.f32 0.0, %v2277
        %v2279 = vpop.f32.mrb[0].mxu0
        %v2280 = vpop.f32.mrb[0].mxu0
        %v2281 = vadd.f32 0.0, %v2280
        %v2282 = vpop.f32.mrb[0].mxu0
        %2283 = vdwg.mxu0
        %2285 = vrot.lane.b32.xlu0 %v1182, 96
        %v2286 = vpop.permute.xlu0 %2285
        %2288 = vrot.lane.b32.xlu0 %v1190, 96
        %v2289 = vpop.permute.xlu0 %2288
        %v2291 = vsel %vm1203, %v2286, 0
        %v2294 = vsel %vm1203, %v2289, 0
        %2296 = vmatprep.subr.bf16.mxu0 0
        %2297 = vmatpush1.bf16.xpose.msra.mxu0 %v2294
        %2298 = vmatprep.subr.bf16.mxu0 0
        %2299 = vmatpush1.bf16.xpose.msra.mxu0 0
        %2300 = vmatprep.subr.bf16.mxu0 0
        %2301 = vmatpush1.bf16.xpose.msra.mxu0 0
        %2302 = vmatprep.subr.bf16.mxu0 0
        %2303 = vmatpush1.bf16.xpose.msra.mxu0 0
        %2304 = vmatprep.subr.bf16.mxu0 0
        %2305 = vmatpush1.bf16.xpose.msra.mxu0 0
        %2306 = vmatprep.subr.bf16.mxu0 0
        %2307 = vmatpush1.bf16.xpose.msra.mxu0 0
        %2308 = vmatprep.subr.bf16.mxu0 0
        %2309 = vmatpush1.bf16.xpose.msra.mxu0 0
        %2310 = vmatprep.subr.bf16.mxu0 0
        %2311 = vmatpush1.bf16.xpose.msra.mxu0 0
        %2312 = vmatprep.subr.bf16.mxu0 0
        %2313 = vmatpush1.bf16.xpose.msra.mxu0 0
        %2314 = vmatprep.subr.bf16.mxu0 0
        %2315 = vmatpush1.bf16.xpose.msra.mxu0 0
        %2316 = vmatprep.subr.bf16.mxu0 0
        %2317 = vmatpush1.bf16.xpose.msra.mxu0 0
        %2318 = vmatprep.subr.bf16.mxu0 0
        %2319 = vmatpush1.bf16.xpose.msra.mxu0 0
        %2320 = vmatprep.subr.bf16.mxu0 0
        %2321 = vmatpush1.bf16.xpose.msra.mxu0 0
        %2322 = vmatprep.subr.bf16.mxu0 0
        %2323 = vmatpush1.bf16.xpose.msra.mxu0 0
        %2324 = vmatprep.subr.bf16.mxu0 0
        %2325 = vmatpush1.bf16.xpose.msra.mxu0 0
        %2326 = vmatprep.subr.bf16.mxu0 0
        %2327 = vmatpush1.bf16.xpose.msra.mxu0 0
        %2328 = vmatprep.mubr.bf16.mxu0 0
        %2329 = vmatmul.mubr.bf16.gmra.mrb[0].mxu0 %v2291
        %v2330 = vpop.f32.mrb[0].mxu0
        %v2331 = vadd.f32 0.0, %v2330
        %v2332 = vpop.f32.mrb[0].mxu0
        %v2333 = vpop.f32.mrb[0].mxu0
        %v2334 = vadd.f32 0.0, %v2333
        %v2335 = vpop.f32.mrb[0].mxu0
        %2336 = vdwg.mxu0
        %2338 = vrot.lane.b32.xlu0 %v1183, 96
        %v2339 = vpop.permute.xlu0 %2338
        %2341 = vrot.lane.b32.xlu0 %v1191, 96
        %v2342 = vpop.permute.xlu0 %2341
        %v2344 = vsel %vm1203, %v2339, 0
        %v2347 = vsel %vm1203, %v2342, 0
        %2349 = vmatprep.subr.bf16.mxu0 0
        %2350 = vmatpush1.bf16.xpose.msra.mxu0 %v2347
        %2351 = vmatprep.subr.bf16.mxu0 0
        %2352 = vmatpush1.bf16.xpose.msra.mxu0 0
        %2353 = vmatprep.subr.bf16.mxu0 0
        %2354 = vmatpush1.bf16.xpose.msra.mxu0 0
        %2355 = vmatprep.subr.bf16.mxu0 0
        %2356 = vmatpush1.bf16.xpose.msra.mxu0 0
        %2357 = vmatprep.subr.bf16.mxu0 0
        %2358 = vmatpush1.bf16.xpose.msra.mxu0 0
        %2359 = vmatprep.subr.bf16.mxu0 0
        %2360 = vmatpush1.bf16.xpose.msra.mxu0 0
        %2361 = vmatprep.subr.bf16.mxu0 0
        %2362 = vmatpush1.bf16.xpose.msra.mxu0 0
        %2363 = vmatprep.subr.bf16.mxu0 0
        %2364 = vmatpush1.bf16.xpose.msra.mxu0 0
        %2365 = vmatprep.subr.bf16.mxu0 0
        %2366 = vmatpush1.bf16.xpose.msra.mxu0 0
        %2367 = vmatprep.subr.bf16.mxu0 0
        %2368 = vmatpush1.bf16.xpose.msra.mxu0 0
        %2369 = vmatprep.subr.bf16.mxu0 0
        %2370 = vmatpush1.bf16.xpose.msra.mxu0 0
        %2371 = vmatprep.subr.bf16.mxu0 0
        %2372 = vmatpush1.bf16.xpose.msra.mxu0 0
        %2373 = vmatprep.subr.bf16.mxu0 0
        %2374 = vmatpush1.bf16.xpose.msra.mxu0 0
        %2375 = vmatprep.subr.bf16.mxu0 0
        %2376 = vmatpush1.bf16.xpose.msra.mxu0 0
        %2377 = vmatprep.subr.bf16.mxu0 0
        %2378 = vmatpush1.bf16.xpose.msra.mxu0 0
        %2379 = vmatprep.subr.bf16.mxu0 0
        %2380 = vmatpush1.bf16.xpose.msra.mxu0 0
        %2381 = vmatprep.mubr.bf16.mxu0 0
        %2382 = vmatmul.mubr.bf16.gmra.mrb[0].mxu0 %v2344
        %v2383 = vpop.f32.mrb[0].mxu0
        %v2384 = vadd.f32 0.0, %v2383
        %v2385 = vpop.f32.mrb[0].mxu0
        %v2386 = vpop.f32.mrb[0].mxu0
        %v2387 = vadd.f32 0.0, %v2386
        %v2388 = vpop.f32.mrb[0].mxu0
        %2389 = vdwg.mxu0
        %2391 = vrot.lane.b32.xlu0 %v1184, 96
        %v2392 = vpop.permute.xlu0 %2391
        %2394 = vrot.lane.b32.xlu0 %v1192, 96
        %v2395 = vpop.permute.xlu0 %2394
        %v2397 = vsel %vm1203, %v2392, 0
        %v2400 = vsel %vm1203, %v2395, 0
        %2402 = vmatprep.subr.bf16.mxu0 0
        %2403 = vmatpush1.bf16.xpose.msra.mxu0 %v2400
        %2404 = vmatprep.subr.bf16.mxu0 0
        %2405 = vmatpush1.bf16.xpose.msra.mxu0 0
        %2406 = vmatprep.subr.bf16.mxu0 0
        %2407 = vmatpush1.bf16.xpose.msra.mxu0 0
        %2408 = vmatprep.subr.bf16.mxu0 0
        %2409 = vmatpush1.bf16.xpose.msra.mxu0 0
        %2410 = vmatprep.subr.bf16.mxu0 0
        %2411 = vmatpush1.bf16.xpose.msra.mxu0 0
        %2412 = vmatprep.subr.bf16.mxu0 0
        %2413 = vmatpush1.bf16.xpose.msra.mxu0 0
        %2414 = vmatprep.subr.bf16.mxu0 0
        %2415 = vmatpush1.bf16.xpose.msra.mxu0 0
        %2416 = vmatprep.subr.bf16.mxu0 0
        %2417 = vmatpush1.bf16.xpose.msra.mxu0 0
        %2418 = vmatprep.subr.bf16.mxu0 0
        %2419 = vmatpush1.bf16.xpose.msra.mxu0 0
        %2420 = vmatprep.subr.bf16.mxu0 0
        %2421 = vmatpush1.bf16.xpose.msra.mxu0 0
        %2422 = vmatprep.subr.bf16.mxu0 0
        %2423 = vmatpush1.bf16.xpose.msra.mxu0 0
        %2424 = vmatprep.subr.bf16.mxu0 0
        %2425 = vmatpush1.bf16.xpose.msra.mxu0 0
        %2426 = vmatprep.subr.bf16.mxu0 0
        %2427 = vmatpush1.bf16.xpose.msra.mxu0 0
        %2428 = vmatprep.subr.bf16.mxu0 0
        %2429 = vmatpush1.bf16.xpose.msra.mxu0 0
        %2430 = vmatprep.subr.bf16.mxu0 0
        %2431 = vmatpush1.bf16.xpose.msra.mxu0 0
        %2432 = vmatprep.subr.bf16.mxu0 0
        %2433 = vmatpush1.bf16.xpose.msra.mxu0 0
        %2434 = vmatprep.mubr.bf16.mxu0 0
        %2435 = vmatmul.mubr.bf16.gmra.mrb[0].mxu0 %v2397
        %v2436 = vpop.f32.mrb[0].mxu0
        %v2437 = vadd.f32 0.0, %v2436
        %v2438 = vpop.f32.mrb[0].mxu0
        %v2439 = vpop.f32.mrb[0].mxu0
        %v2440 = vadd.f32 0.0, %v2439
        %v2441 = vpop.f32.mrb[0].mxu0
        %2442 = vdwg.mxu0
        %2444 = vrot.lane.b32.xlu0 %v1185, 96
        %v2445 = vpop.permute.xlu0 %2444
        %2447 = vrot.lane.b32.xlu0 %v1193, 96
        %v2448 = vpop.permute.xlu0 %2447
        %v2450 = vsel %vm1203, %v2445, 0
        %v2453 = vsel %vm1203, %v2448, 0
        %2455 = vmatprep.subr.bf16.mxu0 0
        %2456 = vmatpush1.bf16.xpose.msra.mxu0 %v2453
        %2457 = vmatprep.subr.bf16.mxu0 0
        %2458 = vmatpush1.bf16.xpose.msra.mxu0 0
        %2459 = vmatprep.subr.bf16.mxu0 0
        %2460 = vmatpush1.bf16.xpose.msra.mxu0 0
        %2461 = vmatprep.subr.bf16.mxu0 0
        %2462 = vmatpush1.bf16.xpose.msra.mxu0 0
        %2463 = vmatprep.subr.bf16.mxu0 0
        %2464 = vmatpush1.bf16.xpose.msra.mxu0 0
        %2465 = vmatprep.subr.bf16.mxu0 0
        %2466 = vmatpush1.bf16.xpose.msra.mxu0 0
        %2467 = vmatprep.subr.bf16.mxu0 0
        %2468 = vmatpush1.bf16.xpose.msra.mxu0 0
        %2469 = vmatprep.subr.bf16.mxu0 0
        %2470 = vmatpush1.bf16.xpose.msra.mxu0 0
        %2471 = vmatprep.subr.bf16.mxu0 0
        %2472 = vmatpush1.bf16.xpose.msra.mxu0 0
        %2473 = vmatprep.subr.bf16.mxu0 0
        %2474 = vmatpush1.bf16.xpose.msra.mxu0 0
        %2475 = vmatprep.subr.bf16.mxu0 0
        %2476 = vmatpush1.bf16.xpose.msra.mxu0 0
        %2477 = vmatprep.subr.bf16.mxu0 0
        %2478 = vmatpush1.bf16.xpose.msra.mxu0 0
        %2479 = vmatprep.subr.bf16.mxu0 0
        %2480 = vmatpush1.bf16.xpose.msra.mxu0 0
        %2481 = vmatprep.subr.bf16.mxu0 0
        %2482 = vmatpush1.bf16.xpose.msra.mxu0 0
        %2483 = vmatprep.subr.bf16.mxu0 0
        %2484 = vmatpush1.bf16.xpose.msra.mxu0 0
        %2485 = vmatprep.subr.bf16.mxu0 0
        %2486 = vmatpush1.bf16.xpose.msra.mxu0 0
        %2487 = vmatprep.mubr.bf16.mxu0 0
        %2488 = vmatmul.mubr.bf16.gmra.mrb[0].mxu0 %v2450
        %v2489 = vpop.f32.mrb[0].mxu0
        %v2490 = vadd.f32 0.0, %v2489
        %v2491 = vpop.f32.mrb[0].mxu0
        %v2492 = vpop.f32.mrb[0].mxu0
        %v2493 = vadd.f32 0.0, %v2492
        %v2494 = vpop.f32.mrb[0].mxu0
        %2495 = vdwg.mxu0
        %2497 = vrot.lane.b32.xlu0 %v1186, 96
        %v2498 = vpop.permute.xlu0 %2497
        %2500 = vrot.lane.b32.xlu0 %v1194, 96
        %v2501 = vpop.permute.xlu0 %2500
        %v2503 = vsel %vm1203, %v2498, 0
        %v2506 = vsel %vm1203, %v2501, 0
        %2508 = vmatprep.subr.bf16.mxu0 0
        %2509 = vmatpush1.bf16.xpose.msra.mxu0 %v2506
        %2510 = vmatprep.subr.bf16.mxu0 0
        %2511 = vmatpush1.bf16.xpose.msra.mxu0 0
        %2512 = vmatprep.subr.bf16.mxu0 0
        %2513 = vmatpush1.bf16.xpose.msra.mxu0 0
        %2514 = vmatprep.subr.bf16.mxu0 0
        %2515 = vmatpush1.bf16.xpose.msra.mxu0 0
        %2516 = vmatprep.subr.bf16.mxu0 0
        %2517 = vmatpush1.bf16.xpose.msra.mxu0 0
        %2518 = vmatprep.subr.bf16.mxu0 0
        %2519 = vmatpush1.bf16.xpose.msra.mxu0 0
        %2520 = vmatprep.subr.bf16.mxu0 0
        %2521 = vmatpush1.bf16.xpose.msra.mxu0 0
        %2522 = vmatprep.subr.bf16.mxu0 0
        %2523 = vmatpush1.bf16.xpose.msra.mxu0 0
        %2524 = vmatprep.subr.bf16.mxu0 0
        %2525 = vmatpush1.bf16.xpose.msra.mxu0 0
        %2526 = vmatprep.subr.bf16.mxu0 0
        %2527 = vmatpush1.bf16.xpose.msra.mxu0 0
        %2528 = vmatprep.subr.bf16.mxu0 0
        %2529 = vmatpush1.bf16.xpose.msra.mxu0 0
        %2530 = vmatprep.subr.bf16.mxu0 0
        %2531 = vmatpush1.bf16.xpose.msra.mxu0 0
        %2532 = vmatprep.subr.bf16.mxu0 0
        %2533 = vmatpush1.bf16.xpose.msra.mxu0 0
        %2534 = vmatprep.subr.bf16.mxu0 0
        %2535 = vmatpush1.bf16.xpose.msra.mxu0 0
        %2536 = vmatprep.subr.bf16.mxu0 0
        %2537 = vmatpush1.bf16.xpose.msra.mxu0 0
        %2538 = vmatprep.subr.bf16.mxu0 0
        %2539 = vmatpush1.bf16.xpose.msra.mxu0 0
        %2540 = vmatprep.mubr.bf16.mxu0 0
        %2541 = vmatmul.mubr.bf16.gmra.mrb[0].mxu0 %v2503
        %v2542 = vpop.f32.mrb[0].mxu0
        %v2543 = vadd.f32 0.0, %v2542
        %v2544 = vpop.f32.mrb[0].mxu0
        %v2545 = vpop.f32.mrb[0].mxu0
        %v2546 = vadd.f32 0.0, %v2545
        %v2547 = vpop.f32.mrb[0].mxu0
        %2548 = vdwg.mxu0
        %v2549 = vsel %vm1580, %v2172, -inf
        %2550 = vmax.xlane.f32.xlu0 %v2549
        %v2551 = vpop.xlane.xlu0 %2550
        %v2552 = vsel %vm1580, %v2175, -inf
        %2553 = vmax.xlane.f32.xlu0 %v2552
        %v2554 = vpop.xlane.xlu0 %2553
        %v2555 = vsel %vm1580, %v2225, -inf
        %2556 = vmax.xlane.f32.xlu0 %v2555
        %v2557 = vpop.xlane.xlu0 %2556
        %v2558 = vsel %vm1580, %v2228, -inf
        %2559 = vmax.xlane.f32.xlu0 %v2558
        %v2560 = vpop.xlane.xlu0 %2559
        %v2561 = vsel %vm1580, %v2278, -inf
        %2562 = vmax.xlane.f32.xlu0 %v2561
        %v2563 = vpop.xlane.xlu0 %2562
        %v2564 = vsel %vm1580, %v2281, -inf
        %2565 = vmax.xlane.f32.xlu0 %v2564
        %v2566 = vpop.xlane.xlu0 %2565
        %v2567 = vsel %vm1580, %v2331, -inf
        %2568 = vmax.xlane.f32.xlu0 %v2567
        %v2569 = vpop.xlane.xlu0 %2568
        %v2570 = vsel %vm1580, %v2334, -inf
        %2571 = vmax.xlane.f32.xlu0 %v2570
        %v2572 = vpop.xlane.xlu0 %2571
        %v2573 = vsel %vm1580, %v2384, -inf
        %2574 = vmax.xlane.f32.xlu0 %v2573
        %v2575 = vpop.xlane.xlu0 %2574
        %v2576 = vsel %vm1580, %v2387, -inf
        %2577 = vmax.xlane.f32.xlu0 %v2576
        %v2578 = vpop.xlane.xlu0 %2577
        %v2579 = vsel %vm1580, %v2437, -inf
        %2580 = vmax.xlane.f32.xlu0 %v2579
        %v2581 = vpop.xlane.xlu0 %2580
        %v2582 = vsel %vm1580, %v2440, -inf
        %2583 = vmax.xlane.f32.xlu0 %v2582
        %v2584 = vpop.xlane.xlu0 %2583
        %v2585 = vsel %vm1580, %v2490, -inf
        %2586 = vmax.xlane.f32.xlu0 %v2585
        %v2587 = vpop.xlane.xlu0 %2586
        %v2588 = vsel %vm1580, %v2493, -inf
        %2589 = vmax.xlane.f32.xlu0 %v2588
        %v2590 = vpop.xlane.xlu0 %2589
        %v2591 = vsel %vm1580, %v2543, -inf
        %2592 = vmax.xlane.f32.xlu0 %v2591
        %v2593 = vpop.xlane.xlu0 %2592
        %v2594 = vsel %vm1580, %v2546, -inf
        %2595 = vmax.xlane.f32.xlu0 %v2594
        %v2596 = vpop.xlane.xlu0 %2595
        %v2597 = vsub.f32 %v2172, %v2551
        %v2598 = vsub.f32 %v2175, %v2554
        %v2599 = vsub.f32 %v2225, %v2557
        %v2600 = vsub.f32 %v2228, %v2560
        %v2601 = vsub.f32 %v2278, %v2563
        %v2602 = vsub.f32 %v2281, %v2566
        %v2603 = vsub.f32 %v2331, %v2569
        %v2604 = vsub.f32 %v2334, %v2572
        %v2605 = vsub.f32 %v2384, %v2575
        %v2606 = vsub.f32 %v2387, %v2578
        %v2607 = vsub.f32 %v2437, %v2581
        %v2608 = vsub.f32 %v2440, %v2584
        %v2609 = vsub.f32 %v2490, %v2587
        %v2610 = vsub.f32 %v2493, %v2590
        %v2611 = vsub.f32 %v2543, %v2593
        %v2612 = vsub.f32 %v2546, %v2596
        %v2613 = vmul.f32 %v2597, 1.442695
        %v2614 = vpow.pop %v2613
        %v2615 = vmul.f32 %v2598, 1.442695
        %v2616 = vpow.pop %v2615
        %v2617 = vmul.f32 %v2599, 1.442695
        %v2618 = vpow.pop %v2617
        %v2619 = vmul.f32 %v2600, 1.442695
        %v2620 = vpow.pop %v2619
        %v2621 = vmul.f32 %v2601, 1.442695
        %v2622 = vpow.pop %v2621
        %v2623 = vmul.f32 %v2602, 1.442695
        %v2624 = vpow.pop %v2623
        %v2625 = vmul.f32 %v2603, 1.442695
        %v2626 = vpow.pop %v2625
        %v2627 = vmul.f32 %v2604, 1.442695
        %v2628 = vpow.pop %v2627
        %v2629 = vmul.f32 %v2605, 1.442695
        %v2630 = vpow.pop %v2629
        %v2631 = vmul.f32 %v2606, 1.442695
        %v2632 = vpow.pop %v2631
        %v2633 = vmul.f32 %v2607, 1.442695
        %v2634 = vpow.pop %v2633
        %v2635 = vmul.f32 %v2608, 1.442695
        %v2636 = vpow.pop %v2635
        %v2637 = vmul.f32 %v2609, 1.442695
        %v2638 = vpow.pop %v2637
        %v2639 = vmul.f32 %v2610, 1.442695
        %v2640 = vpow.pop %v2639
        %v2641 = vmul.f32 %v2611, 1.442695
        %v2642 = vpow.pop %v2641
        %v2643 = vmul.f32 %v2612, 1.442695
        %v2644 = vpow.pop %v2643
        %v2645 = vsel %vm1580, %v2614, 0.0
        %2646 = vadd.xlane.f32.xlu0 %v2645
        %v2647 = vpop.xlane.xlu0 %2646
        %v2648 = vsel %vm1580, %v2616, 0.0
        %2649 = vadd.xlane.f32.xlu0 %v2648
        %v2650 = vpop.xlane.xlu0 %2649
        %v2651 = vsel %vm1580, %v2618, 0.0
        %2652 = vadd.xlane.f32.xlu0 %v2651
        %v2653 = vpop.xlane.xlu0 %2652
        %v2654 = vsel %vm1580, %v2620, 0.0
        %2655 = vadd.xlane.f32.xlu0 %v2654
        %v2656 = vpop.xlane.xlu0 %2655
        %v2657 = vsel %vm1580, %v2622, 0.0
        %2658 = vadd.xlane.f32.xlu0 %v2657
        %v2659 = vpop.xlane.xlu0 %2658
        %v2660 = vsel %vm1580, %v2624, 0.0
        %2661 = vadd.xlane.f32.xlu0 %v2660
        %v2662 = vpop.xlane.xlu0 %2661
        %v2663 = vsel %vm1580, %v2626, 0.0
        %2664 = vadd.xlane.f32.xlu0 %v2663
        %v2665 = vpop.xlane.xlu0 %2664
        %v2666 = vsel %vm1580, %v2628, 0.0
        %2667 = vadd.xlane.f32.xlu0 %v2666
        %v2668 = vpop.xlane.xlu0 %2667
        %v2669 = vsel %vm1580, %v2630, 0.0
        %2670 = vadd.xlane.f32.xlu0 %v2669
        %v2671 = vpop.xlane.xlu0 %2670
        %v2672 = vsel %vm1580, %v2632, 0.0
        %2673 = vadd.xlane.f32.xlu0 %v2672
        %v2674 = vpop.xlane.xlu0 %2673
        %v2675 = vsel %vm1580, %v2634, 0.0
        %2676 = vadd.xlane.f32.xlu0 %v2675
        %v2677 = vpop.xlane.xlu0 %2676
        %v2678 = vsel %vm1580, %v2636, 0.0
        %2679 = vadd.xlane.f32.xlu0 %v2678
        %v2680 = vpop.xlane.xlu0 %2679
        %v2681 = vsel %vm1580, %v2638, 0.0
        %2682 = vadd.xlane.f32.xlu0 %v2681
        %v2683 = vpop.xlane.xlu0 %2682
        %v2684 = vsel %vm1580, %v2640, 0.0
        %2685 = vadd.xlane.f32.xlu0 %v2684
        %v2686 = vpop.xlane.xlu0 %2685
        %v2687 = vsel %vm1580, %v2642, 0.0
        %2688 = vadd.xlane.f32.xlu0 %v2687
        %v2689 = vpop.xlane.xlu0 %2688
        %v2690 = vsel %vm1580, %v2644, 0.0
        %2691 = vadd.xlane.f32.xlu0 %v2690
        %v2692 = vpop.xlane.xlu0 %2691
        %v2693 = vpack.c.bf16 %v2616, %v2614
        %v2694 = vpack.c.bf16 %v2620, %v2618
        %v2695 = vpack.c.bf16 %v2624, %v2622
        %v2696 = vpack.c.bf16 %v2628, %v2626
        %v2697 = vpack.c.bf16 %v2632, %v2630
        %v2698 = vpack.c.bf16 %v2636, %v2634
        %v2699 = vpack.c.bf16 %v2640, %v2638
        %v2700 = vpack.c.bf16 %v2644, %v2642
        %2702 = vrot.lane.b32.xlu0 %v1195, 96
        %v2703 = vpop.permute.xlu0 %2702
        %v2706 = vsel %vm1580, %v2693, 0
        %2708 = vmatprep.subr.bf16.mxu0 0
        %2709 = vmatpush1.bf16.msra.mxu0 %v2703
        %2710 = vmatprep.subr.bf16.mxu0 0
        %2711 = vmatpush1.bf16.msra.mxu0 0
        %2712 = vmatprep.subr.bf16.mxu0 0
        %2713 = vmatpush1.bf16.msra.mxu0 0
        %2714 = vmatprep.subr.bf16.mxu0 0
        %2715 = vmatpush1.bf16.msra.mxu0 0
        %2716 = vmatprep.subr.bf16.mxu0 0
        %2717 = vmatpush1.bf16.msra.mxu0 0
        %2718 = vmatprep.subr.bf16.mxu0 0
        %2719 = vmatpush1.bf16.msra.mxu0 0
        %2720 = vmatprep.subr.bf16.mxu0 0
        %2721 = vmatpush1.bf16.msra.mxu0 0
        %2722 = vmatprep.subr.bf16.mxu0 0
        %2723 = vmatpush1.bf16.msra.mxu0 0
        %2724 = vmatprep.subr.bf16.mxu0 0
        %2725 = vmatpush1.bf16.msra.mxu0 0
        %2726 = vmatprep.subr.bf16.mxu0 0
        %2727 = vmatpush1.bf16.msra.mxu0 0
        %2728 = vmatprep.subr.bf16.mxu0 0
        %2729 = vmatpush1.bf16.msra.mxu0 0
        %2730 = vmatprep.subr.bf16.mxu0 0
        %2731 = vmatpush1.bf16.msra.mxu0 0
        %2732 = vmatprep.subr.bf16.mxu0 0
        %2733 = vmatpush1.bf16.msra.mxu0 0
        %2734 = vmatprep.subr.bf16.mxu0 0
        %2735 = vmatpush1.bf16.msra.mxu0 0
        %2736 = vmatprep.subr.bf16.mxu0 0
        %2737 = vmatpush1.bf16.msra.mxu0 0
        %2738 = vmatprep.subr.bf16.mxu0 0
        %2739 = vmatpush1.bf16.msra.mxu0 0
        %2740 = vmatprep.mubr.bf16.mxu0 0
        %2741 = vmatmul.mubr.bf16.gmra.mrb[0].mxu0 %v2706
        %v2742 = vpop.f32.mrb[0].mxu0
        %v2743 = vadd.f32 0.0, %v2742
        %v2744 = vpop.f32.mrb[0].mxu0
        %v2745 = vpop.f32.mrb[0].mxu0
        %v2746 = vadd.f32 0.0, %v2745
        %v2747 = vpop.f32.mrb[0].mxu0
        %2748 = vdwg.mxu0
        %2750 = vrot.lane.b32.xlu0 %v1196, 96
        %v2751 = vpop.permute.xlu0 %2750
        %v2754 = vsel %vm1580, %v2694, 0
        %2756 = vmatprep.subr.bf16.mxu0 0
        %2757 = vmatpush1.bf16.msra.mxu0 %v2751
        %2758 = vmatprep.subr.bf16.mxu0 0
        %2759 = vmatpush1.bf16.msra.mxu0 0
        %2760 = vmatprep.subr.bf16.mxu0 0
        %2761 = vmatpush1.bf16.msra.mxu0 0
        %2762 = vmatprep.subr.bf16.mxu0 0
        %2763 = vmatpush1.bf16.msra.mxu0 0
        %2764 = vmatprep.subr.bf16.mxu0 0
        %2765 = vmatpush1.bf16.msra.mxu0 0
        %2766 = vmatprep.subr.bf16.mxu0 0
        %2767 = vmatpush1.bf16.msra.mxu0 0
        %2768 = vmatprep.subr.bf16.mxu0 0
        %2769 = vmatpush1.bf16.msra.mxu0 0
        %2770 = vmatprep.subr.bf16.mxu0 0
        %2771 = vmatpush1.bf16.msra.mxu0 0
        %2772 = vmatprep.subr.bf16.mxu0 0
        %2773 = vmatpush1.bf16.msra.mxu0 0
        %2774 = vmatprep.subr.bf16.mxu0 0
        %2775 = vmatpush1.bf16.msra.mxu0 0
        %2776 = vmatprep.subr.bf16.mxu0 0
        %2777 = vmatpush1.bf16.msra.mxu0 0
        %2778 = vmatprep.subr.bf16.mxu0 0
        %2779 = vmatpush1.bf16.msra.mxu0 0
        %2780 = vmatprep.subr.bf16.mxu0 0
        %2781 = vmatpush1.bf16.msra.mxu0 0
        %2782 = vmatprep.subr.bf16.mxu0 0
        %2783 = vmatpush1.bf16.msra.mxu0 0
        %2784 = vmatprep.subr.bf16.mxu0 0
        %2785 = vmatpush1.bf16.msra.mxu0 0
        %2786 = vmatprep.subr.bf16.mxu0 0
        %2787 = vmatpush1.bf16.msra.mxu0 0
        %2788 = vmatprep.mubr.bf16.mxu0 0
        %2789 = vmatmul.mubr.bf16.gmra.mrb[0].mxu0 %v2754
        %v2790 = vpop.f32.mrb[0].mxu0
        %v2791 = vadd.f32 0.0, %v2790
        %v2792 = vpop.f32.mrb[0].mxu0
        %v2793 = vpop.f32.mrb[0].mxu0
        %v2794 = vadd.f32 0.0, %v2793
        %v2795 = vpop.f32.mrb[0].mxu0
        %2796 = vdwg.mxu0
        %2798 = vrot.lane.b32.xlu0 %v1197, 96
        %v2799 = vpop.permute.xlu0 %2798
        %v2802 = vsel %vm1580, %v2695, 0
        %2804 = vmatprep.subr.bf16.mxu0 0
        %2805 = vmatpush1.bf16.msra.mxu0 %v2799
        %2806 = vmatprep.subr.bf16.mxu0 0
        %2807 = vmatpush1.bf16.msra.mxu0 0
        %2808 = vmatprep.subr.bf16.mxu0 0
        %2809 = vmatpush1.bf16.msra.mxu0 0
        %2810 = vmatprep.subr.bf16.mxu0 0
        %2811 = vmatpush1.bf16.msra.mxu0 0
        %2812 = vmatprep.subr.bf16.mxu0 0
        %2813 = vmatpush1.bf16.msra.mxu0 0
        %2814 = vmatprep.subr.bf16.mxu0 0
        %2815 = vmatpush1.bf16.msra.mxu0 0
        %2816 = vmatprep.subr.bf16.mxu0 0
        %2817 = vmatpush1.bf16.msra.mxu0 0
        %2818 = vmatprep.subr.bf16.mxu0 0
        %2819 = vmatpush1.bf16.msra.mxu0 0
        %2820 = vmatprep.subr.bf16.mxu0 0
        %2821 = vmatpush1.bf16.msra.mxu0 0
        %2822 = vmatprep.subr.bf16.mxu0 0
        %2823 = vmatpush1.bf16.msra.mxu0 0
        %2824 = vmatprep.subr.bf16.mxu0 0
        %2825 = vmatpush1.bf16.msra.mxu0 0
        %2826 = vmatprep.subr.bf16.mxu0 0
        %2827 = vmatpush1.bf16.msra.mxu0 0
        %2828 = vmatprep.subr.bf16.mxu0 0
        %2829 = vmatpush1.bf16.msra.mxu0 0
        %2830 = vmatprep.subr.bf16.mxu0 0
        %2831 = vmatpush1.bf16.msra.mxu0 0
        %2832 = vmatprep.subr.bf16.mxu0 0
        %2833 = vmatpush1.bf16.msra.mxu0 0
        %2834 = vmatprep.subr.bf16.mxu0 0
        %2835 = vmatpush1.bf16.msra.mxu0 0
        %2836 = vmatprep.mubr.bf16.mxu0 0
        %2837 = vmatmul.mubr.bf16.gmra.mrb[0].mxu0 %v2802
        %v2838 = vpop.f32.mrb[0].mxu0
        %v2839 = vadd.f32 0.0, %v2838
        %v2840 = vpop.f32.mrb[0].mxu0
        %v2841 = vpop.f32.mrb[0].mxu0
        %v2842 = vadd.f32 0.0, %v2841
        %v2843 = vpop.f32.mrb[0].mxu0
        %2844 = vdwg.mxu0
        %2846 = vrot.lane.b32.xlu0 %v1198, 96
        %v2847 = vpop.permute.xlu0 %2846
        %v2850 = vsel %vm1580, %v2696, 0
        %2852 = vmatprep.subr.bf16.mxu0 0
        %2853 = vmatpush1.bf16.msra.mxu0 %v2847
        %2854 = vmatprep.subr.bf16.mxu0 0
        %2855 = vmatpush1.bf16.msra.mxu0 0
        %2856 = vmatprep.subr.bf16.mxu0 0
        %2857 = vmatpush1.bf16.msra.mxu0 0
        %2858 = vmatprep.subr.bf16.mxu0 0
        %2859 = vmatpush1.bf16.msra.mxu0 0
        %2860 = vmatprep.subr.bf16.mxu0 0
        %2861 = vmatpush1.bf16.msra.mxu0 0
        %2862 = vmatprep.subr.bf16.mxu0 0
        %2863 = vmatpush1.bf16.msra.mxu0 0
        %2864 = vmatprep.subr.bf16.mxu0 0
        %2865 = vmatpush1.bf16.msra.mxu0 0
        %2866 = vmatprep.subr.bf16.mxu0 0
        %2867 = vmatpush1.bf16.msra.mxu0 0
        %2868 = vmatprep.subr.bf16.mxu0 0
        %2869 = vmatpush1.bf16.msra.mxu0 0
        %2870 = vmatprep.subr.bf16.mxu0 0
        %2871 = vmatpush1.bf16.msra.mxu0 0
        %2872 = vmatprep.subr.bf16.mxu0 0
        %2873 = vmatpush1.bf16.msra.mxu0 0
        %2874 = vmatprep.subr.bf16.mxu0 0
        %2875 = vmatpush1.bf16.msra.mxu0 0
        %2876 = vmatprep.subr.bf16.mxu0 0
        %2877 = vmatpush1.bf16.msra.mxu0 0
        %2878 = vmatprep.subr.bf16.mxu0 0
        %2879 = vmatpush1.bf16.msra.mxu0 0
        %2880 = vmatprep.subr.bf16.mxu0 0
        %2881 = vmatpush1.bf16.msra.mxu0 0
        %2882 = vmatprep.subr.bf16.mxu0 0
        %2883 = vmatpush1.bf16.msra.mxu0 0
        %2884 = vmatprep.mubr.bf16.mxu0 0
        %2885 = vmatmul.mubr.bf16.gmra.mrb[0].mxu0 %v2850
        %v2886 = vpop.f32.mrb[0].mxu0
        %v2887 = vadd.f32 0.0, %v2886
        %v2888 = vpop.f32.mrb[0].mxu0
        %v2889 = vpop.f32.mrb[0].mxu0
        %v2890 = vadd.f32 0.0, %v2889
        %v2891 = vpop.f32.mrb[0].mxu0
        %2892 = vdwg.mxu0
        %2894 = vrot.lane.b32.xlu0 %v1199, 96
        %v2895 = vpop.permute.xlu0 %2894
        %v2898 = vsel %vm1580, %v2697, 0
        %2900 = vmatprep.subr.bf16.mxu0 0
        %2901 = vmatpush1.bf16.msra.mxu0 %v2895
        %2902 = vmatprep.subr.bf16.mxu0 0
        %2903 = vmatpush1.bf16.msra.mxu0 0
        %2904 = vmatprep.subr.bf16.mxu0 0
        %2905 = vmatpush1.bf16.msra.mxu0 0
        %2906 = vmatprep.subr.bf16.mxu0 0
        %2907 = vmatpush1.bf16.msra.mxu0 0
        %2908 = vmatprep.subr.bf16.mxu0 0
        %2909 = vmatpush1.bf16.msra.mxu0 0
        %2910 = vmatprep.subr.bf16.mxu0 0
        %2911 = vmatpush1.bf16.msra.mxu0 0
        %2912 = vmatprep.subr.bf16.mxu0 0
        %2913 = vmatpush1.bf16.msra.mxu0 0
        %2914 = vmatprep.subr.bf16.mxu0 0
        %2915 = vmatpush1.bf16.msra.mxu0 0
        %2916 = vmatprep.subr.bf16.mxu0 0
        %2917 = vmatpush1.bf16.msra.mxu0 0
        %2918 = vmatprep.subr.bf16.mxu0 0
        %2919 = vmatpush1.bf16.msra.mxu0 0
        %2920 = vmatprep.subr.bf16.mxu0 0
        %2921 = vmatpush1.bf16.msra.mxu0 0
        %2922 = vmatprep.subr.bf16.mxu0 0
        %2923 = vmatpush1.bf16.msra.mxu0 0
        %2924 = vmatprep.subr.bf16.mxu0 0
        %2925 = vmatpush1.bf16.msra.mxu0 0
        %2926 = vmatprep.subr.bf16.mxu0 0
        %2927 = vmatpush1.bf16.msra.mxu0 0
        %2928 = vmatprep.subr.bf16.mxu0 0
        %2929 = vmatpush1.bf16.msra.mxu0 0
        %2930 = vmatprep.subr.bf16.mxu0 0
        %2931 = vmatpush1.bf16.msra.mxu0 0
        %2932 = vmatprep.mubr.bf16.mxu0 0
        %2933 = vmatmul.mubr.bf16.gmra.mrb[0].mxu0 %v2898
        %v2934 = vpop.f32.mrb[0].mxu0
        %v2935 = vadd.f32 0.0, %v2934
        %v2936 = vpop.f32.mrb[0].mxu0
        %v2937 = vpop.f32.mrb[0].mxu0
        %v2938 = vadd.f32 0.0, %v2937
        %v2939 = vpop.f32.mrb[0].mxu0
        %2940 = vdwg.mxu0
        %2942 = vrot.lane.b32.xlu0 %v1200, 96
        %v2943 = vpop.permute.xlu0 %2942
        %v2946 = vsel %vm1580, %v2698, 0
        %2948 = vmatprep.subr.bf16.mxu0 0
        %2949 = vmatpush1.bf16.msra.mxu0 %v2943
        %2950 = vmatprep.subr.bf16.mxu0 0
        %2951 = vmatpush1.bf16.msra.mxu0 0
        %2952 = vmatprep.subr.bf16.mxu0 0
        %2953 = vmatpush1.bf16.msra.mxu0 0
        %2954 = vmatprep.subr.bf16.mxu0 0
        %2955 = vmatpush1.bf16.msra.mxu0 0
        %2956 = vmatprep.subr.bf16.mxu0 0
        %2957 = vmatpush1.bf16.msra.mxu0 0
        %2958 = vmatprep.subr.bf16.mxu0 0
        %2959 = vmatpush1.bf16.msra.mxu0 0
        %2960 = vmatprep.subr.bf16.mxu0 0
        %2961 = vmatpush1.bf16.msra.mxu0 0
        %2962 = vmatprep.subr.bf16.mxu0 0
        %2963 = vmatpush1.bf16.msra.mxu0 0
        %2964 = vmatprep.subr.bf16.mxu0 0
        %2965 = vmatpush1.bf16.msra.mxu0 0
        %2966 = vmatprep.subr.bf16.mxu0 0
        %2967 = vmatpush1.bf16.msra.mxu0 0
        %2968 = vmatprep.subr.bf16.mxu0 0
        %2969 = vmatpush1.bf16.msra.mxu0 0
        %2970 = vmatprep.subr.bf16.mxu0 0
        %2971 = vmatpush1.bf16.msra.mxu0 0
        %2972 = vmatprep.subr.bf16.mxu0 0
        %2973 = vmatpush1.bf16.msra.mxu0 0
        %2974 = vmatprep.subr.bf16.mxu0 0
        %2975 = vmatpush1.bf16.msra.mxu0 0
        %2976 = vmatprep.subr.bf16.mxu0 0
        %2977 = vmatpush1.bf16.msra.mxu0 0
        %2978 = vmatprep.subr.bf16.mxu0 0
        %2979 = vmatpush1.bf16.msra.mxu0 0
        %2980 = vmatprep.mubr.bf16.mxu0 0
        %2981 = vmatmul.mubr.bf16.gmra.mrb[0].mxu0 %v2946
        %v2982 = vpop.f32.mrb[0].mxu0
        %v2983 = vadd.f32 0.0, %v2982
        %v2984 = vpop.f32.mrb[0].mxu0
        %v2985 = vpop.f32.mrb[0].mxu0
        %v2986 = vadd.f32 0.0, %v2985
        %v2987 = vpop.f32.mrb[0].mxu0
        %2988 = vdwg.mxu0
        %2990 = vrot.lane.b32.xlu0 %v1201, 96
        %v2991 = vpop.permute.xlu0 %2990
        %v2994 = vsel %vm1580, %v2699, 0
        %2996 = vmatprep.subr.bf16.mxu0 0
        %2997 = vmatpush1.bf16.msra.mxu0 %v2991
        %2998 = vmatprep.subr.bf16.mxu0 0
        %2999 = vmatpush1.bf16.msra.mxu0 0
        %3000 = vmatprep.subr.bf16.mxu0 0
        %3001 = vmatpush1.bf16.msra.mxu0 0
        %3002 = vmatprep.subr.bf16.mxu0 0
        %3003 = vmatpush1.bf16.msra.mxu0 0
        %3004 = vmatprep.subr.bf16.mxu0 0
        %3005 = vmatpush1.bf16.msra.mxu0 0
        %3006 = vmatprep.subr.bf16.mxu0 0
        %3007 = vmatpush1.bf16.msra.mxu0 0
        %3008 = vmatprep.subr.bf16.mxu0 0
        %3009 = vmatpush1.bf16.msra.mxu0 0
        %3010 = vmatprep.subr.bf16.mxu0 0
        %3011 = vmatpush1.bf16.msra.mxu0 0
        %3012 = vmatprep.subr.bf16.mxu0 0
        %3013 = vmatpush1.bf16.msra.mxu0 0
        %3014 = vmatprep.subr.bf16.mxu0 0
        %3015 = vmatpush1.bf16.msra.mxu0 0
        %3016 = vmatprep.subr.bf16.mxu0 0
        %3017 = vmatpush1.bf16.msra.mxu0 0
        %3018 = vmatprep.subr.bf16.mxu0 0
        %3019 = vmatpush1.bf16.msra.mxu0 0
        %3020 = vmatprep.subr.bf16.mxu0 0
        %3021 = vmatpush1.bf16.msra.mxu0 0
        %3022 = vmatprep.subr.bf16.mxu0 0
        %3023 = vmatpush1.bf16.msra.mxu0 0
        %3024 = vmatprep.subr.bf16.mxu0 0
        %3025 = vmatpush1.bf16.msra.mxu0 0
        %3026 = vmatprep.subr.bf16.mxu0 0
        %3027 = vmatpush1.bf16.msra.mxu0 0
        %3028 = vmatprep.mubr.bf16.mxu0 0
        %3029 = vmatmul.mubr.bf16.gmra.mrb[0].mxu0 %v2994
        %v3030 = vpop.f32.mrb[0].mxu0
        %v3031 = vadd.f32 0.0, %v3030
        %v3032 = vpop.f32.mrb[0].mxu0
        %v3033 = vpop.f32.mrb[0].mxu0
        %v3034 = vadd.f32 0.0, %v3033
        %v3035 = vpop.f32.mrb[0].mxu0
        %3036 = vdwg.mxu0
        %3038 = vrot.lane.b32.xlu0 %v1202, 96
        %v3039 = vpop.permute.xlu0 %3038
        %v3042 = vsel %vm1580, %v2700, 0
        %3044 = vmatprep.subr.bf16.mxu0 0
        %3045 = vmatpush1.bf16.msra.mxu0 %v3039
        %3046 = vmatprep.subr.bf16.mxu0 0
        %3047 = vmatpush1.bf16.msra.mxu0 0
        %3048 = vmatprep.subr.bf16.mxu0 0
        %3049 = vmatpush1.bf16.msra.mxu0 0
        %3050 = vmatprep.subr.bf16.mxu0 0
        %3051 = vmatpush1.bf16.msra.mxu0 0
        %3052 = vmatprep.subr.bf16.mxu0 0
        %3053 = vmatpush1.bf16.msra.mxu0 0
        %3054 = vmatprep.subr.bf16.mxu0 0
        %3055 = vmatpush1.bf16.msra.mxu0 0
        %3056 = vmatprep.subr.bf16.mxu0 0
        %3057 = vmatpush1.bf16.msra.mxu0 0
        %3058 = vmatprep.subr.bf16.mxu0 0
        %3059 = vmatpush1.bf16.msra.mxu0 0
        %3060 = vmatprep.subr.bf16.mxu0 0
        %3061 = vmatpush1.bf16.msra.mxu0 0
        %3062 = vmatprep.subr.bf16.mxu0 0
        %3063 = vmatpush1.bf16.msra.mxu0 0
        %3064 = vmatprep.subr.bf16.mxu0 0
        %3065 = vmatpush1.bf16.msra.mxu0 0
        %3066 = vmatprep.subr.bf16.mxu0 0
        %3067 = vmatpush1.bf16.msra.mxu0 0
        %3068 = vmatprep.subr.bf16.mxu0 0
        %3069 = vmatpush1.bf16.msra.mxu0 0
        %3070 = vmatprep.subr.bf16.mxu0 0
        %3071 = vmatpush1.bf16.msra.mxu0 0
        %3072 = vmatprep.subr.bf16.mxu0 0
        %3073 = vmatpush1.bf16.msra.mxu0 0
        %3074 = vmatprep.subr.bf16.mxu0 0
        %3075 = vmatpush1.bf16.msra.mxu0 0
        %3076 = vmatprep.mubr.bf16.mxu0 0
        %3077 = vmatmul.mubr.bf16.gmra.mrb[0].mxu0 %v3042
        %v3078 = vpop.f32.mrb[0].mxu0
        %v3079 = vadd.f32 0.0, %v3078
        %v3080 = vpop.f32.mrb[0].mxu0
        %v3081 = vpop.f32.mrb[0].mxu0
        %v3082 = vadd.f32 0.0, %v3081
        %v3083 = vpop.f32.mrb[0].mxu0
        %3084 = vdwg.mxu0
        %v3085 = vrcp.pop %v2647
        %v3086 = vrcp.pop %v2650
        %v3087 = vrcp.pop %v2653
        %v3088 = vrcp.pop %v2656
        %v3089 = vrcp.pop %v2659
        %v3090 = vrcp.pop %v2662
        %v3091 = vrcp.pop %v2665
        %v3092 = vrcp.pop %v2668
        %v3093 = vrcp.pop %v2671
        %v3094 = vrcp.pop %v2674
        %v3095 = vrcp.pop %v2677
        %v3096 = vrcp.pop %v2680
        %v3097 = vrcp.pop %v2683
        %v3098 = vrcp.pop %v2686
        %v3099 = vrcp.pop %v2689
        %v3100 = vrcp.pop %v2692
        %v3101 = vmul.f32 %v2743, %v3085
        %v3102 = vmul.f32 %v2746, %v3086
        %v3103 = vmul.f32 %v2791, %v3087
        %v3104 = vmul.f32 %v2794, %v3088
        %v3105 = vmul.f32 %v2839, %v3089
        %v3106 = vmul.f32 %v2842, %v3090
        %v3107 = vmul.f32 %v2887, %v3091
        %v3108 = vmul.f32 %v2890, %v3092
        %v3109 = vmul.f32 %v2935, %v3093
        %v3110 = vmul.f32 %v2938, %v3094
        %v3111 = vmul.f32 %v2983, %v3095
        %v3112 = vmul.f32 %v2986, %v3096
        %v3113 = vmul.f32 %v3031, %v3097
        %v3114 = vmul.f32 %v3034, %v3098
        %v3115 = vmul.f32 %v3079, %v3099
        %v3116 = vmul.f32 %v3082, %v3100
        %v3117 = vpack.c.bf16 %v3102, %v3101
        %v3118 = vpack.c.bf16 %v3104, %v3103
        %v3119 = vpack.c.bf16 %v3106, %v3105
        %v3120 = vpack.c.bf16 %v3108, %v3107
        %v3121 = vpack.c.bf16 %v3110, %v3109
        %v3122 = vpack.c.bf16 %v3112, %v3111
        %v3123 = vpack.c.bf16 %v3114, %v3113
        %v3124 = vpack.c.bf16 %v3116, %v3115
        %3125 = vrot.lane.b32.xlu0 %v1179, 64
        %v3126 = vpop.permute.xlu0 %3125
        %3127 = vrot.lane.b32.xlu0 %v1187, 64
        %v3128 = vpop.permute.xlu0 %3127
        %v3130 = vsel %vm1203, %v3126, 0
        %v3133 = vsel %vm1203, %v3128, 0
        %3135 = vmatprep.subr.bf16.mxu0 0
        %3136 = vmatpush1.bf16.xpose.msra.mxu0 %v3133
        %3137 = vmatprep.subr.bf16.mxu0 0
        %3138 = vmatpush1.bf16.xpose.msra.mxu0 0
        %3139 = vmatprep.subr.bf16.mxu0 0
        %3140 = vmatpush1.bf16.xpose.msra.mxu0 0
        %3141 = vmatprep.subr.bf16.mxu0 0
        %3142 = vmatpush1.bf16.xpose.msra.mxu0 0
        %3143 = vmatprep.subr.bf16.mxu0 0
        %3144 = vmatpush1.bf16.xpose.msra.mxu0 0
        %3145 = vmatprep.subr.bf16.mxu0 0
        %3146 = vmatpush1.bf16.xpose.msra.mxu0 0
        %3147 = vmatprep.subr.bf16.mxu0 0
        %3148 = vmatpush1.bf16.xpose.msra.mxu0 0
        %3149 = vmatprep.subr.bf16.mxu0 0
        %3150 = vmatpush1.bf16.xpose.msra.mxu0 0
        %3151 = vmatprep.subr.bf16.mxu0 0
        %3152 = vmatpush1.bf16.xpose.msra.mxu0 0
        %3153 = vmatprep.subr.bf16.mxu0 0
        %3154 = vmatpush1.bf16.xpose.msra.mxu0 0
        %3155 = vmatprep.subr.bf16.mxu0 0
        %3156 = vmatpush1.bf16.xpose.msra.mxu0 0
        %3157 = vmatprep.subr.bf16.mxu0 0
        %3158 = vmatpush1.bf16.xpose.msra.mxu0 0
        %3159 = vmatprep.subr.bf16.mxu0 0
        %3160 = vmatpush1.bf16.xpose.msra.mxu0 0
        %3161 = vmatprep.subr.bf16.mxu0 0
        %3162 = vmatpush1.bf16.xpose.msra.mxu0 0
        %3163 = vmatprep.subr.bf16.mxu0 0
        %3164 = vmatpush1.bf16.xpose.msra.mxu0 0
        %3165 = vmatprep.subr.bf16.mxu0 0
        %3166 = vmatpush1.bf16.xpose.msra.mxu0 0
        %3167 = vmatprep.mubr.bf16.mxu0 0
        %3168 = vmatmul.mubr.bf16.gmra.mrb[0].mxu0 %v3130
        %v3169 = vpop.f32.mrb[0].mxu0
        %v3170 = vadd.f32 0.0, %v3169
        %v3171 = vpop.f32.mrb[0].mxu0
        %v3172 = vpop.f32.mrb[0].mxu0
        %v3173 = vadd.f32 0.0, %v3172
        %v3174 = vpop.f32.mrb[0].mxu0
        %3175 = vdwg.mxu0
        %3176 = vrot.lane.b32.xlu0 %v1180, 64
        %v3177 = vpop.permute.xlu0 %3176
        %3178 = vrot.lane.b32.xlu0 %v1188, 64
        %v3179 = vpop.permute.xlu0 %3178
        %v3181 = vsel %vm1203, %v3177, 0
        %v3184 = vsel %vm1203, %v3179, 0
        %3186 = vmatprep.subr.bf16.mxu0 0
        %3187 = vmatpush1.bf16.xpose.msra.mxu0 %v3184
        %3188 = vmatprep.subr.bf16.mxu0 0
        %3189 = vmatpush1.bf16.xpose.msra.mxu0 0
        %3190 = vmatprep.subr.bf16.mxu0 0
        %3191 = vmatpush1.bf16.xpose.msra.mxu0 0
        %3192 = vmatprep.subr.bf16.mxu0 0
        %3193 = vmatpush1.bf16.xpose.msra.mxu0 0
        %3194 = vmatprep.subr.bf16.mxu0 0
        %3195 = vmatpush1.bf16.xpose.msra.mxu0 0
        %3196 = vmatprep.subr.bf16.mxu0 0
        %3197 = vmatpush1.bf16.xpose.msra.mxu0 0
        %3198 = vmatprep.subr.bf16.mxu0 0
        %3199 = vmatpush1.bf16.xpose.msra.mxu0 0
        %3200 = vmatprep.subr.bf16.mxu0 0
        %3201 = vmatpush1.bf16.xpose.msra.mxu0 0
        %3202 = vmatprep.subr.bf16.mxu0 0
        %3203 = vmatpush1.bf16.xpose.msra.mxu0 0
        %3204 = vmatprep.subr.bf16.mxu0 0
        %3205 = vmatpush1.bf16.xpose.msra.mxu0 0
        %3206 = vmatprep.subr.bf16.mxu0 0
        %3207 = vmatpush1.bf16.xpose.msra.mxu0 0
        %3208 = vmatprep.subr.bf16.mxu0 0
        %3209 = vmatpush1.bf16.xpose.msra.mxu0 0
        %3210 = vmatprep.subr.bf16.mxu0 0
        %3211 = vmatpush1.bf16.xpose.msra.mxu0 0
        %3212 = vmatprep.subr.bf16.mxu0 0
        %3213 = vmatpush1.bf16.xpose.msra.mxu0 0
        %3214 = vmatprep.subr.bf16.mxu0 0
        %3215 = vmatpush1.bf16.xpose.msra.mxu0 0
        %3216 = vmatprep.subr.bf16.mxu0 0
        %3217 = vmatpush1.bf16.xpose.msra.mxu0 0
        %3218 = vmatprep.mubr.bf16.mxu0 0
        %3219 = vmatmul.mubr.bf16.gmra.mrb[0].mxu0 %v3181
        %v3220 = vpop.f32.mrb[0].mxu0
        %v3221 = vadd.f32 0.0, %v3220
        %v3222 = vpop.f32.mrb[0].mxu0
        %v3223 = vpop.f32.mrb[0].mxu0
        %v3224 = vadd.f32 0.0, %v3223
        %v3225 = vpop.f32.mrb[0].mxu0
        %3226 = vdwg.mxu0
        %3227 = vrot.lane.b32.xlu0 %v1181, 64
        %v3228 = vpop.permute.xlu0 %3227
        %3229 = vrot.lane.b32.xlu0 %v1189, 64
        %v3230 = vpop.permute.xlu0 %3229
        %v3232 = vsel %vm1203, %v3228, 0
        %v3235 = vsel %vm1203, %v3230, 0
        %3237 = vmatprep.subr.bf16.mxu0 0
        %3238 = vmatpush1.bf16.xpose.msra.mxu0 %v3235
        %3239 = vmatprep.subr.bf16.mxu0 0
        %3240 = vmatpush1.bf16.xpose.msra.mxu0 0
        %3241 = vmatprep.subr.bf16.mxu0 0
        %3242 = vmatpush1.bf16.xpose.msra.mxu0 0
        %3243 = vmatprep.subr.bf16.mxu0 0
        %3244 = vmatpush1.bf16.xpose.msra.mxu0 0
        %3245 = vmatprep.subr.bf16.mxu0 0
        %3246 = vmatpush1.bf16.xpose.msra.mxu0 0
        %3247 = vmatprep.subr.bf16.mxu0 0
        %3248 = vmatpush1.bf16.xpose.msra.mxu0 0
        %3249 = vmatprep.subr.bf16.mxu0 0
        %3250 = vmatpush1.bf16.xpose.msra.mxu0 0
        %3251 = vmatprep.subr.bf16.mxu0 0
        %3252 = vmatpush1.bf16.xpose.msra.mxu0 0
        %3253 = vmatprep.subr.bf16.mxu0 0
        %3254 = vmatpush1.bf16.xpose.msra.mxu0 0
        %3255 = vmatprep.subr.bf16.mxu0 0
        %3256 = vmatpush1.bf16.xpose.msra.mxu0 0
        %3257 = vmatprep.subr.bf16.mxu0 0
        %3258 = vmatpush1.bf16.xpose.msra.mxu0 0
        %3259 = vmatprep.subr.bf16.mxu0 0
        %3260 = vmatpush1.bf16.xpose.msra.mxu0 0
        %3261 = vmatprep.subr.bf16.mxu0 0
        %3262 = vmatpush1.bf16.xpose.msra.mxu0 0
        %3263 = vmatprep.subr.bf16.mxu0 0
        %3264 = vmatpush1.bf16.xpose.msra.mxu0 0
        %3265 = vmatprep.subr.bf16.mxu0 0
        %3266 = vmatpush1.bf16.xpose.msra.mxu0 0
        %3267 = vmatprep.subr.bf16.mxu0 0
        %3268 = vmatpush1.bf16.xpose.msra.mxu0 0
        %3269 = vmatprep.mubr.bf16.mxu0 0
        %3270 = vmatmul.mubr.bf16.gmra.mrb[0].mxu0 %v3232
        %v3271 = vpop.f32.mrb[0].mxu0
        %v3272 = vadd.f32 0.0, %v3271
        %v3273 = vpop.f32.mrb[0].mxu0
        %v3274 = vpop.f32.mrb[0].mxu0
        %v3275 = vadd.f32 0.0, %v3274
        %v3276 = vpop.f32.mrb[0].mxu0
        %3277 = vdwg.mxu0
        %3278 = vrot.lane.b32.xlu0 %v1182, 64
        %v3279 = vpop.permute.xlu0 %3278
        %3280 = vrot.lane.b32.xlu0 %v1190, 64
        %v3281 = vpop.permute.xlu0 %3280
        %v3283 = vsel %vm1203, %v3279, 0
        %v3286 = vsel %vm1203, %v3281, 0
        %3288 = vmatprep.subr.bf16.mxu0 0
        %3289 = vmatpush1.bf16.xpose.msra.mxu0 %v3286
        %3290 = vmatprep.subr.bf16.mxu0 0
        %3291 = vmatpush1.bf16.xpose.msra.mxu0 0
        %3292 = vmatprep.subr.bf16.mxu0 0
        %3293 = vmatpush1.bf16.xpose.msra.mxu0 0
        %3294 = vmatprep.subr.bf16.mxu0 0
        %3295 = vmatpush1.bf16.xpose.msra.mxu0 0
        %3296 = vmatprep.subr.bf16.mxu0 0
        %3297 = vmatpush1.bf16.xpose.msra.mxu0 0
        %3298 = vmatprep.subr.bf16.mxu0 0
        %3299 = vmatpush1.bf16.xpose.msra.mxu0 0
        %3300 = vmatprep.subr.bf16.mxu0 0
        %3301 = vmatpush1.bf16.xpose.msra.mxu0 0
        %3302 = vmatprep.subr.bf16.mxu0 0
        %3303 = vmatpush1.bf16.xpose.msra.mxu0 0
        %3304 = vmatprep.subr.bf16.mxu0 0
        %3305 = vmatpush1.bf16.xpose.msra.mxu0 0
        %3306 = vmatprep.subr.bf16.mxu0 0
        %3307 = vmatpush1.bf16.xpose.msra.mxu0 0
        %3308 = vmatprep.subr.bf16.mxu0 0
        %3309 = vmatpush1.bf16.xpose.msra.mxu0 0
        %3310 = vmatprep.subr.bf16.mxu0 0
        %3311 = vmatpush1.bf16.xpose.msra.mxu0 0
        %3312 = vmatprep.subr.bf16.mxu0 0
        %3313 = vmatpush1.bf16.xpose.msra.mxu0 0
        %3314 = vmatprep.subr.bf16.mxu0 0
        %3315 = vmatpush1.bf16.xpose.msra.mxu0 0
        %3316 = vmatprep.subr.bf16.mxu0 0
        %3317 = vmatpush1.bf16.xpose.msra.mxu0 0
        %3318 = vmatprep.subr.bf16.mxu0 0
        %3319 = vmatpush1.bf16.xpose.msra.mxu0 0
        %3320 = vmatprep.mubr.bf16.mxu0 0
        %3321 = vmatmul.mubr.bf16.gmra.mrb[0].mxu0 %v3283
        %v3322 = vpop.f32.mrb[0].mxu0
        %v3323 = vadd.f32 0.0, %v3322
        %v3324 = vpop.f32.mrb[0].mxu0
        %v3325 = vpop.f32.mrb[0].mxu0
        %v3326 = vadd.f32 0.0, %v3325
        %v3327 = vpop.f32.mrb[0].mxu0
        %3328 = vdwg.mxu0
        %3329 = vrot.lane.b32.xlu0 %v1183, 64
        %v3330 = vpop.permute.xlu0 %3329
        %3331 = vrot.lane.b32.xlu0 %v1191, 64
        %v3332 = vpop.permute.xlu0 %3331
        %v3334 = vsel %vm1203, %v3330, 0
        %v3337 = vsel %vm1203, %v3332, 0
        %3339 = vmatprep.subr.bf16.mxu0 0
        %3340 = vmatpush1.bf16.xpose.msra.mxu0 %v3337
        %3341 = vmatprep.subr.bf16.mxu0 0
        %3342 = vmatpush1.bf16.xpose.msra.mxu0 0
        %3343 = vmatprep.subr.bf16.mxu0 0
        %3344 = vmatpush1.bf16.xpose.msra.mxu0 0
        %3345 = vmatprep.subr.bf16.mxu0 0
        %3346 = vmatpush1.bf16.xpose.msra.mxu0 0
        %3347 = vmatprep.subr.bf16.mxu0 0
        %3348 = vmatpush1.bf16.xpose.msra.mxu0 0
        %3349 = vmatprep.subr.bf16.mxu0 0
        %3350 = vmatpush1.bf16.xpose.msra.mxu0 0
        %3351 = vmatprep.subr.bf16.mxu0 0
        %3352 = vmatpush1.bf16.xpose.msra.mxu0 0
        %3353 = vmatprep.subr.bf16.mxu0 0
        %3354 = vmatpush1.bf16.xpose.msra.mxu0 0
        %3355 = vmatprep.subr.bf16.mxu0 0
        %3356 = vmatpush1.bf16.xpose.msra.mxu0 0
        %3357 = vmatprep.subr.bf16.mxu0 0
        %3358 = vmatpush1.bf16.xpose.msra.mxu0 0
        %3359 = vmatprep.subr.bf16.mxu0 0
        %3360 = vmatpush1.bf16.xpose.msra.mxu0 0
        %3361 = vmatprep.subr.bf16.mxu0 0
        %3362 = vmatpush1.bf16.xpose.msra.mxu0 0
        %3363 = vmatprep.subr.bf16.mxu0 0
        %3364 = vmatpush1.bf16.xpose.msra.mxu0 0
        %3365 = vmatprep.subr.bf16.mxu0 0
        %3366 = vmatpush1.bf16.xpose.msra.mxu0 0
        %3367 = vmatprep.subr.bf16.mxu0 0
        %3368 = vmatpush1.bf16.xpose.msra.mxu0 0
        %3369 = vmatprep.subr.bf16.mxu0 0
        %3370 = vmatpush1.bf16.xpose.msra.mxu0 0
        %3371 = vmatprep.mubr.bf16.mxu0 0
        %3372 = vmatmul.mubr.bf16.gmra.mrb[0].mxu0 %v3334
        %v3373 = vpop.f32.mrb[0].mxu0
        %v3374 = vadd.f32 0.0, %v3373
        %v3375 = vpop.f32.mrb[0].mxu0
        %v3376 = vpop.f32.mrb[0].mxu0
        %v3377 = vadd.f32 0.0, %v3376
        %v3378 = vpop.f32.mrb[0].mxu0
        %3379 = vdwg.mxu0
        %3380 = vrot.lane.b32.xlu0 %v1184, 64
        %v3381 = vpop.permute.xlu0 %3380
        %3382 = vrot.lane.b32.xlu0 %v1192, 64
        %v3383 = vpop.permute.xlu0 %3382
        %v3385 = vsel %vm1203, %v3381, 0
        %v3388 = vsel %vm1203, %v3383, 0
        %3390 = vmatprep.subr.bf16.mxu0 0
        %3391 = vmatpush1.bf16.xpose.msra.mxu0 %v3388
        %3392 = vmatprep.subr.bf16.mxu0 0
        %3393 = vmatpush1.bf16.xpose.msra.mxu0 0
        %3394 = vmatprep.subr.bf16.mxu0 0
        %3395 = vmatpush1.bf16.xpose.msra.mxu0 0
        %3396 = vmatprep.subr.bf16.mxu0 0
        %3397 = vmatpush1.bf16.xpose.msra.mxu0 0
        %3398 = vmatprep.subr.bf16.mxu0 0
        %3399 = vmatpush1.bf16.xpose.msra.mxu0 0
        %3400 = vmatprep.subr.bf16.mxu0 0
        %3401 = vmatpush1.bf16.xpose.msra.mxu0 0
        %3402 = vmatprep.subr.bf16.mxu0 0
        %3403 = vmatpush1.bf16.xpose.msra.mxu0 0
        %3404 = vmatprep.subr.bf16.mxu0 0
        %3405 = vmatpush1.bf16.xpose.msra.mxu0 0
        %3406 = vmatprep.subr.bf16.mxu0 0
        %3407 = vmatpush1.bf16.xpose.msra.mxu0 0
        %3408 = vmatprep.subr.bf16.mxu0 0
        %3409 = vmatpush1.bf16.xpose.msra.mxu0 0
        %3410 = vmatprep.subr.bf16.mxu0 0
        %3411 = vmatpush1.bf16.xpose.msra.mxu0 0
        %3412 = vmatprep.subr.bf16.mxu0 0
        %3413 = vmatpush1.bf16.xpose.msra.mxu0 0
        %3414 = vmatprep.subr.bf16.mxu0 0
        %3415 = vmatpush1.bf16.xpose.msra.mxu0 0
        %3416 = vmatprep.subr.bf16.mxu0 0
        %3417 = vmatpush1.bf16.xpose.msra.mxu0 0
        %3418 = vmatprep.subr.bf16.mxu0 0
        %3419 = vmatpush1.bf16.xpose.msra.mxu0 0
        %3420 = vmatprep.subr.bf16.mxu0 0
        %3421 = vmatpush1.bf16.xpose.msra.mxu0 0
        %3422 = vmatprep.mubr.bf16.mxu0 0
        %3423 = vmatmul.mubr.bf16.gmra.mrb[0].mxu0 %v3385
        %v3424 = vpop.f32.mrb[0].mxu0
        %v3425 = vadd.f32 0.0, %v3424
        %v3426 = vpop.f32.mrb[0].mxu0
        %v3427 = vpop.f32.mrb[0].mxu0
        %v3428 = vadd.f32 0.0, %v3427
        %v3429 = vpop.f32.mrb[0].mxu0
        %3430 = vdwg.mxu0
        %3431 = vrot.lane.b32.xlu0 %v1185, 64
        %v3432 = vpop.permute.xlu0 %3431
        %3433 = vrot.lane.b32.xlu0 %v1193, 64
        %v3434 = vpop.permute.xlu0 %3433
        %v3436 = vsel %vm1203, %v3432, 0
        %v3439 = vsel %vm1203, %v3434, 0
        %3441 = vmatprep.subr.bf16.mxu0 0
        %3442 = vmatpush1.bf16.xpose.msra.mxu0 %v3439
        %3443 = vmatprep.subr.bf16.mxu0 0
        %3444 = vmatpush1.bf16.xpose.msra.mxu0 0
        %3445 = vmatprep.subr.bf16.mxu0 0
        %3446 = vmatpush1.bf16.xpose.msra.mxu0 0
        %3447 = vmatprep.subr.bf16.mxu0 0
        %3448 = vmatpush1.bf16.xpose.msra.mxu0 0
        %3449 = vmatprep.subr.bf16.mxu0 0
        %3450 = vmatpush1.bf16.xpose.msra.mxu0 0
        %3451 = vmatprep.subr.bf16.mxu0 0
        %3452 = vmatpush1.bf16.xpose.msra.mxu0 0
        %3453 = vmatprep.subr.bf16.mxu0 0
        %3454 = vmatpush1.bf16.xpose.msra.mxu0 0
        %3455 = vmatprep.subr.bf16.mxu0 0
        %3456 = vmatpush1.bf16.xpose.msra.mxu0 0
        %3457 = vmatprep.subr.bf16.mxu0 0
        %3458 = vmatpush1.bf16.xpose.msra.mxu0 0
        %3459 = vmatprep.subr.bf16.mxu0 0
        %3460 = vmatpush1.bf16.xpose.msra.mxu0 0
        %3461 = vmatprep.subr.bf16.mxu0 0
        %3462 = vmatpush1.bf16.xpose.msra.mxu0 0
        %3463 = vmatprep.subr.bf16.mxu0 0
        %3464 = vmatpush1.bf16.xpose.msra.mxu0 0
        %3465 = vmatprep.subr.bf16.mxu0 0
        %3466 = vmatpush1.bf16.xpose.msra.mxu0 0
        %3467 = vmatprep.subr.bf16.mxu0 0
        %3468 = vmatpush1.bf16.xpose.msra.mxu0 0
        %3469 = vmatprep.subr.bf16.mxu0 0
        %3470 = vmatpush1.bf16.xpose.msra.mxu0 0
        %3471 = vmatprep.subr.bf16.mxu0 0
        %3472 = vmatpush1.bf16.xpose.msra.mxu0 0
        %3473 = vmatprep.mubr.bf16.mxu0 0
        %3474 = vmatmul.mubr.bf16.gmra.mrb[0].mxu0 %v3436
        %v3475 = vpop.f32.mrb[0].mxu0
        %v3476 = vadd.f32 0.0, %v3475
        %v3477 = vpop.f32.mrb[0].mxu0
        %v3478 = vpop.f32.mrb[0].mxu0
        %v3479 = vadd.f32 0.0, %v3478
        %v3480 = vpop.f32.mrb[0].mxu0
        %3481 = vdwg.mxu0
        %3482 = vrot.lane.b32.xlu0 %v1186, 64
        %v3483 = vpop.permute.xlu0 %3482
        %3484 = vrot.lane.b32.xlu0 %v1194, 64
        %v3485 = vpop.permute.xlu0 %3484
        %v3487 = vsel %vm1203, %v3483, 0
        %v3490 = vsel %vm1203, %v3485, 0
        %3492 = vmatprep.subr.bf16.mxu0 0
        %3493 = vmatpush1.bf16.xpose.msra.mxu0 %v3490
        %3494 = vmatprep.subr.bf16.mxu0 0
        %3495 = vmatpush1.bf16.xpose.msra.mxu0 0
        %3496 = vmatprep.subr.bf16.mxu0 0
        %3497 = vmatpush1.bf16.xpose.msra.mxu0 0
        %3498 = vmatprep.subr.bf16.mxu0 0
        %3499 = vmatpush1.bf16.xpose.msra.mxu0 0
        %3500 = vmatprep.subr.bf16.mxu0 0
        %3501 = vmatpush1.bf16.xpose.msra.mxu0 0
        %3502 = vmatprep.subr.bf16.mxu0 0
        %3503 = vmatpush1.bf16.xpose.msra.mxu0 0
        %3504 = vmatprep.subr.bf16.mxu0 0
        %3505 = vmatpush1.bf16.xpose.msra.mxu0 0
        %3506 = vmatprep.subr.bf16.mxu0 0
        %3507 = vmatpush1.bf16.xpose.msra.mxu0 0
        %3508 = vmatprep.subr.bf16.mxu0 0
        %3509 = vmatpush1.bf16.xpose.msra.mxu0 0
        %3510 = vmatprep.subr.bf16.mxu0 0
        %3511 = vmatpush1.bf16.xpose.msra.mxu0 0
        %3512 = vmatprep.subr.bf16.mxu0 0
        %3513 = vmatpush1.bf16.xpose.msra.mxu0 0
        %3514 = vmatprep.subr.bf16.mxu0 0
        %3515 = vmatpush1.bf16.xpose.msra.mxu0 0
        %3516 = vmatprep.subr.bf16.mxu0 0
        %3517 = vmatpush1.bf16.xpose.msra.mxu0 0
        %3518 = vmatprep.subr.bf16.mxu0 0
        %3519 = vmatpush1.bf16.xpose.msra.mxu0 0
        %3520 = vmatprep.subr.bf16.mxu0 0
        %3521 = vmatpush1.bf16.xpose.msra.mxu0 0
        %3522 = vmatprep.subr.bf16.mxu0 0
        %3523 = vmatpush1.bf16.xpose.msra.mxu0 0
        %3524 = vmatprep.mubr.bf16.mxu0 0
        %3525 = vmatmul.mubr.bf16.gmra.mrb[0].mxu0 %v3487
        %v3526 = vpop.f32.mrb[0].mxu0
        %v3527 = vadd.f32 0.0, %v3526
        %v3528 = vpop.f32.mrb[0].mxu0
        %v3529 = vpop.f32.mrb[0].mxu0
        %v3530 = vadd.f32 0.0, %v3529
        %v3531 = vpop.f32.mrb[0].mxu0
        %3532 = vdwg.mxu0
        %v3533 = vsel %vm1580, %v3170, -inf
        %3534 = vmax.xlane.f32.xlu0 %v3533
        %v3535 = vpop.xlane.xlu0 %3534
        %v3536 = vsel %vm1580, %v3173, -inf
        %3537 = vmax.xlane.f32.xlu0 %v3536
        %v3538 = vpop.xlane.xlu0 %3537
        %v3539 = vsel %vm1580, %v3221, -inf
        %3540 = vmax.xlane.f32.xlu0 %v3539
        %v3541 = vpop.xlane.xlu0 %3540
        %v3542 = vsel %vm1580, %v3224, -inf
        %3543 = vmax.xlane.f32.xlu0 %v3542
        %v3544 = vpop.xlane.xlu0 %3543
        %v3545 = vsel %vm1580, %v3272, -inf
        %3546 = vmax.xlane.f32.xlu0 %v3545
        %v3547 = vpop.xlane.xlu0 %3546
        %v3548 = vsel %vm1580, %v3275, -inf
        %3549 = vmax.xlane.f32.xlu0 %v3548
        %v3550 = vpop.xlane.xlu0 %3549
        %v3551 = vsel %vm1580, %v3323, -inf
        %3552 = vmax.xlane.f32.xlu0 %v3551
        %v3553 = vpop.xlane.xlu0 %3552
        %v3554 = vsel %vm1580, %v3326, -inf
        %3555 = vmax.xlane.f32.xlu0 %v3554
        %v3556 = vpop.xlane.xlu0 %3555
        %v3557 = vsel %vm1580, %v3374, -inf
        %3558 = vmax.xlane.f32.xlu0 %v3557
        %v3559 = vpop.xlane.xlu0 %3558
        %v3560 = vsel %vm1580, %v3377, -inf
        %3561 = vmax.xlane.f32.xlu0 %v3560
        %v3562 = vpop.xlane.xlu0 %3561
        %v3563 = vsel %vm1580, %v3425, -inf
        %3564 = vmax.xlane.f32.xlu0 %v3563
        %v3565 = vpop.xlane.xlu0 %3564
        %v3566 = vsel %vm1580, %v3428, -inf
        %3567 = vmax.xlane.f32.xlu0 %v3566
        %v3568 = vpop.xlane.xlu0 %3567
        %v3569 = vsel %vm1580, %v3476, -inf
        %3570 = vmax.xlane.f32.xlu0 %v3569
        %v3571 = vpop.xlane.xlu0 %3570
        %v3572 = vsel %vm1580, %v3479, -inf
        %3573 = vmax.xlane.f32.xlu0 %v3572
        %v3574 = vpop.xlane.xlu0 %3573
        %v3575 = vsel %vm1580, %v3527, -inf
        %3576 = vmax.xlane.f32.xlu0 %v3575
        %v3577 = vpop.xlane.xlu0 %3576
        %v3578 = vsel %vm1580, %v3530, -inf
        %3579 = vmax.xlane.f32.xlu0 %v3578
        %v3580 = vpop.xlane.xlu0 %3579
        %v3581 = vsub.f32 %v3170, %v3535
        %v3582 = vsub.f32 %v3173, %v3538
        %v3583 = vsub.f32 %v3221, %v3541
        %v3584 = vsub.f32 %v3224, %v3544
        %v3585 = vsub.f32 %v3272, %v3547
        %v3586 = vsub.f32 %v3275, %v3550
        %v3587 = vsub.f32 %v3323, %v3553
        %v3588 = vsub.f32 %v3326, %v3556
        %v3589 = vsub.f32 %v3374, %v3559
        %v3590 = vsub.f32 %v3377, %v3562
        %v3591 = vsub.f32 %v3425, %v3565
        %v3592 = vsub.f32 %v3428, %v3568
        %v3593 = vsub.f32 %v3476, %v3571
        %v3594 = vsub.f32 %v3479, %v3574
        %v3595 = vsub.f32 %v3527, %v3577
        %v3596 = vsub.f32 %v3530, %v3580
        %v3597 = vmul.f32 %v3581, 1.442695
        %v3598 = vpow.pop %v3597
        %v3599 = vmul.f32 %v3582, 1.442695
        %v3600 = vpow.pop %v3599
        %v3601 = vmul.f32 %v3583, 1.442695
        %v3602 = vpow.pop %v3601
        %v3603 = vmul.f32 %v3584, 1.442695
        %v3604 = vpow.pop %v3603
        %v3605 = vmul.f32 %v3585, 1.442695
        %v3606 = vpow.pop %v3605
        %v3607 = vmul.f32 %v3586, 1.442695
        %v3608 = vpow.pop %v3607
        %v3609 = vmul.f32 %v3587, 1.442695
        %v3610 = vpow.pop %v3609
        %v3611 = vmul.f32 %v3588, 1.442695
        %v3612 = vpow.pop %v3611
        %v3613 = vmul.f32 %v3589, 1.442695
        %v3614 = vpow.pop %v3613
        %v3615 = vmul.f32 %v3590, 1.442695
        %v3616 = vpow.pop %v3615
        %v3617 = vmul.f32 %v3591, 1.442695
        %v3618 = vpow.pop %v3617
        %v3619 = vmul.f32 %v3592, 1.442695
        %v3620 = vpow.pop %v3619
        %v3621 = vmul.f32 %v3593, 1.442695
        %v3622 = vpow.pop %v3621
        %v3623 = vmul.f32 %v3594, 1.442695
        %v3624 = vpow.pop %v3623
        %v3625 = vmul.f32 %v3595, 1.442695
        %v3626 = vpow.pop %v3625
        %v3627 = vmul.f32 %v3596, 1.442695
        %v3628 = vpow.pop %v3627
        %v3629 = vsel %vm1580, %v3598, 0.0
        %3630 = vadd.xlane.f32.xlu0 %v3629
        %v3631 = vpop.xlane.xlu0 %3630
        %v3632 = vsel %vm1580, %v3600, 0.0
        %3633 = vadd.xlane.f32.xlu0 %v3632
        %v3634 = vpop.xlane.xlu0 %3633
        %v3635 = vsel %vm1580, %v3602, 0.0
        %3636 = vadd.xlane.f32.xlu0 %v3635
        %v3637 = vpop.xlane.xlu0 %3636
        %v3638 = vsel %vm1580, %v3604, 0.0
        %3639 = vadd.xlane.f32.xlu0 %v3638
        %v3640 = vpop.xlane.xlu0 %3639
        %v3641 = vsel %vm1580, %v3606, 0.0
        %3642 = vadd.xlane.f32.xlu0 %v3641
        %v3643 = vpop.xlane.xlu0 %3642
        %v3644 = vsel %vm1580, %v3608, 0.0
        %3645 = vadd.xlane.f32.xlu0 %v3644
        %v3646 = vpop.xlane.xlu0 %3645
        %v3647 = vsel %vm1580, %v3610, 0.0
        %3648 = vadd.xlane.f32.xlu0 %v3647
        %v3649 = vpop.xlane.xlu0 %3648
        %v3650 = vsel %vm1580, %v3612, 0.0
        %3651 = vadd.xlane.f32.xlu0 %v3650
        %v3652 = vpop.xlane.xlu0 %3651
        %v3653 = vsel %vm1580, %v3614, 0.0
        %3654 = vadd.xlane.f32.xlu0 %v3653
        %v3655 = vpop.xlane.xlu0 %3654
        %v3656 = vsel %vm1580, %v3616, 0.0
        %3657 = vadd.xlane.f32.xlu0 %v3656
        %v3658 = vpop.xlane.xlu0 %3657
        %v3659 = vsel %vm1580, %v3618, 0.0
        %3660 = vadd.xlane.f32.xlu0 %v3659
        %v3661 = vpop.xlane.xlu0 %3660
        %v3662 = vsel %vm1580, %v3620, 0.0
        %3663 = vadd.xlane.f32.xlu0 %v3662
        %v3664 = vpop.xlane.xlu0 %3663
        %v3665 = vsel %vm1580, %v3622, 0.0
        %3666 = vadd.xlane.f32.xlu0 %v3665
        %v3667 = vpop.xlane.xlu0 %3666
        %v3668 = vsel %vm1580, %v3624, 0.0
        %3669 = vadd.xlane.f32.xlu0 %v3668
        %v3670 = vpop.xlane.xlu0 %3669
        %v3671 = vsel %vm1580, %v3626, 0.0
        %3672 = vadd.xlane.f32.xlu0 %v3671
        %v3673 = vpop.xlane.xlu0 %3672
        %v3674 = vsel %vm1580, %v3628, 0.0
        %3675 = vadd.xlane.f32.xlu0 %v3674
        %v3676 = vpop.xlane.xlu0 %3675
        %v3677 = vpack.c.bf16 %v3600, %v3598
        %v3678 = vpack.c.bf16 %v3604, %v3602
        %v3679 = vpack.c.bf16 %v3608, %v3606
        %v3680 = vpack.c.bf16 %v3612, %v3610
        %v3681 = vpack.c.bf16 %v3616, %v3614
        %v3682 = vpack.c.bf16 %v3620, %v3618
        %v3683 = vpack.c.bf16 %v3624, %v3622
        %v3684 = vpack.c.bf16 %v3628, %v3626
        %3685 = vrot.lane.b32.xlu0 %v1195, 64
        %v3686 = vpop.permute.xlu0 %3685
        %v3689 = vsel %vm1580, %v3677, 0
        %3691 = vmatprep.subr.bf16.mxu0 0
        %3692 = vmatpush1.bf16.msra.mxu0 %v3686
        %3693 = vmatprep.subr.bf16.mxu0 0
        %3694 = vmatpush1.bf16.msra.mxu0 0
        %3695 = vmatprep.subr.bf16.mxu0 0
        %3696 = vmatpush1.bf16.msra.mxu0 0
        %3697 = vmatprep.subr.bf16.mxu0 0
        %3698 = vmatpush1.bf16.msra.mxu0 0
        %3699 = vmatprep.subr.bf16.mxu0 0
        %3700 = vmatpush1.bf16.msra.mxu0 0
        %3701 = vmatprep.subr.bf16.mxu0 0
        %3702 = vmatpush1.bf16.msra.mxu0 0
        %3703 = vmatprep.subr.bf16.mxu0 0
        %3704 = vmatpush1.bf16.msra.mxu0 0
        %3705 = vmatprep.subr.bf16.mxu0 0
        %3706 = vmatpush1.bf16.msra.mxu0 0
        %3707 = vmatprep.subr.bf16.mxu0 0
        %3708 = vmatpush1.bf16.msra.mxu0 0
        %3709 = vmatprep.subr.bf16.mxu0 0
        %3710 = vmatpush1.bf16.msra.mxu0 0
        %3711 = vmatprep.subr.bf16.mxu0 0
        %3712 = vmatpush1.bf16.msra.mxu0 0
        %3713 = vmatprep.subr.bf16.mxu0 0
        %3714 = vmatpush1.bf16.msra.mxu0 0
        %3715 = vmatprep.subr.bf16.mxu0 0
        %3716 = vmatpush1.bf16.msra.mxu0 0
        %3717 = vmatprep.subr.bf16.mxu0 0
        %3718 = vmatpush1.bf16.msra.mxu0 0
        %3719 = vmatprep.subr.bf16.mxu0 0
        %3720 = vmatpush1.bf16.msra.mxu0 0
        %3721 = vmatprep.subr.bf16.mxu0 0
        %3722 = vmatpush1.bf16.msra.mxu0 0
        %3723 = vmatprep.mubr.bf16.mxu0 0
        %3724 = vmatmul.mubr.bf16.gmra.mrb[0].mxu0 %v3689
        %v3725 = vpop.f32.mrb[0].mxu0
        %v3726 = vadd.f32 0.0, %v3725
        %v3727 = vpop.f32.mrb[0].mxu0
        %v3728 = vpop.f32.mrb[0].mxu0
        %v3729 = vadd.f32 0.0, %v3728
        %v3730 = vpop.f32.mrb[0].mxu0
        %3731 = vdwg.mxu0
        %3732 = vrot.lane.b32.xlu0 %v1196, 64
        %v3733 = vpop.permute.xlu0 %3732
        %v3736 = vsel %vm1580, %v3678, 0
        %3738 = vmatprep.subr.bf16.mxu0 0
        %3739 = vmatpush1.bf16.msra.mxu0 %v3733
        %3740 = vmatprep.subr.bf16.mxu0 0
        %3741 = vmatpush1.bf16.msra.mxu0 0
        %3742 = vmatprep.subr.bf16.mxu0 0
        %3743 = vmatpush1.bf16.msra.mxu0 0
        %3744 = vmatprep.subr.bf16.mxu0 0
        %3745 = vmatpush1.bf16.msra.mxu0 0
        %3746 = vmatprep.subr.bf16.mxu0 0
        %3747 = vmatpush1.bf16.msra.mxu0 0
        %3748 = vmatprep.subr.bf16.mxu0 0
        %3749 = vmatpush1.bf16.msra.mxu0 0
        %3750 = vmatprep.subr.bf16.mxu0 0
        %3751 = vmatpush1.bf16.msra.mxu0 0
        %3752 = vmatprep.subr.bf16.mxu0 0
        %3753 = vmatpush1.bf16.msra.mxu0 0
        %3754 = vmatprep.subr.bf16.mxu0 0
        %3755 = vmatpush1.bf16.msra.mxu0 0
        %3756 = vmatprep.subr.bf16.mxu0 0
        %3757 = vmatpush1.bf16.msra.mxu0 0
        %3758 = vmatprep.subr.bf16.mxu0 0
        %3759 = vmatpush1.bf16.msra.mxu0 0
        %3760 = vmatprep.subr.bf16.mxu0 0
        %3761 = vmatpush1.bf16.msra.mxu0 0
        %3762 = vmatprep.subr.bf16.mxu0 0
        %3763 = vmatpush1.bf16.msra.mxu0 0
        %3764 = vmatprep.subr.bf16.mxu0 0
        %3765 = vmatpush1.bf16.msra.mxu0 0
        %3766 = vmatprep.subr.bf16.mxu0 0
        %3767 = vmatpush1.bf16.msra.mxu0 0
        %3768 = vmatprep.subr.bf16.mxu0 0
        %3769 = vmatpush1.bf16.msra.mxu0 0
        %3770 = vmatprep.mubr.bf16.mxu0 0
        %3771 = vmatmul.mubr.bf16.gmra.mrb[0].mxu0 %v3736
        %v3772 = vpop.f32.mrb[0].mxu0
        %v3773 = vadd.f32 0.0, %v3772
        %v3774 = vpop.f32.mrb[0].mxu0
        %v3775 = vpop.f32.mrb[0].mxu0
        %v3776 = vadd.f32 0.0, %v3775
        %v3777 = vpop.f32.mrb[0].mxu0
        %3778 = vdwg.mxu0
        %3779 = vrot.lane.b32.xlu0 %v1197, 64
        %v3780 = vpop.permute.xlu0 %3779
        %v3783 = vsel %vm1580, %v3679, 0
        %3785 = vmatprep.subr.bf16.mxu0 0
        %3786 = vmatpush1.bf16.msra.mxu0 %v3780
        %3787 = vmatprep.subr.bf16.mxu0 0
        %3788 = vmatpush1.bf16.msra.mxu0 0
        %3789 = vmatprep.subr.bf16.mxu0 0
        %3790 = vmatpush1.bf16.msra.mxu0 0
        %3791 = vmatprep.subr.bf16.mxu0 0
        %3792 = vmatpush1.bf16.msra.mxu0 0
        %3793 = vmatprep.subr.bf16.mxu0 0
        %3794 = vmatpush1.bf16.msra.mxu0 0
        %3795 = vmatprep.subr.bf16.mxu0 0
        %3796 = vmatpush1.bf16.msra.mxu0 0
        %3797 = vmatprep.subr.bf16.mxu0 0
        %3798 = vmatpush1.bf16.msra.mxu0 0
        %3799 = vmatprep.subr.bf16.mxu0 0
        %3800 = vmatpush1.bf16.msra.mxu0 0
        %3801 = vmatprep.subr.bf16.mxu0 0
        %3802 = vmatpush1.bf16.msra.mxu0 0
        %3803 = vmatprep.subr.bf16.mxu0 0
        %3804 = vmatpush1.bf16.msra.mxu0 0
        %3805 = vmatprep.subr.bf16.mxu0 0
        %3806 = vmatpush1.bf16.msra.mxu0 0
        %3807 = vmatprep.subr.bf16.mxu0 0
        %3808 = vmatpush1.bf16.msra.mxu0 0
        %3809 = vmatprep.subr.bf16.mxu0 0
        %3810 = vmatpush1.bf16.msra.mxu0 0
        %3811 = vmatprep.subr.bf16.mxu0 0
        %3812 = vmatpush1.bf16.msra.mxu0 0
        %3813 = vmatprep.subr.bf16.mxu0 0
        %3814 = vmatpush1.bf16.msra.mxu0 0
        %3815 = vmatprep.subr.bf16.mxu0 0
        %3816 = vmatpush1.bf16.msra.mxu0 0
        %3817 = vmatprep.mubr.bf16.mxu0 0
        %3818 = vmatmul.mubr.bf16.gmra.mrb[0].mxu0 %v3783
        %v3819 = vpop.f32.mrb[0].mxu0
        %v3820 = vadd.f32 0.0, %v3819
        %v3821 = vpop.f32.mrb[0].mxu0
        %v3822 = vpop.f32.mrb[0].mxu0
        %v3823 = vadd.f32 0.0, %v3822
        %v3824 = vpop.f32.mrb[0].mxu0
        %3825 = vdwg.mxu0
        %3826 = vrot.lane.b32.xlu0 %v1198, 64
        %v3827 = vpop.permute.xlu0 %3826
        %v3830 = vsel %vm1580, %v3680, 0
        %3832 = vmatprep.subr.bf16.mxu0 0
        %3833 = vmatpush1.bf16.msra.mxu0 %v3827
        %3834 = vmatprep.subr.bf16.mxu0 0
        %3835 = vmatpush1.bf16.msra.mxu0 0
        %3836 = vmatprep.subr.bf16.mxu0 0
        %3837 = vmatpush1.bf16.msra.mxu0 0
        %3838 = vmatprep.subr.bf16.mxu0 0
        %3839 = vmatpush1.bf16.msra.mxu0 0
        %3840 = vmatprep.subr.bf16.mxu0 0
        %3841 = vmatpush1.bf16.msra.mxu0 0
        %3842 = vmatprep.subr.bf16.mxu0 0
        %3843 = vmatpush1.bf16.msra.mxu0 0
        %3844 = vmatprep.subr.bf16.mxu0 0
        %3845 = vmatpush1.bf16.msra.mxu0 0
        %3846 = vmatprep.subr.bf16.mxu0 0
        %3847 = vmatpush1.bf16.msra.mxu0 0
        %3848 = vmatprep.subr.bf16.mxu0 0
        %3849 = vmatpush1.bf16.msra.mxu0 0
        %3850 = vmatprep.subr.bf16.mxu0 0
        %3851 = vmatpush1.bf16.msra.mxu0 0
        %3852 = vmatprep.subr.bf16.mxu0 0
        %3853 = vmatpush1.bf16.msra.mxu0 0
        %3854 = vmatprep.subr.bf16.mxu0 0
        %3855 = vmatpush1.bf16.msra.mxu0 0
        %3856 = vmatprep.subr.bf16.mxu0 0
        %3857 = vmatpush1.bf16.msra.mxu0 0
        %3858 = vmatprep.subr.bf16.mxu0 0
        %3859 = vmatpush1.bf16.msra.mxu0 0
        %3860 = vmatprep.subr.bf16.mxu0 0
        %3861 = vmatpush1.bf16.msra.mxu0 0
        %3862 = vmatprep.subr.bf16.mxu0 0
        %3863 = vmatpush1.bf16.msra.mxu0 0
        %3864 = vmatprep.mubr.bf16.mxu0 0
        %3865 = vmatmul.mubr.bf16.gmra.mrb[0].mxu0 %v3830
        %v3866 = vpop.f32.mrb[0].mxu0
        %v3867 = vadd.f32 0.0, %v3866
        %v3868 = vpop.f32.mrb[0].mxu0
        %v3869 = vpop.f32.mrb[0].mxu0
        %v3870 = vadd.f32 0.0, %v3869
        %v3871 = vpop.f32.mrb[0].mxu0
        %3872 = vdwg.mxu0
        %3873 = vrot.lane.b32.xlu0 %v1199, 64
        %v3874 = vpop.permute.xlu0 %3873
        %v3877 = vsel %vm1580, %v3681, 0
        %3879 = vmatprep.subr.bf16.mxu0 0
        %3880 = vmatpush1.bf16.msra.mxu0 %v3874
        %3881 = vmatprep.subr.bf16.mxu0 0
        %3882 = vmatpush1.bf16.msra.mxu0 0
        %3883 = vmatprep.subr.bf16.mxu0 0
        %3884 = vmatpush1.bf16.msra.mxu0 0
        %3885 = vmatprep.subr.bf16.mxu0 0
        %3886 = vmatpush1.bf16.msra.mxu0 0
        %3887 = vmatprep.subr.bf16.mxu0 0
        %3888 = vmatpush1.bf16.msra.mxu0 0
        %3889 = vmatprep.subr.bf16.mxu0 0
        %3890 = vmatpush1.bf16.msra.mxu0 0
        %3891 = vmatprep.subr.bf16.mxu0 0
        %3892 = vmatpush1.bf16.msra.mxu0 0
        %3893 = vmatprep.subr.bf16.mxu0 0
        %3894 = vmatpush1.bf16.msra.mxu0 0
        %3895 = vmatprep.subr.bf16.mxu0 0
        %3896 = vmatpush1.bf16.msra.mxu0 0
        %3897 = vmatprep.subr.bf16.mxu0 0
        %3898 = vmatpush1.bf16.msra.mxu0 0
        %3899 = vmatprep.subr.bf16.mxu0 0
        %3900 = vmatpush1.bf16.msra.mxu0 0
        %3901 = vmatprep.subr.bf16.mxu0 0
        %3902 = vmatpush1.bf16.msra.mxu0 0
        %3903 = vmatprep.subr.bf16.mxu0 0
        %3904 = vmatpush1.bf16.msra.mxu0 0
        %3905 = vmatprep.subr.bf16.mxu0 0
        %3906 = vmatpush1.bf16.msra.mxu0 0
        %3907 = vmatprep.subr.bf16.mxu0 0
        %3908 = vmatpush1.bf16.msra.mxu0 0
        %3909 = vmatprep.subr.bf16.mxu0 0
        %3910 = vmatpush1.bf16.msra.mxu0 0
        %3911 = vmatprep.mubr.bf16.mxu0 0
        %3912 = vmatmul.mubr.bf16.gmra.mrb[0].mxu0 %v3877
        %v3913 = vpop.f32.mrb[0].mxu0
        %v3914 = vadd.f32 0.0, %v3913
        %v3915 = vpop.f32.mrb[0].mxu0
        %v3916 = vpop.f32.mrb[0].mxu0
        %v3917 = vadd.f32 0.0, %v3916
        %v3918 = vpop.f32.mrb[0].mxu0
        %3919 = vdwg.mxu0
        %3920 = vrot.lane.b32.xlu0 %v1200, 64
        %v3921 = vpop.permute.xlu0 %3920
        %v3924 = vsel %vm1580, %v3682, 0
        %3926 = vmatprep.subr.bf16.mxu0 0
        %3927 = vmatpush1.bf16.msra.mxu0 %v3921
        %3928 = vmatprep.subr.bf16.mxu0 0
        %3929 = vmatpush1.bf16.msra.mxu0 0
        %3930 = vmatprep.subr.bf16.mxu0 0
        %3931 = vmatpush1.bf16.msra.mxu0 0
        %3932 = vmatprep.subr.bf16.mxu0 0
        %3933 = vmatpush1.bf16.msra.mxu0 0
        %3934 = vmatprep.subr.bf16.mxu0 0
        %3935 = vmatpush1.bf16.msra.mxu0 0
        %3936 = vmatprep.subr.bf16.mxu0 0
        %3937 = vmatpush1.bf16.msra.mxu0 0
        %3938 = vmatprep.subr.bf16.mxu0 0
        %3939 = vmatpush1.bf16.msra.mxu0 0
        %3940 = vmatprep.subr.bf16.mxu0 0
        %3941 = vmatpush1.bf16.msra.mxu0 0
        %3942 = vmatprep.subr.bf16.mxu0 0
        %3943 = vmatpush1.bf16.msra.mxu0 0
        %3944 = vmatprep.subr.bf16.mxu0 0
        %3945 = vmatpush1.bf16.msra.mxu0 0
        %3946 = vmatprep.subr.bf16.mxu0 0
        %3947 = vmatpush1.bf16.msra.mxu0 0
        %3948 = vmatprep.subr.bf16.mxu0 0
        %3949 = vmatpush1.bf16.msra.mxu0 0
        %3950 = vmatprep.subr.bf16.mxu0 0
        %3951 = vmatpush1.bf16.msra.mxu0 0
        %3952 = vmatprep.subr.bf16.mxu0 0
        %3953 = vmatpush1.bf16.msra.mxu0 0
        %3954 = vmatprep.subr.bf16.mxu0 0
        %3955 = vmatpush1.bf16.msra.mxu0 0
        %3956 = vmatprep.subr.bf16.mxu0 0
        %3957 = vmatpush1.bf16.msra.mxu0 0
        %3958 = vmatprep.mubr.bf16.mxu0 0
        %3959 = vmatmul.mubr.bf16.gmra.mrb[0].mxu0 %v3924
        %v3960 = vpop.f32.mrb[0].mxu0
        %v3961 = vadd.f32 0.0, %v3960
        %v3962 = vpop.f32.mrb[0].mxu0
        %v3963 = vpop.f32.mrb[0].mxu0
        %v3964 = vadd.f32 0.0, %v3963
        %v3965 = vpop.f32.mrb[0].mxu0
        %3966 = vdwg.mxu0
        %3967 = vrot.lane.b32.xlu0 %v1201, 64
        %v3968 = vpop.permute.xlu0 %3967
        %v3971 = vsel %vm1580, %v3683, 0
        %3973 = vmatprep.subr.bf16.mxu0 0
        %3974 = vmatpush1.bf16.msra.mxu0 %v3968
        %3975 = vmatprep.subr.bf16.mxu0 0
        %3976 = vmatpush1.bf16.msra.mxu0 0
        %3977 = vmatprep.subr.bf16.mxu0 0
        %3978 = vmatpush1.bf16.msra.mxu0 0
        %3979 = vmatprep.subr.bf16.mxu0 0
        %3980 = vmatpush1.bf16.msra.mxu0 0
        %3981 = vmatprep.subr.bf16.mxu0 0
        %3982 = vmatpush1.bf16.msra.mxu0 0
        %3983 = vmatprep.subr.bf16.mxu0 0
        %3984 = vmatpush1.bf16.msra.mxu0 0
        %3985 = vmatprep.subr.bf16.mxu0 0
        %3986 = vmatpush1.bf16.msra.mxu0 0
        %3987 = vmatprep.subr.bf16.mxu0 0
        %3988 = vmatpush1.bf16.msra.mxu0 0
        %3989 = vmatprep.subr.bf16.mxu0 0
        %3990 = vmatpush1.bf16.msra.mxu0 0
        %3991 = vmatprep.subr.bf16.mxu0 0
        %3992 = vmatpush1.bf16.msra.mxu0 0
        %3993 = vmatprep.subr.bf16.mxu0 0
        %3994 = vmatpush1.bf16.msra.mxu0 0
        %3995 = vmatprep.subr.bf16.mxu0 0
        %3996 = vmatpush1.bf16.msra.mxu0 0
        %3997 = vmatprep.subr.bf16.mxu0 0
        %3998 = vmatpush1.bf16.msra.mxu0 0
        %3999 = vmatprep.subr.bf16.mxu0 0
        %4000 = vmatpush1.bf16.msra.mxu0 0
        %4001 = vmatprep.subr.bf16.mxu0 0
        %4002 = vmatpush1.bf16.msra.mxu0 0
        %4003 = vmatprep.subr.bf16.mxu0 0
        %4004 = vmatpush1.bf16.msra.mxu0 0
        %4005 = vmatprep.mubr.bf16.mxu0 0
        %4006 = vmatmul.mubr.bf16.gmra.mrb[0].mxu0 %v3971
        %v4007 = vpop.f32.mrb[0].mxu0
        %v4008 = vadd.f32 0.0, %v4007
        %v4009 = vpop.f32.mrb[0].mxu0
        %v4010 = vpop.f32.mrb[0].mxu0
        %v4011 = vadd.f32 0.0, %v4010
        %v4012 = vpop.f32.mrb[0].mxu0
        %4013 = vdwg.mxu0
        %4014 = vrot.lane.b32.xlu0 %v1202, 64
        %v4015 = vpop.permute.xlu0 %4014
        %v4018 = vsel %vm1580, %v3684, 0
        %4020 = vmatprep.subr.bf16.mxu0 0
        %4021 = vmatpush1.bf16.msra.mxu0 %v4015
        %4022 = vmatprep.subr.bf16.mxu0 0
        %4023 = vmatpush1.bf16.msra.mxu0 0
        %4024 = vmatprep.subr.bf16.mxu0 0
        %4025 = vmatpush1.bf16.msra.mxu0 0
        %4026 = vmatprep.subr.bf16.mxu0 0
        %4027 = vmatpush1.bf16.msra.mxu0 0
        %4028 = vmatprep.subr.bf16.mxu0 0
        %4029 = vmatpush1.bf16.msra.mxu0 0
        %4030 = vmatprep.subr.bf16.mxu0 0
        %4031 = vmatpush1.bf16.msra.mxu0 0
        %4032 = vmatprep.subr.bf16.mxu0 0
        %4033 = vmatpush1.bf16.msra.mxu0 0
        %4034 = vmatprep.subr.bf16.mxu0 0
        %4035 = vmatpush1.bf16.msra.mxu0 0
        %4036 = vmatprep.subr.bf16.mxu0 0
        %4037 = vmatpush1.bf16.msra.mxu0 0
        %4038 = vmatprep.subr.bf16.mxu0 0
        %4039 = vmatpush1.bf16.msra.mxu0 0
        %4040 = vmatprep.subr.bf16.mxu0 0
        %4041 = vmatpush1.bf16.msra.mxu0 0
        %4042 = vmatprep.subr.bf16.mxu0 0
        %4043 = vmatpush1.bf16.msra.mxu0 0
        %4044 = vmatprep.subr.bf16.mxu0 0
        %4045 = vmatpush1.bf16.msra.mxu0 0
        %4046 = vmatprep.subr.bf16.mxu0 0
        %4047 = vmatpush1.bf16.msra.mxu0 0
        %4048 = vmatprep.subr.bf16.mxu0 0
        %4049 = vmatpush1.bf16.msra.mxu0 0
        %4050 = vmatprep.subr.bf16.mxu0 0
        %4051 = vmatpush1.bf16.msra.mxu0 0
        %4052 = vmatprep.mubr.bf16.mxu0 0
        %4053 = vmatmul.mubr.bf16.gmra.mrb[0].mxu0 %v4018
        %v4054 = vpop.f32.mrb[0].mxu0
        %v4055 = vadd.f32 0.0, %v4054
        %v4056 = vpop.f32.mrb[0].mxu0
        %v4057 = vpop.f32.mrb[0].mxu0
        %v4058 = vadd.f32 0.0, %v4057
        %v4059 = vpop.f32.mrb[0].mxu0
        %4060 = vdwg.mxu0
        %v4061 = vrcp.pop %v3631
        %v4062 = vrcp.pop %v3634
        %v4063 = vrcp.pop %v3637
        %v4064 = vrcp.pop %v3640
        %v4065 = vrcp.pop %v3643
        %v4066 = vrcp.pop %v3646
        %v4067 = vrcp.pop %v3649
        %v4068 = vrcp.pop %v3652
        %v4069 = vrcp.pop %v3655
        %v4070 = vrcp.pop %v3658
        %v4071 = vrcp.pop %v3661
        %v4072 = vrcp.pop %v3664
        %v4073 = vrcp.pop %v3667
        %v4074 = vrcp.pop %v3670
        %v4075 = vrcp.pop %v3673
        %v4076 = vrcp.pop %v3676
        %v4077 = vmul.f32 %v3726, %v4061
        %v4078 = vmul.f32 %v3729, %v4062
        %v4079 = vmul.f32 %v3773, %v4063
        %v4080 = vmul.f32 %v3776, %v4064
        %v4081 = vmul.f32 %v3820, %v4065
        %v4082 = vmul.f32 %v3823, %v4066
        %v4083 = vmul.f32 %v3867, %v4067
        %v4084 = vmul.f32 %v3870, %v4068
        %v4085 = vmul.f32 %v3914, %v4069
        %v4086 = vmul.f32 %v3917, %v4070
        %v4087 = vmul.f32 %v3961, %v4071
        %v4088 = vmul.f32 %v3964, %v4072
        %v4089 = vmul.f32 %v4008, %v4073
        %v4090 = vmul.f32 %v4011, %v4074
        %v4091 = vmul.f32 %v4055, %v4075
        %v4092 = vmul.f32 %v4058, %v4076
        %v4093 = vpack.c.bf16 %v4078, %v4077
        %v4094 = vpack.c.bf16 %v4080, %v4079
        %v4095 = vpack.c.bf16 %v4082, %v4081
        %v4096 = vpack.c.bf16 %v4084, %v4083
        %v4097 = vpack.c.bf16 %v4086, %v4085
        %v4098 = vpack.c.bf16 %v4088, %v4087
        %v4099 = vpack.c.bf16 %v4090, %v4089
        %v4100 = vpack.c.bf16 %v4092, %v4091
        %4101 = vrot.lane.b32.xlu0 %v1179, 32
        %v4102 = vpop.permute.xlu0 %4101
        %4103 = vrot.lane.b32.xlu0 %v1187, 32
        %v4104 = vpop.permute.xlu0 %4103
        %v4106 = vsel %vm1203, %v4102, 0
        %v4109 = vsel %vm1203, %v4104, 0
        %4111 = vmatprep.subr.bf16.mxu0 0
        %4112 = vmatpush1.bf16.xpose.msra.mxu0 %v4109
        %4113 = vmatprep.subr.bf16.mxu0 0
        %4114 = vmatpush1.bf16.xpose.msra.mxu0 0
        %4115 = vmatprep.subr.bf16.mxu0 0
        %4116 = vmatpush1.bf16.xpose.msra.mxu0 0
        %4117 = vmatprep.subr.bf16.mxu0 0
        %4118 = vmatpush1.bf16.xpose.msra.mxu0 0
        %4119 = vmatprep.subr.bf16.mxu0 0
        %4120 = vmatpush1.bf16.xpose.msra.mxu0 0
        %4121 = vmatprep.subr.bf16.mxu0 0
        %4122 = vmatpush1.bf16.xpose.msra.mxu0 0
        %4123 = vmatprep.subr.bf16.mxu0 0
        %4124 = vmatpush1.bf16.xpose.msra.mxu0 0
        %4125 = vmatprep.subr.bf16.mxu0 0
        %4126 = vmatpush1.bf16.xpose.msra.mxu0 0
        %4127 = vmatprep.subr.bf16.mxu0 0
        %4128 = vmatpush1.bf16.xpose.msra.mxu0 0
        %4129 = vmatprep.subr.bf16.mxu0 0
        %4130 = vmatpush1.bf16.xpose.msra.mxu0 0
        %4131 = vmatprep.subr.bf16.mxu0 0
        %4132 = vmatpush1.bf16.xpose.msra.mxu0 0
        %4133 = vmatprep.subr.bf16.mxu0 0
        %4134 = vmatpush1.bf16.xpose.msra.mxu0 0
        %4135 = vmatprep.subr.bf16.mxu0 0
        %4136 = vmatpush1.bf16.xpose.msra.mxu0 0
        %4137 = vmatprep.subr.bf16.mxu0 0
        %4138 = vmatpush1.bf16.xpose.msra.mxu0 0
        %4139 = vmatprep.subr.bf16.mxu0 0
        %4140 = vmatpush1.bf16.xpose.msra.mxu0 0
        %4141 = vmatprep.subr.bf16.mxu0 0
        %4142 = vmatpush1.bf16.xpose.msra.mxu0 0
        %4143 = vmatprep.mubr.bf16.mxu0 0
        %4144 = vmatmul.mubr.bf16.gmra.mrb[0].mxu0 %v4106
        %v4145 = vpop.f32.mrb[0].mxu0
        %v4146 = vadd.f32 0.0, %v4145
        %v4147 = vpop.f32.mrb[0].mxu0
        %v4148 = vpop.f32.mrb[0].mxu0
        %v4149 = vadd.f32 0.0, %v4148
        %v4150 = vpop.f32.mrb[0].mxu0
        %4151 = vdwg.mxu0
        %4152 = vrot.lane.b32.xlu0 %v1180, 32
        %v4153 = vpop.permute.xlu0 %4152
        %4154 = vrot.lane.b32.xlu0 %v1188, 32
        %v4155 = vpop.permute.xlu0 %4154
        %v4157 = vsel %vm1203, %v4153, 0
        %v4160 = vsel %vm1203, %v4155, 0
        %4162 = vmatprep.subr.bf16.mxu0 0
        %4163 = vmatpush1.bf16.xpose.msra.mxu0 %v4160
        %4164 = vmatprep.subr.bf16.mxu0 0
        %4165 = vmatpush1.bf16.xpose.msra.mxu0 0
        %4166 = vmatprep.subr.bf16.mxu0 0
        %4167 = vmatpush1.bf16.xpose.msra.mxu0 0
        %4168 = vmatprep.subr.bf16.mxu0 0
        %4169 = vmatpush1.bf16.xpose.msra.mxu0 0
        %4170 = vmatprep.subr.bf16.mxu0 0
        %4171 = vmatpush1.bf16.xpose.msra.mxu0 0
        %4172 = vmatprep.subr.bf16.mxu0 0
        %4173 = vmatpush1.bf16.xpose.msra.mxu0 0
        %4174 = vmatprep.subr.bf16.mxu0 0
        %4175 = vmatpush1.bf16.xpose.msra.mxu0 0
        %4176 = vmatprep.subr.bf16.mxu0 0
        %4177 = vmatpush1.bf16.xpose.msra.mxu0 0
        %4178 = vmatprep.subr.bf16.mxu0 0
        %4179 = vmatpush1.bf16.xpose.msra.mxu0 0
        %4180 = vmatprep.subr.bf16.mxu0 0
        %4181 = vmatpush1.bf16.xpose.msra.mxu0 0
        %4182 = vmatprep.subr.bf16.mxu0 0
        %4183 = vmatpush1.bf16.xpose.msra.mxu0 0
        %4184 = vmatprep.subr.bf16.mxu0 0
        %4185 = vmatpush1.bf16.xpose.msra.mxu0 0
        %4186 = vmatprep.subr.bf16.mxu0 0
        %4187 = vmatpush1.bf16.xpose.msra.mxu0 0
        %4188 = vmatprep.subr.bf16.mxu0 0
        %4189 = vmatpush1.bf16.xpose.msra.mxu0 0
        %4190 = vmatprep.subr.bf16.mxu0 0
        %4191 = vmatpush1.bf16.xpose.msra.mxu0 0
        %4192 = vmatprep.subr.bf16.mxu0 0
        %4193 = vmatpush1.bf16.xpose.msra.mxu0 0
        %4194 = vmatprep.mubr.bf16.mxu0 0
        %4195 = vmatmul.mubr.bf16.gmra.mrb[0].mxu0 %v4157
        %v4196 = vpop.f32.mrb[0].mxu0
        %v4197 = vadd.f32 0.0, %v4196
        %v4198 = vpop.f32.mrb[0].mxu0
        %v4199 = vpop.f32.mrb[0].mxu0
        %v4200 = vadd.f32 0.0, %v4199
        %v4201 = vpop.f32.mrb[0].mxu0
        %4202 = vdwg.mxu0
        %4203 = vrot.lane.b32.xlu0 %v1181, 32
        %v4204 = vpop.permute.xlu0 %4203
        %4205 = vrot.lane.b32.xlu0 %v1189, 32
        %v4206 = vpop.permute.xlu0 %4205
        %v4208 = vsel %vm1203, %v4204, 0
        %v4211 = vsel %vm1203, %v4206, 0
        %4213 = vmatprep.subr.bf16.mxu0 0
        %4214 = vmatpush1.bf16.xpose.msra.mxu0 %v4211
        %4215 = vmatprep.subr.bf16.mxu0 0
        %4216 = vmatpush1.bf16.xpose.msra.mxu0 0
        %4217 = vmatprep.subr.bf16.mxu0 0
        %4218 = vmatpush1.bf16.xpose.msra.mxu0 0
        %4219 = vmatprep.subr.bf16.mxu0 0
        %4220 = vmatpush1.bf16.xpose.msra.mxu0 0
        %4221 = vmatprep.subr.bf16.mxu0 0
        %4222 = vmatpush1.bf16.xpose.msra.mxu0 0
        %4223 = vmatprep.subr.bf16.mxu0 0
        %4224 = vmatpush1.bf16.xpose.msra.mxu0 0
        %4225 = vmatprep.subr.bf16.mxu0 0
        %4226 = vmatpush1.bf16.xpose.msra.mxu0 0
        %4227 = vmatprep.subr.bf16.mxu0 0
        %4228 = vmatpush1.bf16.xpose.msra.mxu0 0
        %4229 = vmatprep.subr.bf16.mxu0 0
        %4230 = vmatpush1.bf16.xpose.msra.mxu0 0
        %4231 = vmatprep.subr.bf16.mxu0 0
        %4232 = vmatpush1.bf16.xpose.msra.mxu0 0
        %4233 = vmatprep.subr.bf16.mxu0 0
        %4234 = vmatpush1.bf16.xpose.msra.mxu0 0
        %4235 = vmatprep.subr.bf16.mxu0 0
        %4236 = vmatpush1.bf16.xpose.msra.mxu0 0
        %4237 = vmatprep.subr.bf16.mxu0 0
        %4238 = vmatpush1.bf16.xpose.msra.mxu0 0
        %4239 = vmatprep.subr.bf16.mxu0 0
        %4240 = vmatpush1.bf16.xpose.msra.mxu0 0
        %4241 = vmatprep.subr.bf16.mxu0 0
        %4242 = vmatpush1.bf16.xpose.msra.mxu0 0
        %4243 = vmatprep.subr.bf16.mxu0 0
        %4244 = vmatpush1.bf16.xpose.msra.mxu0 0
        %4245 = vmatprep.mubr.bf16.mxu0 0
        %4246 = vmatmul.mubr.bf16.gmra.mrb[0].mxu0 %v4208
        %v4247 = vpop.f32.mrb[0].mxu0
        %v4248 = vadd.f32 0.0, %v4247
        %v4249 = vpop.f32.mrb[0].mxu0
        %v4250 = vpop.f32.mrb[0].mxu0
        %v4251 = vadd.f32 0.0, %v4250
        %v4252 = vpop.f32.mrb[0].mxu0
        %4253 = vdwg.mxu0
        %4254 = vrot.lane.b32.xlu0 %v1182, 32
        %v4255 = vpop.permute.xlu0 %4254
        %4256 = vrot.lane.b32.xlu0 %v1190, 32
        %v4257 = vpop.permute.xlu0 %4256
        %v4259 = vsel %vm1203, %v4255, 0
        %v4262 = vsel %vm1203, %v4257, 0
        %4264 = vmatprep.subr.bf16.mxu0 0
        %4265 = vmatpush1.bf16.xpose.msra.mxu0 %v4262
        %4266 = vmatprep.subr.bf16.mxu0 0
        %4267 = vmatpush1.bf16.xpose.msra.mxu0 0
        %4268 = vmatprep.subr.bf16.mxu0 0
        %4269 = vmatpush1.bf16.xpose.msra.mxu0 0
        %4270 = vmatprep.subr.bf16.mxu0 0
        %4271 = vmatpush1.bf16.xpose.msra.mxu0 0
        %4272 = vmatprep.subr.bf16.mxu0 0
        %4273 = vmatpush1.bf16.xpose.msra.mxu0 0
        %4274 = vmatprep.subr.bf16.mxu0 0
        %4275 = vmatpush1.bf16.xpose.msra.mxu0 0
        %4276 = vmatprep.subr.bf16.mxu0 0
        %4277 = vmatpush1.bf16.xpose.msra.mxu0 0
        %4278 = vmatprep.subr.bf16.mxu0 0
        %4279 = vmatpush1.bf16.xpose.msra.mxu0 0
        %4280 = vmatprep.subr.bf16.mxu0 0
        %4281 = vmatpush1.bf16.xpose.msra.mxu0 0
        %4282 = vmatprep.subr.bf16.mxu0 0
        %4283 = vmatpush1.bf16.xpose.msra.mxu0 0
        %4284 = vmatprep.subr.bf16.mxu0 0
        %4285 = vmatpush1.bf16.xpose.msra.mxu0 0
        %4286 = vmatprep.subr.bf16.mxu0 0
        %4287 = vmatpush1.bf16.xpose.msra.mxu0 0
        %4288 = vmatprep.subr.bf16.mxu0 0
        %4289 = vmatpush1.bf16.xpose.msra.mxu0 0
        %4290 = vmatprep.subr.bf16.mxu0 0
        %4291 = vmatpush1.bf16.xpose.msra.mxu0 0
        %4292 = vmatprep.subr.bf16.mxu0 0
        %4293 = vmatpush1.bf16.xpose.msra.mxu0 0
        %4294 = vmatprep.subr.bf16.mxu0 0
        %4295 = vmatpush1.bf16.xpose.msra.mxu0 0
        %4296 = vmatprep.mubr.bf16.mxu0 0
        %4297 = vmatmul.mubr.bf16.gmra.mrb[0].mxu0 %v4259
        %v4298 = vpop.f32.mrb[0].mxu0
        %v4299 = vadd.f32 0.0, %v4298
        %v4300 = vpop.f32.mrb[0].mxu0
        %v4301 = vpop.f32.mrb[0].mxu0
        %v4302 = vadd.f32 0.0, %v4301
        %v4303 = vpop.f32.mrb[0].mxu0
        %4304 = vdwg.mxu0
        %4305 = vrot.lane.b32.xlu0 %v1183, 32
        %v4306 = vpop.permute.xlu0 %4305
        %4307 = vrot.lane.b32.xlu0 %v1191, 32
        %v4308 = vpop.permute.xlu0 %4307
        %v4310 = vsel %vm1203, %v4306, 0
        %v4313 = vsel %vm1203, %v4308, 0
        %4315 = vmatprep.subr.bf16.mxu0 0
        %4316 = vmatpush1.bf16.xpose.msra.mxu0 %v4313
        %4317 = vmatprep.subr.bf16.mxu0 0
        %4318 = vmatpush1.bf16.xpose.msra.mxu0 0
        %4319 = vmatprep.subr.bf16.mxu0 0
        %4320 = vmatpush1.bf16.xpose.msra.mxu0 0
        %4321 = vmatprep.subr.bf16.mxu0 0
        %4322 = vmatpush1.bf16.xpose.msra.mxu0 0
        %4323 = vmatprep.subr.bf16.mxu0 0
        %4324 = vmatpush1.bf16.xpose.msra.mxu0 0
        %4325 = vmatprep.subr.bf16.mxu0 0
        %4326 = vmatpush1.bf16.xpose.msra.mxu0 0
        %4327 = vmatprep.subr.bf16.mxu0 0
        %4328 = vmatpush1.bf16.xpose.msra.mxu0 0
        %4329 = vmatprep.subr.bf16.mxu0 0
        %4330 = vmatpush1.bf16.xpose.msra.mxu0 0
        %4331 = vmatprep.subr.bf16.mxu0 0
        %4332 = vmatpush1.bf16.xpose.msra.mxu0 0
        %4333 = vmatprep.subr.bf16.mxu0 0
        %4334 = vmatpush1.bf16.xpose.msra.mxu0 0
        %4335 = vmatprep.subr.bf16.mxu0 0
        %4336 = vmatpush1.bf16.xpose.msra.mxu0 0
        %4337 = vmatprep.subr.bf16.mxu0 0
        %4338 = vmatpush1.bf16.xpose.msra.mxu0 0
        %4339 = vmatprep.subr.bf16.mxu0 0
        %4340 = vmatpush1.bf16.xpose.msra.mxu0 0
        %4341 = vmatprep.subr.bf16.mxu0 0
        %4342 = vmatpush1.bf16.xpose.msra.mxu0 0
        %4343 = vmatprep.subr.bf16.mxu0 0
        %4344 = vmatpush1.bf16.xpose.msra.mxu0 0
        %4345 = vmatprep.subr.bf16.mxu0 0
        %4346 = vmatpush1.bf16.xpose.msra.mxu0 0
        %4347 = vmatprep.mubr.bf16.mxu0 0
        %4348 = vmatmul.mubr.bf16.gmra.mrb[0].mxu0 %v4310
        %v4349 = vpop.f32.mrb[0].mxu0
        %v4350 = vadd.f32 0.0, %v4349
        %v4351 = vpop.f32.mrb[0].mxu0
        %v4352 = vpop.f32.mrb[0].mxu0
        %v4353 = vadd.f32 0.0, %v4352
        %v4354 = vpop.f32.mrb[0].mxu0
        %4355 = vdwg.mxu0
        %4356 = vrot.lane.b32.xlu0 %v1184, 32
        %v4357 = vpop.permute.xlu0 %4356
        %4358 = vrot.lane.b32.xlu0 %v1192, 32
        %v4359 = vpop.permute.xlu0 %4358
        %v4361 = vsel %vm1203, %v4357, 0
        %v4364 = vsel %vm1203, %v4359, 0
        %4366 = vmatprep.subr.bf16.mxu0 0
        %4367 = vmatpush1.bf16.xpose.msra.mxu0 %v4364
        %4368 = vmatprep.subr.bf16.mxu0 0
        %4369 = vmatpush1.bf16.xpose.msra.mxu0 0
        %4370 = vmatprep.subr.bf16.mxu0 0
        %4371 = vmatpush1.bf16.xpose.msra.mxu0 0
        %4372 = vmatprep.subr.bf16.mxu0 0
        %4373 = vmatpush1.bf16.xpose.msra.mxu0 0
        %4374 = vmatprep.subr.bf16.mxu0 0
        %4375 = vmatpush1.bf16.xpose.msra.mxu0 0
        %4376 = vmatprep.subr.bf16.mxu0 0
        %4377 = vmatpush1.bf16.xpose.msra.mxu0 0
        %4378 = vmatprep.subr.bf16.mxu0 0
        %4379 = vmatpush1.bf16.xpose.msra.mxu0 0
        %4380 = vmatprep.subr.bf16.mxu0 0
        %4381 = vmatpush1.bf16.xpose.msra.mxu0 0
        %4382 = vmatprep.subr.bf16.mxu0 0
        %4383 = vmatpush1.bf16.xpose.msra.mxu0 0
        %4384 = vmatprep.subr.bf16.mxu0 0
        %4385 = vmatpush1.bf16.xpose.msra.mxu0 0
        %4386 = vmatprep.subr.bf16.mxu0 0
        %4387 = vmatpush1.bf16.xpose.msra.mxu0 0
        %4388 = vmatprep.subr.bf16.mxu0 0
        %4389 = vmatpush1.bf16.xpose.msra.mxu0 0
        %4390 = vmatprep.subr.bf16.mxu0 0
        %4391 = vmatpush1.bf16.xpose.msra.mxu0 0
        %4392 = vmatprep.subr.bf16.mxu0 0
        %4393 = vmatpush1.bf16.xpose.msra.mxu0 0
        %4394 = vmatprep.subr.bf16.mxu0 0
        %4395 = vmatpush1.bf16.xpose.msra.mxu0 0
        %4396 = vmatprep.subr.bf16.mxu0 0
        %4397 = vmatpush1.bf16.xpose.msra.mxu0 0
        %4398 = vmatprep.mubr.bf16.mxu0 0
        %4399 = vmatmul.mubr.bf16.gmra.mrb[0].mxu0 %v4361
        %v4400 = vpop.f32.mrb[0].mxu0
        %v4401 = vadd.f32 0.0, %v4400
        %v4402 = vpop.f32.mrb[0].mxu0
        %v4403 = vpop.f32.mrb[0].mxu0
        %v4404 = vadd.f32 0.0, %v4403
        %v4405 = vpop.f32.mrb[0].mxu0
        %4406 = vdwg.mxu0
        %4407 = vrot.lane.b32.xlu0 %v1185, 32
        %v4408 = vpop.permute.xlu0 %4407
        %4409 = vrot.lane.b32.xlu0 %v1193, 32
        %v4410 = vpop.permute.xlu0 %4409
        %v4412 = vsel %vm1203, %v4408, 0
        %v4415 = vsel %vm1203, %v4410, 0
        %4417 = vmatprep.subr.bf16.mxu0 0
        %4418 = vmatpush1.bf16.xpose.msra.mxu0 %v4415
        %4419 = vmatprep.subr.bf16.mxu0 0
        %4420 = vmatpush1.bf16.xpose.msra.mxu0 0
        %4421 = vmatprep.subr.bf16.mxu0 0
        %4422 = vmatpush1.bf16.xpose.msra.mxu0 0
        %4423 = vmatprep.subr.bf16.mxu0 0
        %4424 = vmatpush1.bf16.xpose.msra.mxu0 0
        %4425 = vmatprep.subr.bf16.mxu0 0
        %4426 = vmatpush1.bf16.xpose.msra.mxu0 0
        %4427 = vmatprep.subr.bf16.mxu0 0
        %4428 = vmatpush1.bf16.xpose.msra.mxu0 0
        %4429 = vmatprep.subr.bf16.mxu0 0
        %4430 = vmatpush1.bf16.xpose.msra.mxu0 0
        %4431 = vmatprep.subr.bf16.mxu0 0
        %4432 = vmatpush1.bf16.xpose.msra.mxu0 0
        %4433 = vmatprep.subr.bf16.mxu0 0
        %4434 = vmatpush1.bf16.xpose.msra.mxu0 0
        %4435 = vmatprep.subr.bf16.mxu0 0
        %4436 = vmatpush1.bf16.xpose.msra.mxu0 0
        %4437 = vmatprep.subr.bf16.mxu0 0
        %4438 = vmatpush1.bf16.xpose.msra.mxu0 0
        %4439 = vmatprep.subr.bf16.mxu0 0
        %4440 = vmatpush1.bf16.xpose.msra.mxu0 0
        %4441 = vmatprep.subr.bf16.mxu0 0
        %4442 = vmatpush1.bf16.xpose.msra.mxu0 0
        %4443 = vmatprep.subr.bf16.mxu0 0
        %4444 = vmatpush1.bf16.xpose.msra.mxu0 0
        %4445 = vmatprep.subr.bf16.mxu0 0
        %4446 = vmatpush1.bf16.xpose.msra.mxu0 0
        %4447 = vmatprep.subr.bf16.mxu0 0
        %4448 = vmatpush1.bf16.xpose.msra.mxu0 0
        %4449 = vmatprep.mubr.bf16.mxu0 0
        %4450 = vmatmul.mubr.bf16.gmra.mrb[0].mxu0 %v4412
        %v4451 = vpop.f32.mrb[0].mxu0
        %v4452 = vadd.f32 0.0, %v4451
        %v4453 = vpop.f32.mrb[0].mxu0
        %v4454 = vpop.f32.mrb[0].mxu0
        %v4455 = vadd.f32 0.0, %v4454
        %v4456 = vpop.f32.mrb[0].mxu0
        %4457 = vdwg.mxu0
        %4458 = vrot.lane.b32.xlu0 %v1186, 32
        %v4459 = vpop.permute.xlu0 %4458
        %4460 = vrot.lane.b32.xlu0 %v1194, 32
        %v4461 = vpop.permute.xlu0 %4460
        %v4463 = vsel %vm1203, %v4459, 0
        %v4466 = vsel %vm1203, %v4461, 0
        %4468 = vmatprep.subr.bf16.mxu0 0
        %4469 = vmatpush1.bf16.xpose.msra.mxu0 %v4466
        %4470 = vmatprep.subr.bf16.mxu0 0
        %4471 = vmatpush1.bf16.xpose.msra.mxu0 0
        %4472 = vmatprep.subr.bf16.mxu0 0
        %4473 = vmatpush1.bf16.xpose.msra.mxu0 0
        %4474 = vmatprep.subr.bf16.mxu0 0
        %4475 = vmatpush1.bf16.xpose.msra.mxu0 0
        %4476 = vmatprep.subr.bf16.mxu0 0
        %4477 = vmatpush1.bf16.xpose.msra.mxu0 0
        %4478 = vmatprep.subr.bf16.mxu0 0
        %4479 = vmatpush1.bf16.xpose.msra.mxu0 0
        %4480 = vmatprep.subr.bf16.mxu0 0
        %4481 = vmatpush1.bf16.xpose.msra.mxu0 0
        %4482 = vmatprep.subr.bf16.mxu0 0
        %4483 = vmatpush1.bf16.xpose.msra.mxu0 0
        %4484 = vmatprep.subr.bf16.mxu0 0
        %4485 = vmatpush1.bf16.xpose.msra.mxu0 0
        %4486 = vmatprep.subr.bf16.mxu0 0
        %4487 = vmatpush1.bf16.xpose.msra.mxu0 0
        %4488 = vmatprep.subr.bf16.mxu0 0
        %4489 = vmatpush1.bf16.xpose.msra.mxu0 0
        %4490 = vmatprep.subr.bf16.mxu0 0
        %4491 = vmatpush1.bf16.xpose.msra.mxu0 0
        %4492 = vmatprep.subr.bf16.mxu0 0
        %4493 = vmatpush1.bf16.xpose.msra.mxu0 0
        %4494 = vmatprep.subr.bf16.mxu0 0
        %4495 = vmatpush1.bf16.xpose.msra.mxu0 0
        %4496 = vmatprep.subr.bf16.mxu0 0
        %4497 = vmatpush1.bf16.xpose.msra.mxu0 0
        %4498 = vmatprep.subr.bf16.mxu0 0
        %4499 = vmatpush1.bf16.xpose.msra.mxu0 0
        %4500 = vmatprep.mubr.bf16.mxu0 0
        %4501 = vmatmul.mubr.bf16.gmra.mrb[0].mxu0 %v4463
        %v4502 = vpop.f32.mrb[0].mxu0
        %v4503 = vadd.f32 0.0, %v4502
        %v4504 = vpop.f32.mrb[0].mxu0
        %v4505 = vpop.f32.mrb[0].mxu0
        %v4506 = vadd.f32 0.0, %v4505
        %v4507 = vpop.f32.mrb[0].mxu0
        %4508 = vdwg.mxu0
        %v4509 = vsel %vm1580, %v4146, -inf
        %4510 = vmax.xlane.f32.xlu0 %v4509
        %v4511 = vpop.xlane.xlu0 %4510
        %v4512 = vsel %vm1580, %v4149, -inf
        %4513 = vmax.xlane.f32.xlu0 %v4512
        %v4514 = vpop.xlane.xlu0 %4513
        %v4515 = vsel %vm1580, %v4197, -inf
        %4516 = vmax.xlane.f32.xlu0 %v4515
        %v4517 = vpop.xlane.xlu0 %4516
        %v4518 = vsel %vm1580, %v4200, -inf
        %4519 = vmax.xlane.f32.xlu0 %v4518
        %v4520 = vpop.xlane.xlu0 %4519
        %v4521 = vsel %vm1580, %v4248, -inf
        %4522 = vmax.xlane.f32.xlu0 %v4521
        %v4523 = vpop.xlane.xlu0 %4522
        %v4524 = vsel %vm1580, %v4251, -inf
        %4525 = vmax.xlane.f32.xlu0 %v4524
        %v4526 = vpop.xlane.xlu0 %4525
        %v4527 = vsel %vm1580, %v4299, -inf
        %4528 = vmax.xlane.f32.xlu0 %v4527
        %v4529 = vpop.xlane.xlu0 %4528
        %v4530 = vsel %vm1580, %v4302, -inf
        %4531 = vmax.xlane.f32.xlu0 %v4530
        %v4532 = vpop.xlane.xlu0 %4531
        %v4533 = vsel %vm1580, %v4350, -inf
        %4534 = vmax.xlane.f32.xlu0 %v4533
        %v4535 = vpop.xlane.xlu0 %4534
        %v4536 = vsel %vm1580, %v4353, -inf
        %4537 = vmax.xlane.f32.xlu0 %v4536
        %v4538 = vpop.xlane.xlu0 %4537
        %v4539 = vsel %vm1580, %v4401, -inf
        %4540 = vmax.xlane.f32.xlu0 %v4539
        %v4541 = vpop.xlane.xlu0 %4540
        %v4542 = vsel %vm1580, %v4404, -inf
        %4543 = vmax.xlane.f32.xlu0 %v4542
        %v4544 = vpop.xlane.xlu0 %4543
        %v4545 = vsel %vm1580, %v4452, -inf
        %4546 = vmax.xlane.f32.xlu0 %v4545
        %v4547 = vpop.xlane.xlu0 %4546
        %v4548 = vsel %vm1580, %v4455, -inf
        %4549 = vmax.xlane.f32.xlu0 %v4548
        %v4550 = vpop.xlane.xlu0 %4549
        %v4551 = vsel %vm1580, %v4503, -inf
        %4552 = vmax.xlane.f32.xlu0 %v4551
        %v4553 = vpop.xlane.xlu0 %4552
        %v4554 = vsel %vm1580, %v4506, -inf
        %4555 = vmax.xlane.f32.xlu0 %v4554
        %v4556 = vpop.xlane.xlu0 %4555
        %v4557 = vsub.f32 %v4146, %v4511
        %v4558 = vsub.f32 %v4149, %v4514
        %v4559 = vsub.f32 %v4197, %v4517
        %v4560 = vsub.f32 %v4200, %v4520
        %v4561 = vsub.f32 %v4248, %v4523
        %v4562 = vsub.f32 %v4251, %v4526
        %v4563 = vsub.f32 %v4299, %v4529
        %v4564 = vsub.f32 %v4302, %v4532
        %v4565 = vsub.f32 %v4350, %v4535
        %v4566 = vsub.f32 %v4353, %v4538
        %v4567 = vsub.f32 %v4401, %v4541
        %v4568 = vsub.f32 %v4404, %v4544
        %v4569 = vsub.f32 %v4452, %v4547
        %v4570 = vsub.f32 %v4455, %v4550
        %v4571 = vsub.f32 %v4503, %v4553
        %v4572 = vsub.f32 %v4506, %v4556
        %v4573 = vmul.f32 %v4557, 1.442695
        %v4574 = vpow.pop %v4573
        %v4575 = vmul.f32 %v4558, 1.442695
        %v4576 = vpow.pop %v4575
        %v4577 = vmul.f32 %v4559, 1.442695
        %v4578 = vpow.pop %v4577
        %v4579 = vmul.f32 %v4560, 1.442695
        %v4580 = vpow.pop %v4579
        %v4581 = vmul.f32 %v4561, 1.442695
        %v4582 = vpow.pop %v4581
        %v4583 = vmul.f32 %v4562, 1.442695
        %v4584 = vpow.pop %v4583
        %v4585 = vmul.f32 %v4563, 1.442695
        %v4586 = vpow.pop %v4585
        %v4587 = vmul.f32 %v4564, 1.442695
        %v4588 = vpow.pop %v4587
        %v4589 = vmul.f32 %v4565, 1.442695
        %v4590 = vpow.pop %v4589
        %v4591 = vmul.f32 %v4566, 1.442695
        %v4592 = vpow.pop %v4591
        %v4593 = vmul.f32 %v4567, 1.442695
        %v4594 = vpow.pop %v4593
        %v4595 = vmul.f32 %v4568, 1.442695
        %v4596 = vpow.pop %v4595
        %v4597 = vmul.f32 %v4569, 1.442695
        %v4598 = vpow.pop %v4597
        %v4599 = vmul.f32 %v4570, 1.442695
        %v4600 = vpow.pop %v4599
        %v4601 = vmul.f32 %v4571, 1.442695
        %v4602 = vpow.pop %v4601
        %v4603 = vmul.f32 %v4572, 1.442695
        %v4604 = vpow.pop %v4603
        %v4605 = vsel %vm1580, %v4574, 0.0
        %4606 = vadd.xlane.f32.xlu0 %v4605
        %v4607 = vpop.xlane.xlu0 %4606
        %v4608 = vsel %vm1580, %v4576, 0.0
        %4609 = vadd.xlane.f32.xlu0 %v4608
        %v4610 = vpop.xlane.xlu0 %4609
        %v4611 = vsel %vm1580, %v4578, 0.0
        %4612 = vadd.xlane.f32.xlu0 %v4611
        %v4613 = vpop.xlane.xlu0 %4612
        %v4614 = vsel %vm1580, %v4580, 0.0
        %4615 = vadd.xlane.f32.xlu0 %v4614
        %v4616 = vpop.xlane.xlu0 %4615
        %v4617 = vsel %vm1580, %v4582, 0.0
        %4618 = vadd.xlane.f32.xlu0 %v4617
        %v4619 = vpop.xlane.xlu0 %4618
        %v4620 = vsel %vm1580, %v4584, 0.0
        %4621 = vadd.xlane.f32.xlu0 %v4620
        %v4622 = vpop.xlane.xlu0 %4621
        %v4623 = vsel %vm1580, %v4586, 0.0
        %4624 = vadd.xlane.f32.xlu0 %v4623
        %v4625 = vpop.xlane.xlu0 %4624
        %v4626 = vsel %vm1580, %v4588, 0.0
        %4627 = vadd.xlane.f32.xlu0 %v4626
        %v4628 = vpop.xlane.xlu0 %4627
        %v4629 = vsel %vm1580, %v4590, 0.0
        %4630 = vadd.xlane.f32.xlu0 %v4629
        %v4631 = vpop.xlane.xlu0 %4630
        %v4632 = vsel %vm1580, %v4592, 0.0
        %4633 = vadd.xlane.f32.xlu0 %v4632
        %v4634 = vpop.xlane.xlu0 %4633
        %v4635 = vsel %vm1580, %v4594, 0.0
        %4636 = vadd.xlane.f32.xlu0 %v4635
        %v4637 = vpop.xlane.xlu0 %4636
        %v4638 = vsel %vm1580, %v4596, 0.0
        %4639 = vadd.xlane.f32.xlu0 %v4638
        %v4640 = vpop.xlane.xlu0 %4639
        %v4641 = vsel %vm1580, %v4598, 0.0
        %4642 = vadd.xlane.f32.xlu0 %v4641
        %v4643 = vpop.xlane.xlu0 %4642
        %v4644 = vsel %vm1580, %v4600, 0.0
        %4645 = vadd.xlane.f32.xlu0 %v4644
        %v4646 = vpop.xlane.xlu0 %4645
        %v4647 = vsel %vm1580, %v4602, 0.0
        %4648 = vadd.xlane.f32.xlu0 %v4647
        %v4649 = vpop.xlane.xlu0 %4648
        %v4650 = vsel %vm1580, %v4604, 0.0
        %4651 = vadd.xlane.f32.xlu0 %v4650
        %v4652 = vpop.xlane.xlu0 %4651
        %v4653 = vpack.c.bf16 %v4576, %v4574
        %v4654 = vpack.c.bf16 %v4580, %v4578
        %v4655 = vpack.c.bf16 %v4584, %v4582
        %v4656 = vpack.c.bf16 %v4588, %v4586
        %v4657 = vpack.c.bf16 %v4592, %v4590
        %v4658 = vpack.c.bf16 %v4596, %v4594
        %v4659 = vpack.c.bf16 %v4600, %v4598
        %v4660 = vpack.c.bf16 %v4604, %v4602
        %4661 = vrot.lane.b32.xlu0 %v1195, 32
        %v4662 = vpop.permute.xlu0 %4661
        %v4665 = vsel %vm1580, %v4653, 0
        %4667 = vmatprep.subr.bf16.mxu0 0
        %4668 = vmatpush1.bf16.msra.mxu0 %v4662
        %4669 = vmatprep.subr.bf16.mxu0 0
        %4670 = vmatpush1.bf16.msra.mxu0 0
        %4671 = vmatprep.subr.bf16.mxu0 0
        %4672 = vmatpush1.bf16.msra.mxu0 0
        %4673 = vmatprep.subr.bf16.mxu0 0
        %4674 = vmatpush1.bf16.msra.mxu0 0
        %4675 = vmatprep.subr.bf16.mxu0 0
        %4676 = vmatpush1.bf16.msra.mxu0 0
        %4677 = vmatprep.subr.bf16.mxu0 0
        %4678 = vmatpush1.bf16.msra.mxu0 0
        %4679 = vmatprep.subr.bf16.mxu0 0
        %4680 = vmatpush1.bf16.msra.mxu0 0
        %4681 = vmatprep.subr.bf16.mxu0 0
        %4682 = vmatpush1.bf16.msra.mxu0 0
        %4683 = vmatprep.subr.bf16.mxu0 0
        %4684 = vmatpush1.bf16.msra.mxu0 0
        %4685 = vmatprep.subr.bf16.mxu0 0
        %4686 = vmatpush1.bf16.msra.mxu0 0
        %4687 = vmatprep.subr.bf16.mxu0 0
        %4688 = vmatpush1.bf16.msra.mxu0 0
        %4689 = vmatprep.subr.bf16.mxu0 0
        %4690 = vmatpush1.bf16.msra.mxu0 0
        %4691 = vmatprep.subr.bf16.mxu0 0
        %4692 = vmatpush1.bf16.msra.mxu0 0
        %4693 = vmatprep.subr.bf16.mxu0 0
        %4694 = vmatpush1.bf16.msra.mxu0 0
        %4695 = vmatprep.subr.bf16.mxu0 0
        %4696 = vmatpush1.bf16.msra.mxu0 0
        %4697 = vmatprep.subr.bf16.mxu0 0
        %4698 = vmatpush1.bf16.msra.mxu0 0
        %4699 = vmatprep.mubr.bf16.mxu0 0
        %4700 = vmatmul.mubr.bf16.gmra.mrb[0].mxu0 %v4665
        %v4701 = vpop.f32.mrb[0].mxu0
        %v4702 = vadd.f32 0.0, %v4701
        %v4703 = vpop.f32.mrb[0].mxu0
        %v4704 = vpop.f32.mrb[0].mxu0
        %v4705 = vadd.f32 0.0, %v4704
        %v4706 = vpop.f32.mrb[0].mxu0
        %4707 = vdwg.mxu0
        %4708 = vrot.lane.b32.xlu0 %v1196, 32
        %v4709 = vpop.permute.xlu0 %4708
        %v4712 = vsel %vm1580, %v4654, 0
        %4714 = vmatprep.subr.bf16.mxu0 0
        %4715 = vmatpush1.bf16.msra.mxu0 %v4709
        %4716 = vmatprep.subr.bf16.mxu0 0
        %4717 = vmatpush1.bf16.msra.mxu0 0
        %4718 = vmatprep.subr.bf16.mxu0 0
        %4719 = vmatpush1.bf16.msra.mxu0 0
        %4720 = vmatprep.subr.bf16.mxu0 0
        %4721 = vmatpush1.bf16.msra.mxu0 0
        %4722 = vmatprep.subr.bf16.mxu0 0
        %4723 = vmatpush1.bf16.msra.mxu0 0
        %4724 = vmatprep.subr.bf16.mxu0 0
        %4725 = vmatpush1.bf16.msra.mxu0 0
        %4726 = vmatprep.subr.bf16.mxu0 0
        %4727 = vmatpush1.bf16.msra.mxu0 0
        %4728 = vmatprep.subr.bf16.mxu0 0
        %4729 = vmatpush1.bf16.msra.mxu0 0
        %4730 = vmatprep.subr.bf16.mxu0 0
        %4731 = vmatpush1.bf16.msra.mxu0 0
        %4732 = vmatprep.subr.bf16.mxu0 0
        %4733 = vmatpush1.bf16.msra.mxu0 0
        %4734 = vmatprep.subr.bf16.mxu0 0
        %4735 = vmatpush1.bf16.msra.mxu0 0
        %4736 = vmatprep.subr.bf16.mxu0 0
        %4737 = vmatpush1.bf16.msra.mxu0 0
        %4738 = vmatprep.subr.bf16.mxu0 0
        %4739 = vmatpush1.bf16.msra.mxu0 0
        %4740 = vmatprep.subr.bf16.mxu0 0
        %4741 = vmatpush1.bf16.msra.mxu0 0
        %4742 = vmatprep.subr.bf16.mxu0 0
        %4743 = vmatpush1.bf16.msra.mxu0 0
        %4744 = vmatprep.subr.bf16.mxu0 0
        %4745 = vmatpush1.bf16.msra.mxu0 0
        %4746 = vmatprep.mubr.bf16.mxu0 0
        %4747 = vmatmul.mubr.bf16.gmra.mrb[0].mxu0 %v4712
        %v4748 = vpop.f32.mrb[0].mxu0
        %v4749 = vadd.f32 0.0, %v4748
        %v4750 = vpop.f32.mrb[0].mxu0
        %v4751 = vpop.f32.mrb[0].mxu0
        %v4752 = vadd.f32 0.0, %v4751
        %v4753 = vpop.f32.mrb[0].mxu0
        %4754 = vdwg.mxu0
        %4755 = vrot.lane.b32.xlu0 %v1197, 32
        %v4756 = vpop.permute.xlu0 %4755
        %v4759 = vsel %vm1580, %v4655, 0
        %4761 = vmatprep.subr.bf16.mxu0 0
        %4762 = vmatpush1.bf16.msra.mxu0 %v4756
        %4763 = vmatprep.subr.bf16.mxu0 0
        %4764 = vmatpush1.bf16.msra.mxu0 0
        %4765 = vmatprep.subr.bf16.mxu0 0
        %4766 = vmatpush1.bf16.msra.mxu0 0
        %4767 = vmatprep.subr.bf16.mxu0 0
        %4768 = vmatpush1.bf16.msra.mxu0 0
        %4769 = vmatprep.subr.bf16.mxu0 0
        %4770 = vmatpush1.bf16.msra.mxu0 0
        %4771 = vmatprep.subr.bf16.mxu0 0
        %4772 = vmatpush1.bf16.msra.mxu0 0
        %4773 = vmatprep.subr.bf16.mxu0 0
        %4774 = vmatpush1.bf16.msra.mxu0 0
        %4775 = vmatprep.subr.bf16.mxu0 0
        %4776 = vmatpush1.bf16.msra.mxu0 0
        %4777 = vmatprep.subr.bf16.mxu0 0
        %4778 = vmatpush1.bf16.msra.mxu0 0
        %4779 = vmatprep.subr.bf16.mxu0 0
        %4780 = vmatpush1.bf16.msra.mxu0 0
        %4781 = vmatprep.subr.bf16.mxu0 0
        %4782 = vmatpush1.bf16.msra.mxu0 0
        %4783 = vmatprep.subr.bf16.mxu0 0
        %4784 = vmatpush1.bf16.msra.mxu0 0
        %4785 = vmatprep.subr.bf16.mxu0 0
        %4786 = vmatpush1.bf16.msra.mxu0 0
        %4787 = vmatprep.subr.bf16.mxu0 0
        %4788 = vmatpush1.bf16.msra.mxu0 0
        %4789 = vmatprep.subr.bf16.mxu0 0
        %4790 = vmatpush1.bf16.msra.mxu0 0
        %4791 = vmatprep.subr.bf16.mxu0 0
        %4792 = vmatpush1.bf16.msra.mxu0 0
        %4793 = vmatprep.mubr.bf16.mxu0 0
        %4794 = vmatmul.mubr.bf16.gmra.mrb[0].mxu0 %v4759
        %v4795 = vpop.f32.mrb[0].mxu0
        %v4796 = vadd.f32 0.0, %v4795
        %v4797 = vpop.f32.mrb[0].mxu0
        %v4798 = vpop.f32.mrb[0].mxu0
        %v4799 = vadd.f32 0.0, %v4798
        %v4800 = vpop.f32.mrb[0].mxu0
        %4801 = vdwg.mxu0
        %4802 = vrot.lane.b32.xlu0 %v1198, 32
        %v4803 = vpop.permute.xlu0 %4802
        %v4806 = vsel %vm1580, %v4656, 0
        %4808 = vmatprep.subr.bf16.mxu0 0
        %4809 = vmatpush1.bf16.msra.mxu0 %v4803
        %4810 = vmatprep.subr.bf16.mxu0 0
        %4811 = vmatpush1.bf16.msra.mxu0 0
        %4812 = vmatprep.subr.bf16.mxu0 0
        %4813 = vmatpush1.bf16.msra.mxu0 0
        %4814 = vmatprep.subr.bf16.mxu0 0
        %4815 = vmatpush1.bf16.msra.mxu0 0
        %4816 = vmatprep.subr.bf16.mxu0 0
        %4817 = vmatpush1.bf16.msra.mxu0 0
        %4818 = vmatprep.subr.bf16.mxu0 0
        %4819 = vmatpush1.bf16.msra.mxu0 0
        %4820 = vmatprep.subr.bf16.mxu0 0
        %4821 = vmatpush1.bf16.msra.mxu0 0
        %4822 = vmatprep.subr.bf16.mxu0 0
        %4823 = vmatpush1.bf16.msra.mxu0 0
        %4824 = vmatprep.subr.bf16.mxu0 0
        %4825 = vmatpush1.bf16.msra.mxu0 0
        %4826 = vmatprep.subr.bf16.mxu0 0
        %4827 = vmatpush1.bf16.msra.mxu0 0
        %4828 = vmatprep.subr.bf16.mxu0 0
        %4829 = vmatpush1.bf16.msra.mxu0 0
        %4830 = vmatprep.subr.bf16.mxu0 0
        %4831 = vmatpush1.bf16.msra.mxu0 0
        %4832 = vmatprep.subr.bf16.mxu0 0
        %4833 = vmatpush1.bf16.msra.mxu0 0
        %4834 = vmatprep.subr.bf16.mxu0 0
        %4835 = vmatpush1.bf16.msra.mxu0 0
        %4836 = vmatprep.subr.bf16.mxu0 0
        %4837 = vmatpush1.bf16.msra.mxu0 0
        %4838 = vmatprep.subr.bf16.mxu0 0
        %4839 = vmatpush1.bf16.msra.mxu0 0
        %4840 = vmatprep.mubr.bf16.mxu0 0
        %4841 = vmatmul.mubr.bf16.gmra.mrb[0].mxu0 %v4806
        %v4842 = vpop.f32.mrb[0].mxu0
        %v4843 = vadd.f32 0.0, %v4842
        %v4844 = vpop.f32.mrb[0].mxu0
        %v4845 = vpop.f32.mrb[0].mxu0
        %v4846 = vadd.f32 0.0, %v4845
        %v4847 = vpop.f32.mrb[0].mxu0
        %4848 = vdwg.mxu0
        %4849 = vrot.lane.b32.xlu0 %v1199, 32
        %v4850 = vpop.permute.xlu0 %4849
        %v4853 = vsel %vm1580, %v4657, 0
        %4855 = vmatprep.subr.bf16.mxu0 0
        %4856 = vmatpush1.bf16.msra.mxu0 %v4850
        %4857 = vmatprep.subr.bf16.mxu0 0
        %4858 = vmatpush1.bf16.msra.mxu0 0
        %4859 = vmatprep.subr.bf16.mxu0 0
        %4860 = vmatpush1.bf16.msra.mxu0 0
        %4861 = vmatprep.subr.bf16.mxu0 0
        %4862 = vmatpush1.bf16.msra.mxu0 0
        %4863 = vmatprep.subr.bf16.mxu0 0
        %4864 = vmatpush1.bf16.msra.mxu0 0
        %4865 = vmatprep.subr.bf16.mxu0 0
        %4866 = vmatpush1.bf16.msra.mxu0 0
        %4867 = vmatprep.subr.bf16.mxu0 0
        %4868 = vmatpush1.bf16.msra.mxu0 0
        %4869 = vmatprep.subr.bf16.mxu0 0
        %4870 = vmatpush1.bf16.msra.mxu0 0
        %4871 = vmatprep.subr.bf16.mxu0 0
        %4872 = vmatpush1.bf16.msra.mxu0 0
        %4873 = vmatprep.subr.bf16.mxu0 0
        %4874 = vmatpush1.bf16.msra.mxu0 0
        %4875 = vmatprep.subr.bf16.mxu0 0
        %4876 = vmatpush1.bf16.msra.mxu0 0
        %4877 = vmatprep.subr.bf16.mxu0 0
        %4878 = vmatpush1.bf16.msra.mxu0 0
        %4879 = vmatprep.subr.bf16.mxu0 0
        %4880 = vmatpush1.bf16.msra.mxu0 0
        %4881 = vmatprep.subr.bf16.mxu0 0
        %4882 = vmatpush1.bf16.msra.mxu0 0
        %4883 = vmatprep.subr.bf16.mxu0 0
        %4884 = vmatpush1.bf16.msra.mxu0 0
        %4885 = vmatprep.subr.bf16.mxu0 0
        %4886 = vmatpush1.bf16.msra.mxu0 0
        %4887 = vmatprep.mubr.bf16.mxu0 0
        %4888 = vmatmul.mubr.bf16.gmra.mrb[0].mxu0 %v4853
        %v4889 = vpop.f32.mrb[0].mxu0
        %v4890 = vadd.f32 0.0, %v4889
        %v4891 = vpop.f32.mrb[0].mxu0
        %v4892 = vpop.f32.mrb[0].mxu0
        %v4893 = vadd.f32 0.0, %v4892
        %v4894 = vpop.f32.mrb[0].mxu0
        %4895 = vdwg.mxu0
        %4896 = vrot.lane.b32.xlu0 %v1200, 32
        %v4897 = vpop.permute.xlu0 %4896
        %v4900 = vsel %vm1580, %v4658, 0
        %4902 = vmatprep.subr.bf16.mxu0 0
        %4903 = vmatpush1.bf16.msra.mxu0 %v4897
        %4904 = vmatprep.subr.bf16.mxu0 0
        %4905 = vmatpush1.bf16.msra.mxu0 0
        %4906 = vmatprep.subr.bf16.mxu0 0
        %4907 = vmatpush1.bf16.msra.mxu0 0
        %4908 = vmatprep.subr.bf16.mxu0 0
        %4909 = vmatpush1.bf16.msra.mxu0 0
        %4910 = vmatprep.subr.bf16.mxu0 0
        %4911 = vmatpush1.bf16.msra.mxu0 0
        %4912 = vmatprep.subr.bf16.mxu0 0
        %4913 = vmatpush1.bf16.msra.mxu0 0
        %4914 = vmatprep.subr.bf16.mxu0 0
        %4915 = vmatpush1.bf16.msra.mxu0 0
        %4916 = vmatprep.subr.bf16.mxu0 0
        %4917 = vmatpush1.bf16.msra.mxu0 0
        %4918 = vmatprep.subr.bf16.mxu0 0
        %4919 = vmatpush1.bf16.msra.mxu0 0
        %4920 = vmatprep.subr.bf16.mxu0 0
        %4921 = vmatpush1.bf16.msra.mxu0 0
        %4922 = vmatprep.subr.bf16.mxu0 0
        %4923 = vmatpush1.bf16.msra.mxu0 0
        %4924 = vmatprep.subr.bf16.mxu0 0
        %4925 = vmatpush1.bf16.msra.mxu0 0
        %4926 = vmatprep.subr.bf16.mxu0 0
        %4927 = vmatpush1.bf16.msra.mxu0 0
        %4928 = vmatprep.subr.bf16.mxu0 0
        %4929 = vmatpush1.bf16.msra.mxu0 0
        %4930 = vmatprep.subr.bf16.mxu0 0
        %4931 = vmatpush1.bf16.msra.mxu0 0
        %4932 = vmatprep.subr.bf16.mxu0 0
        %4933 = vmatpush1.bf16.msra.mxu0 0
        %4934 = vmatprep.mubr.bf16.mxu0 0
        %4935 = vmatmul.mubr.bf16.gmra.mrb[0].mxu0 %v4900
        %v4936 = vpop.f32.mrb[0].mxu0
        %v4937 = vadd.f32 0.0, %v4936
        %v4938 = vpop.f32.mrb[0].mxu0
        %v4939 = vpop.f32.mrb[0].mxu0
        %v4940 = vadd.f32 0.0, %v4939
        %v4941 = vpop.f32.mrb[0].mxu0
        %4942 = vdwg.mxu0
        %4943 = vrot.lane.b32.xlu0 %v1201, 32
        %v4944 = vpop.permute.xlu0 %4943
        %v4947 = vsel %vm1580, %v4659, 0
        %4949 = vmatprep.subr.bf16.mxu0 0
        %4950 = vmatpush1.bf16.msra.mxu0 %v4944
        %4951 = vmatprep.subr.bf16.mxu0 0
        %4952 = vmatpush1.bf16.msra.mxu0 0
        %4953 = vmatprep.subr.bf16.mxu0 0
        %4954 = vmatpush1.bf16.msra.mxu0 0
        %4955 = vmatprep.subr.bf16.mxu0 0
        %4956 = vmatpush1.bf16.msra.mxu0 0
        %4957 = vmatprep.subr.bf16.mxu0 0
        %4958 = vmatpush1.bf16.msra.mxu0 0
        %4959 = vmatprep.subr.bf16.mxu0 0
        %4960 = vmatpush1.bf16.msra.mxu0 0
        %4961 = vmatprep.subr.bf16.mxu0 0
        %4962 = vmatpush1.bf16.msra.mxu0 0
        %4963 = vmatprep.subr.bf16.mxu0 0
        %4964 = vmatpush1.bf16.msra.mxu0 0
        %4965 = vmatprep.subr.bf16.mxu0 0
        %4966 = vmatpush1.bf16.msra.mxu0 0
        %4967 = vmatprep.subr.bf16.mxu0 0
        %4968 = vmatpush1.bf16.msra.mxu0 0
        %4969 = vmatprep.subr.bf16.mxu0 0
        %4970 = vmatpush1.bf16.msra.mxu0 0
        %4971 = vmatprep.subr.bf16.mxu0 0
        %4972 = vmatpush1.bf16.msra.mxu0 0
        %4973 = vmatprep.subr.bf16.mxu0 0
        %4974 = vmatpush1.bf16.msra.mxu0 0
        %4975 = vmatprep.subr.bf16.mxu0 0
        %4976 = vmatpush1.bf16.msra.mxu0 0
        %4977 = vmatprep.subr.bf16.mxu0 0
        %4978 = vmatpush1.bf16.msra.mxu0 0
        %4979 = vmatprep.subr.bf16.mxu0 0
        %4980 = vmatpush1.bf16.msra.mxu0 0
        %4981 = vmatprep.mubr.bf16.mxu0 0
        %4982 = vmatmul.mubr.bf16.gmra.mrb[0].mxu0 %v4947
        %v4983 = vpop.f32.mrb[0].mxu0
        %v4984 = vadd.f32 0.0, %v4983
        %v4985 = vpop.f32.mrb[0].mxu0
        %v4986 = vpop.f32.mrb[0].mxu0
        %v4987 = vadd.f32 0.0, %v4986
        %v4988 = vpop.f32.mrb[0].mxu0
        %4989 = vdwg.mxu0
        %4990 = vrot.lane.b32.xlu0 %v1202, 32
        %v4991 = vpop.permute.xlu0 %4990
        %v4994 = vsel %vm1580, %v4660, 0
        %4996 = vmatprep.subr.bf16.mxu0 0
        %4997 = vmatpush1.bf16.msra.mxu0 %v4991
        %4998 = vmatprep.subr.bf16.mxu0 0
        %4999 = vmatpush1.bf16.msra.mxu0 0
        %5000 = vmatprep.subr.bf16.mxu0 0
        %5001 = vmatpush1.bf16.msra.mxu0 0
        %5002 = vmatprep.subr.bf16.mxu0 0
        %5003 = vmatpush1.bf16.msra.mxu0 0
        %5004 = vmatprep.subr.bf16.mxu0 0
        %5005 = vmatpush1.bf16.msra.mxu0 0
        %5006 = vmatprep.subr.bf16.mxu0 0
        %5007 = vmatpush1.bf16.msra.mxu0 0
        %5008 = vmatprep.subr.bf16.mxu0 0
        %5009 = vmatpush1.bf16.msra.mxu0 0
        %5010 = vmatprep.subr.bf16.mxu0 0
        %5011 = vmatpush1.bf16.msra.mxu0 0
        %5012 = vmatprep.subr.bf16.mxu0 0
        %5013 = vmatpush1.bf16.msra.mxu0 0
        %5014 = vmatprep.subr.bf16.mxu0 0
        %5015 = vmatpush1.bf16.msra.mxu0 0
        %5016 = vmatprep.subr.bf16.mxu0 0
        %5017 = vmatpush1.bf16.msra.mxu0 0
        %5018 = vmatprep.subr.bf16.mxu0 0
        %5019 = vmatpush1.bf16.msra.mxu0 0
        %5020 = vmatprep.subr.bf16.mxu0 0
        %5021 = vmatpush1.bf16.msra.mxu0 0
        %5022 = vmatprep.subr.bf16.mxu0 0
        %5023 = vmatpush1.bf16.msra.mxu0 0
        %5024 = vmatprep.subr.bf16.mxu0 0
        %5025 = vmatpush1.bf16.msra.mxu0 0
        %5026 = vmatprep.subr.bf16.mxu0 0
        %5027 = vmatpush1.bf16.msra.mxu0 0
        %5028 = vmatprep.mubr.bf16.mxu0 0
        %5029 = vmatmul.mubr.bf16.gmra.mrb[0].mxu0 %v4994
        %v5030 = vpop.f32.mrb[0].mxu0
        %v5031 = vadd.f32 0.0, %v5030
        %v5032 = vpop.f32.mrb[0].mxu0
        %v5033 = vpop.f32.mrb[0].mxu0
        %v5034 = vadd.f32 0.0, %v5033
        %v5035 = vpop.f32.mrb[0].mxu0
        %5036 = vdwg.mxu0
        %v5037 = vrcp.pop %v4607
        %v5038 = vrcp.pop %v4610
        %v5039 = vrcp.pop %v4613
        %v5040 = vrcp.pop %v4616
        %v5041 = vrcp.pop %v4619
        %v5042 = vrcp.pop %v4622
        %v5043 = vrcp.pop %v4625
        %v5044 = vrcp.pop %v4628
        %v5045 = vrcp.pop %v4631
        %v5046 = vrcp.pop %v4634
        %v5047 = vrcp.pop %v4637
        %v5048 = vrcp.pop %v4640
        %v5049 = vrcp.pop %v4643
        %v5050 = vrcp.pop %v4646
        %v5051 = vrcp.pop %v4649
        %v5052 = vrcp.pop %v4652
        %v5053 = vmul.f32 %v4702, %v5037
        %v5054 = vmul.f32 %v4705, %v5038
        %v5055 = vmul.f32 %v4749, %v5039
        %v5056 = vmul.f32 %v4752, %v5040
        %v5057 = vmul.f32 %v4796, %v5041
        %v5058 = vmul.f32 %v4799, %v5042
        %v5059 = vmul.f32 %v4843, %v5043
        %v5060 = vmul.f32 %v4846, %v5044
        %v5061 = vmul.f32 %v4890, %v5045
        %v5062 = vmul.f32 %v4893, %v5046
        %v5063 = vmul.f32 %v4937, %v5047
        %v5064 = vmul.f32 %v4940, %v5048
        %v5065 = vmul.f32 %v4984, %v5049
        %v5066 = vmul.f32 %v4987, %v5050
        %v5067 = vmul.f32 %v5031, %v5051
        %v5068 = vmul.f32 %v5034, %v5052
        %v5069 = vpack.c.bf16 %v5054, %v5053
        %v5070 = vpack.c.bf16 %v5056, %v5055
        %v5071 = vpack.c.bf16 %v5058, %v5057
        %v5072 = vpack.c.bf16 %v5060, %v5059
        %v5073 = vpack.c.bf16 %v5062, %v5061
        %v5074 = vpack.c.bf16 %v5064, %v5063
        %v5075 = vpack.c.bf16 %v5066, %v5065
        %v5076 = vpack.c.bf16 %v5068, %v5067
        %5085 = vrot.lane.b32.xlu0 %v3117, 32
        %v5086 = vpop.permute.xlu0 %5085
        %5087 = vrot.lane.b32.xlu0 %v3118, 32
        %v5088 = vpop.permute.xlu0 %5087
        %5089 = vrot.lane.b32.xlu0 %v3119, 32
        %v5090 = vpop.permute.xlu0 %5089
        %5091 = vrot.lane.b32.xlu0 %v3120, 32
        %v5092 = vpop.permute.xlu0 %5091
        %5093 = vrot.lane.b32.xlu0 %v3121, 32
        %v5094 = vpop.permute.xlu0 %5093
        %5095 = vrot.lane.b32.xlu0 %v3122, 32
        %v5096 = vpop.permute.xlu0 %5095
        %5097 = vrot.lane.b32.xlu0 %v3123, 32
        %v5098 = vpop.permute.xlu0 %5097
        %5099 = vrot.lane.b32.xlu0 %v3124, 32
        %v5100 = vpop.permute.xlu0 %5099
        %5109 = vrot.lane.b32.xlu0 %v4093, 64
        %v5110 = vpop.permute.xlu0 %5109
        %5111 = vrot.lane.b32.xlu0 %v4094, 64
        %v5112 = vpop.permute.xlu0 %5111
        %5113 = vrot.lane.b32.xlu0 %v4095, 64
        %v5114 = vpop.permute.xlu0 %5113
        %5115 = vrot.lane.b32.xlu0 %v4096, 64
        %v5116 = vpop.permute.xlu0 %5115
        %5117 = vrot.lane.b32.xlu0 %v4097, 64
        %v5118 = vpop.permute.xlu0 %5117
        %5119 = vrot.lane.b32.xlu0 %v4098, 64
        %v5120 = vpop.permute.xlu0 %5119
        %5121 = vrot.lane.b32.xlu0 %v4099, 64
        %v5122 = vpop.permute.xlu0 %5121
        %5123 = vrot.lane.b32.xlu0 %v4100, 64
        %v5124 = vpop.permute.xlu0 %5123
        %5133 = vrot.lane.b32.xlu0 %v5069, 96
        %v5134 = vpop.permute.xlu0 %5133
        %5135 = vrot.lane.b32.xlu0 %v5070, 96
        %v5136 = vpop.permute.xlu0 %5135
        %5137 = vrot.lane.b32.xlu0 %v5071, 96
        %v5138 = vpop.permute.xlu0 %5137
        %5139 = vrot.lane.b32.xlu0 %v5072, 96
        %v5140 = vpop.permute.xlu0 %5139
        %5141 = vrot.lane.b32.xlu0 %v5073, 96
        %v5142 = vpop.permute.xlu0 %5141
        %5143 = vrot.lane.b32.xlu0 %v5074, 96
        %v5144 = vpop.permute.xlu0 %5143
        %5145 = vrot.lane.b32.xlu0 %v5075, 96
        %v5146 = vpop.permute.xlu0 %5145
        %5147 = vrot.lane.b32.xlu0 %v5076, 96
        %v5148 = vpop.permute.xlu0 %5147
        %v5151 = vsel %vm1203, %v2117, %v5086
        %v5154 = vsel %vm1203, %v2118, %v5088
        %v5157 = vsel %vm1203, %v2119, %v5090
        %v5160 = vsel %vm1203, %v2120, %v5092
        %v5163 = vsel %vm1203, %v2121, %v5094
        %v5166 = vsel %vm1203, %v2122, %v5096
        %v5169 = vsel %vm1203, %v2123, %v5098
        %v5172 = vsel %vm1203, %v2124, %v5100
        %vm5173 = vcmask 523264
        %v5175 = vsel %vm5173, %v5151, %v5110
        %v5177 = vsel %vm5173, %v5154, %v5112
        %v5179 = vsel %vm5173, %v5157, %v5114
        %v5181 = vsel %vm5173, %v5160, %v5116
        %v5183 = vsel %vm5173, %v5163, %v5118
        %v5185 = vsel %vm5173, %v5166, %v5120
        %v5187 = vsel %vm5173, %v5169, %v5122
        %v5189 = vsel %vm5173, %v5172, %v5124
        %vm5190 = vcmask 785408
        %v5192 = vsel %vm5190, %v5175, %v5134
        %v5195 = vsel %vm5190, %v5177, %v5136
        %v5198 = vsel %vm5190, %v5179, %v5138
        %v5201 = vsel %vm5190, %v5181, %v5140
        %v5204 = vsel %vm5190, %v5183, %v5142
        %v5207 = vsel %vm5190, %v5185, %v5144
        %v5210 = vsel %vm5190, %v5187, %v5146
        %v5213 = vsel %vm5190, %v5189, %v5148
        %v5215 = vld [vmem:[#allocation11] sm:$0xf]
        %v5216 = vld [vmem:[#allocation11 + $0x4] sm:$0xf]
        %v5217 = vld [vmem:[#allocation11 + $0x8] sm:$0xf]
        %v5218 = vld [vmem:[#allocation11 + $0xc] sm:$0xf]
        %v5219 = vld [vmem:[#allocation11 + $0x10] sm:$0xf]
        %v5220 = vld [vmem:[#allocation11 + $0x14] sm:$0xf]
        %v5221 = vld [vmem:[#allocation11 + $0x18] sm:$0xf]
        %v5222 = vld [vmem:[#allocation11 + $0x1c] sm:$0xf]
        %v5223 = vld [vmem:[#allocation11 + $0x20] sm:$0xf]
        %v5224 = vld [vmem:[#allocation11 + $0x24] sm:$0xf]
        %v5225 = vld [vmem:[#allocation11 + $0x28] sm:$0xf]
        %v5226 = vld [vmem:[#allocation11 + $0x2c] sm:$0xf]
        %v5227 = vld [vmem:[#allocation11 + $0x30] sm:$0xf]
        %v5228 = vld [vmem:[#allocation11 + $0x34] sm:$0xf]
        %v5229 = vld [vmem:[#allocation11 + $0x38] sm:$0xf]
        %v5230 = vld [vmem:[#allocation11 + $0x3c] sm:$0xf]
        %v5231 = vld [vmem:[%s9] sm:$0x1]
        %v5232 = vunpack.c.l.bf16 %v5231
        %v5233 = vlaneseq
        %v5234 = vshrl.u32 %v5233, 7
        %v5235 = vsub.s32 0, %v5234
        %v5236 = vrot.slane %v5232, %v5235
        %v5253 = vunpack.c.l.b16 %v5215
        %v5254 = vunpack.c.l.b16 %v5216
        %v5255 = vunpack.c.l.b16 %v5217
        %v5256 = vunpack.c.l.b16 %v5218
        %v5257 = vunpack.c.l.b16 %v5219
        %v5258 = vunpack.c.l.b16 %v5220
        %v5259 = vunpack.c.l.b16 %v5221
        %v5260 = vunpack.c.l.b16 %v5222
        %v5261 = vunpack.c.l.b16 %v5223
        %v5262 = vunpack.c.l.b16 %v5224
        %v5263 = vunpack.c.l.b16 %v5225
        %v5264 = vunpack.c.l.b16 %v5226
        %v5265 = vunpack.c.l.b16 %v5227
        %v5266 = vunpack.c.l.b16 %v5228
        %v5267 = vunpack.c.l.b16 %v5229
        %v5268 = vunpack.c.l.b16 %v5230
        %v5269 = vpack.c.b16 %v5254, %v5253
        %v5270 = vpack.c.b16 %v5256, %v5255
        %v5271 = vpack.c.b16 %v5258, %v5257
        %v5272 = vpack.c.b16 %v5260, %v5259
        %v5273 = vpack.c.b16 %v5262, %v5261
        %v5274 = vpack.c.b16 %v5264, %v5263
        %v5275 = vpack.c.b16 %v5266, %v5265
        %v5276 = vpack.c.b16 %v5268, %v5267
        %5285 = vmatprep.subr.bf16.mxu0 0
        %5286 = vmatpush1.bf16.msra.mxu0 %v5269
        %5287 = vmatprep.subr.bf16.mxu0 0
        %5288 = vmatpush1.bf16.msra.mxu0 %v5270
        %5289 = vmatprep.subr.bf16.mxu0 0
        %5290 = vmatpush1.bf16.msra.mxu0 %v5271
        %5291 = vmatprep.subr.bf16.mxu0 0
        %5292 = vmatpush1.bf16.msra.mxu0 %v5272
        %5293 = vmatprep.subr.bf16.mxu0 0
        %5294 = vmatpush1.bf16.msra.mxu0 %v5273
        %5295 = vmatprep.subr.bf16.mxu0 0
        %5296 = vmatpush1.bf16.msra.mxu0 %v5274
        %5297 = vmatprep.subr.bf16.mxu0 0
        %5298 = vmatpush1.bf16.msra.mxu0 %v5275
        %5299 = vmatprep.subr.bf16.mxu0 0
        %5300 = vmatpush1.bf16.msra.mxu0 %v5276
        %5301 = vmatprep.subr.bf16.mxu0 0
        %5302 = vmatpush1.bf16.msra.mxu0 0
        %5303 = vmatprep.subr.bf16.mxu0 0
        %5304 = vmatpush1.bf16.msra.mxu0 0
        %5305 = vmatprep.subr.bf16.mxu0 0
        %5306 = vmatpush1.bf16.msra.mxu0 0
        %5307 = vmatprep.subr.bf16.mxu0 0
        %5308 = vmatpush1.bf16.msra.mxu0 0
        %5309 = vmatprep.subr.bf16.mxu0 0
        %5310 = vmatpush1.bf16.msra.mxu0 0
        %5311 = vmatprep.subr.bf16.mxu0 0
        %5312 = vmatpush1.bf16.msra.mxu0 0
        %5313 = vmatprep.subr.bf16.mxu0 0
        %5314 = vmatpush1.bf16.msra.mxu0 0
        %5315 = vmatprep.subr.bf16.mxu0 0
        %5316 = vmatpush1.bf16.msra.mxu0 0
        %5317 = vmatprep.mubr.bf16.mxu0 0
        %5318 = vmatmul.mubr.bf16.gmra.mrb[0].mxu0 %v5192
        %v5319 = vpop.f32.mrb[0].mxu0
        %v5320 = vadd.f32 %v5236, %v5319
        %v5321 = vpop.f32.mrb[0].mxu0
        %v5322 = vpop.f32.mrb[0].mxu0
        %v5323 = vadd.f32 %v5236, %v5322
        %v5324 = vpop.f32.mrb[0].mxu0
        %5325 = vmatprep.mubr.bf16.mxu0 0
        %5326 = vmatmul.mubr.bf16.gmra.mrb[0].mxu0 %v5195
        %v5327 = vpop.f32.mrb[0].mxu0
        %v5328 = vadd.f32 %v5236, %v5327
        %v5329 = vpop.f32.mrb[0].mxu0
        %v5330 = vpop.f32.mrb[0].mxu0
        %v5331 = vadd.f32 %v5236, %v5330
        %v5332 = vpop.f32.mrb[0].mxu0
        %5333 = vmatprep.mubr.bf16.mxu0 0
        %5334 = vmatmul.mubr.bf16.gmra.mrb[0].mxu0 %v5198
        %v5335 = vpop.f32.mrb[0].mxu0
        %v5336 = vadd.f32 %v5236, %v5335
        %v5337 = vpop.f32.mrb[0].mxu0
        %v5338 = vpop.f32.mrb[0].mxu0
        %v5339 = vadd.f32 %v5236, %v5338
        %v5340 = vpop.f32.mrb[0].mxu0
        %5341 = vmatprep.mubr.bf16.mxu0 0
        %5342 = vmatmul.mubr.bf16.gmra.mrb[0].mxu0 %v5201
        %v5343 = vpop.f32.mrb[0].mxu0
        %v5344 = vadd.f32 %v5236, %v5343
        %v5345 = vpop.f32.mrb[0].mxu0
        %v5346 = vpop.f32.mrb[0].mxu0
        %v5347 = vadd.f32 %v5236, %v5346
        %v5348 = vpop.f32.mrb[0].mxu0
        %5349 = vmatprep.mubr.bf16.mxu0 0
        %5350 = vmatmul.mubr.bf16.gmra.mrb[0].mxu0 %v5204
        %v5351 = vpop.f32.mrb[0].mxu0
        %v5352 = vadd.f32 %v5236, %v5351
        %v5353 = vpop.f32.mrb[0].mxu0
        %v5354 = vpop.f32.mrb[0].mxu0
        %v5355 = vadd.f32 %v5236, %v5354
        %v5356 = vpop.f32.mrb[0].mxu0
        %5357 = vmatprep.mubr.bf16.mxu0 0
        %5358 = vmatmul.mubr.bf16.gmra.mrb[0].mxu0 %v5207
        %v5359 = vpop.f32.mrb[0].mxu0
        %v5360 = vadd.f32 %v5236, %v5359
        %v5361 = vpop.f32.mrb[0].mxu0
        %v5362 = vpop.f32.mrb[0].mxu0
        %v5363 = vadd.f32 %v5236, %v5362
        %v5364 = vpop.f32.mrb[0].mxu0
        %5365 = vmatprep.mubr.bf16.mxu0 0
        %5366 = vmatmul.mubr.bf16.gmra.mrb[0].mxu0 %v5210
        %v5367 = vpop.f32.mrb[0].mxu0
        %v5368 = vadd.f32 %v5236, %v5367
        %v5369 = vpop.f32.mrb[0].mxu0
        %v5370 = vpop.f32.mrb[0].mxu0
        %v5371 = vadd.f32 %v5236, %v5370
        %v5372 = vpop.f32.mrb[0].mxu0
        %5373 = vmatprep.mubr.bf16.mxu0 0
        %5374 = vmatmul.mubr.bf16.gmra.mrb[0].mxu0 %v5213
        %v5375 = vpop.f32.mrb[0].mxu0
        %v5376 = vadd.f32 %v5236, %v5375
        %v5377 = vpop.f32.mrb[0].mxu0
        %v5378 = vpop.f32.mrb[0].mxu0
        %v5379 = vadd.f32 %v5236, %v5378
        %v5380 = vpop.f32.mrb[0].mxu0
        %5381 = vdwg.mxu0
        %v5382 = vunpack.c.l.bf16 %v550
        %v5383 = vunpack.c.l.bf16 %v551
        %v5384 = vunpack.c.l.bf16 %v552
        %v5385 = vunpack.c.l.bf16 %v553
        %v5386 = vunpack.c.l.bf16 %v554
        %v5387 = vunpack.c.l.bf16 %v555
        %v5388 = vunpack.c.l.bf16 %v556
        %v5389 = vunpack.c.l.bf16 %v557
        %v5390 = vunpack.c.l.bf16 %v558
        %v5391 = vunpack.c.l.bf16 %v559
        %v5392 = vunpack.c.l.bf16 %v560
        %v5393 = vunpack.c.l.bf16 %v561
        %v5394 = vunpack.c.l.bf16 %v562
        %v5395 = vunpack.c.l.bf16 %v563
        %v5396 = vunpack.c.l.bf16 %v564
        %v5397 = vunpack.c.l.bf16 %v565
        %v5398 = vadd.f32 %v5382, %v5320
        %v5399 = vadd.f32 %v5383, %v5323
        %v5400 = vadd.f32 %v5384, %v5328
        %v5401 = vadd.f32 %v5385, %v5331
        %v5402 = vadd.f32 %v5386, %v5336
        %v5403 = vadd.f32 %v5387, %v5339
        %v5404 = vadd.f32 %v5388, %v5344
        %v5405 = vadd.f32 %v5389, %v5347
        %v5406 = vadd.f32 %v5390, %v5352
        %v5407 = vadd.f32 %v5391, %v5355
        %v5408 = vadd.f32 %v5392, %v5360
        %v5409 = vadd.f32 %v5393, %v5363
        %v5410 = vadd.f32 %v5394, %v5368
        %v5411 = vadd.f32 %v5395, %v5371
        %v5412 = vadd.f32 %v5396, %v5376
        %v5413 = vadd.f32 %v5397, %v5379
        %v5414 = vpack.c.bf16 %v5399, %v5398
        %v5415 = vpack.c.bf16 %v5401, %v5400
        %v5416 = vpack.c.bf16 %v5403, %v5402
        %v5417 = vpack.c.bf16 %v5405, %v5404
        %v5418 = vpack.c.bf16 %v5407, %v5406
        %v5419 = vpack.c.bf16 %v5409, %v5408
        %v5420 = vpack.c.bf16 %v5411, %v5410
        %v5421 = vpack.c.bf16 %v5413, %v5412
        %v5422 = vld [vmem:[#allocation13] sm:$0xf]
        %v5423 = vld [vmem:[#allocation13 + $0x4] sm:$0xf]
        %v5424 = vld [vmem:[#allocation13 + $0x8] sm:$0xf]
        %v5425 = vld [vmem:[#allocation13 + $0xc] sm:$0xf]
        %v5426 = vld [vmem:[#allocation13 + $0x10] sm:$0xf]
        %v5427 = vld [vmem:[#allocation13 + $0x14] sm:$0xf]
        %v5428 = vld [vmem:[#allocation13 + $0x18] sm:$0xf]
        %v5429 = vld [vmem:[#allocation13 + $0x1c] sm:$0xf]
        %v5430 = vld [vmem:[#allocation13 + $0x20] sm:$0xf]
        %v5431 = vld [vmem:[#allocation13 + $0x24] sm:$0xf]
        %v5432 = vld [vmem:[#allocation13 + $0x28] sm:$0xf]
        %v5433 = vld [vmem:[#allocation13 + $0x2c] sm:$0xf]
        %v5434 = vld [vmem:[#allocation13 + $0x30] sm:$0xf]
        %v5435 = vld [vmem:[#allocation13 + $0x34] sm:$0xf]
        %v5436 = vld [vmem:[#allocation13 + $0x38] sm:$0xf]
        %v5437 = vld [vmem:[#allocation13 + $0x3c] sm:$0xf]
        %v5454 = vunpack.c.l.b16 %v5422
        %v5455 = vunpack.c.l.b16 %v5423
        %v5456 = vunpack.c.l.b16 %v5424
        %v5457 = vunpack.c.l.b16 %v5425
        %v5458 = vunpack.c.l.b16 %v5426
        %v5459 = vunpack.c.l.b16 %v5427
        %v5460 = vunpack.c.l.b16 %v5428
        %v5461 = vunpack.c.l.b16 %v5429
        %v5462 = vunpack.c.l.b16 %v5430
        %v5463 = vunpack.c.l.b16 %v5431
        %v5464 = vunpack.c.l.b16 %v5432
        %v5465 = vunpack.c.l.b16 %v5433
        %v5466 = vunpack.c.l.b16 %v5434
        %v5467 = vunpack.c.l.b16 %v5435
        %v5468 = vunpack.c.l.b16 %v5436
        %v5469 = vunpack.c.l.b16 %v5437
        %v5470 = vpack.c.b16 %v5455, %v5454
        %v5471 = vpack.c.b16 %v5457, %v5456
        %v5472 = vpack.c.b16 %v5459, %v5458
        %v5473 = vpack.c.b16 %v5461, %v5460
        %v5474 = vpack.c.b16 %v5463, %v5462
        %v5475 = vpack.c.b16 %v5465, %v5464
        %v5476 = vpack.c.b16 %v5467, %v5466
        %v5477 = vpack.c.b16 %v5469, %v5468
        %5486 = vmatprep.subr.bf16.mxu0 0
        %5487 = vmatpush1.bf16.msra.mxu0 %v5470
        %5488 = vmatprep.subr.bf16.mxu0 0
        %5489 = vmatpush1.bf16.msra.mxu0 %v5471
        %5490 = vmatprep.subr.bf16.mxu0 0
        %5491 = vmatpush1.bf16.msra.mxu0 %v5472
        %5492 = vmatprep.subr.bf16.mxu0 0
        %5493 = vmatpush1.bf16.msra.mxu0 %v5473
        %5494 = vmatprep.subr.bf16.mxu0 0
        %5495 = vmatpush1.bf16.msra.mxu0 %v5474
        %5496 = vmatprep.subr.bf16.mxu0 0
        %5497 = vmatpush1.bf16.msra.mxu0 %v5475
        %5498 = vmatprep.subr.bf16.mxu0 0
        %5499 = vmatpush1.bf16.msra.mxu0 %v5476
        %5500 = vmatprep.subr.bf16.mxu0 0
        %5501 = vmatpush1.bf16.msra.mxu0 %v5477
        %5502 = vmatprep.subr.bf16.mxu0 0
        %5503 = vmatpush1.bf16.msra.mxu0 0
        %5504 = vmatprep.subr.bf16.mxu0 0
        %5505 = vmatpush1.bf16.msra.mxu0 0
        %5506 = vmatprep.subr.bf16.mxu0 0
        %5507 = vmatpush1.bf16.msra.mxu0 0
        %5508 = vmatprep.subr.bf16.mxu0 0
        %5509 = vmatpush1.bf16.msra.mxu0 0
        %5510 = vmatprep.subr.bf16.mxu0 0
        %5511 = vmatpush1.bf16.msra.mxu0 0
        %5512 = vmatprep.subr.bf16.mxu0 0
        %5513 = vmatpush1.bf16.msra.mxu0 0
        %5514 = vmatprep.subr.bf16.mxu0 0
        %5515 = vmatpush1.bf16.msra.mxu0 0
        %5516 = vmatprep.subr.bf16.mxu0 0
        %5517 = vmatpush1.bf16.msra.mxu0 0
        %5518 = vmatprep.mubr.bf16.mxu0 0
        %5519 = vmatmul.mubr.bf16.gmra.mrb[0].mxu0 %v5414
        %v5520 = vpop.f32.mrb[0].mxu0
        %v5521 = vadd.f32 0.0, %v5520
        %v5522 = vpop.f32.mrb[0].mxu0
        %v5523 = vpop.f32.mrb[0].mxu0
        %v5524 = vadd.f32 0.0, %v5523
        %v5525 = vpop.f32.mrb[0].mxu0
        %5526 = vmatprep.mubr.bf16.mxu0 0
        %5527 = vmatmul.mubr.bf16.gmra.mrb[0].mxu0 %v5415
        %v5528 = vpop.f32.mrb[0].mxu0
        %v5529 = vadd.f32 0.0, %v5528
        %v5530 = vpop.f32.mrb[0].mxu0
        %v5531 = vpop.f32.mrb[0].mxu0
        %v5532 = vadd.f32 0.0, %v5531
        %v5533 = vpop.f32.mrb[0].mxu0
        %5534 = vmatprep.mubr.bf16.mxu0 0
        %5535 = vmatmul.mubr.bf16.gmra.mrb[0].mxu0 %v5416
        %v5536 = vpop.f32.mrb[0].mxu0
        %v5537 = vadd.f32 0.0, %v5536
        %v5538 = vpop.f32.mrb[0].mxu0
        %v5539 = vpop.f32.mrb[0].mxu0
        %v5540 = vadd.f32 0.0, %v5539
        %v5541 = vpop.f32.mrb[0].mxu0
        %5542 = vmatprep.mubr.bf16.mxu0 0
        %5543 = vmatmul.mubr.bf16.gmra.mrb[0].mxu0 %v5417
        %v5544 = vpop.f32.mrb[0].mxu0
        %v5545 = vadd.f32 0.0, %v5544
        %v5546 = vpop.f32.mrb[0].mxu0
        %v5547 = vpop.f32.mrb[0].mxu0
        %v5548 = vadd.f32 0.0, %v5547
        %v5549 = vpop.f32.mrb[0].mxu0
        %5550 = vmatprep.mubr.bf16.mxu0 0
        %5551 = vmatmul.mubr.bf16.gmra.mrb[0].mxu0 %v5418
        %v5552 = vpop.f32.mrb[0].mxu0
        %v5553 = vadd.f32 0.0, %v5552
        %v5554 = vpop.f32.mrb[0].mxu0
        %v5555 = vpop.f32.mrb[0].mxu0
        %v5556 = vadd.f32 0.0, %v5555
        %v5557 = vpop.f32.mrb[0].mxu0
        %5558 = vmatprep.mubr.bf16.mxu0 0
        %5559 = vmatmul.mubr.bf16.gmra.mrb[0].mxu0 %v5419
        %v5560 = vpop.f32.mrb[0].mxu0
        %v5561 = vadd.f32 0.0, %v5560
        %v5562 = vpop.f32.mrb[0].mxu0
        %v5563 = vpop.f32.mrb[0].mxu0
        %v5564 = vadd.f32 0.0, %v5563
        %v5565 = vpop.f32.mrb[0].mxu0
        %5566 = vmatprep.mubr.bf16.mxu0 0
        %5567 = vmatmul.mubr.bf16.gmra.mrb[0].mxu0 %v5420
        %v5568 = vpop.f32.mrb[0].mxu0
        %v5569 = vadd.f32 0.0, %v5568
        %v5570 = vpop.f32.mrb[0].mxu0
        %v5571 = vpop.f32.mrb[0].mxu0
        %v5572 = vadd.f32 0.0, %v5571
        %v5573 = vpop.f32.mrb[0].mxu0
        %5574 = vmatprep.mubr.bf16.mxu0 0
        %5575 = vmatmul.mubr.bf16.gmra.mrb[0].mxu0 %v5421
        %v5576 = vpop.f32.mrb[0].mxu0
        %v5577 = vadd.f32 0.0, %v5576
        %v5578 = vpop.f32.mrb[0].mxu0
        %v5579 = vpop.f32.mrb[0].mxu0
        %v5580 = vadd.f32 0.0, %v5579
        %v5581 = vpop.f32.mrb[0].mxu0
        %5582 = vdwg.mxu0
        %v5583 = vadd.f32 %v5398, %v5521
        %v5584 = vadd.f32 %v5399, %v5524
        %v5585 = vadd.f32 %v5400, %v5529
        %v5586 = vadd.f32 %v5401, %v5532
        %v5587 = vadd.f32 %v5402, %v5537
        %v5588 = vadd.f32 %v5403, %v5540
        %v5589 = vadd.f32 %v5404, %v5545
        %v5590 = vadd.f32 %v5405, %v5548
        %v5591 = vadd.f32 %v5406, %v5553
        %v5592 = vadd.f32 %v5407, %v5556
        %v5593 = vadd.f32 %v5408, %v5561
        %v5594 = vadd.f32 %v5409, %v5564
        %v5595 = vadd.f32 %v5410, %v5569
        %v5596 = vadd.f32 %v5411, %v5572
        %v5597 = vadd.f32 %v5412, %v5577
        %v5598 = vadd.f32 %v5413, %v5580
        %v5599 = vld [vmem:[%s11] sm:$0x1]
        %v5600 = vunpack.c.l.bf16 %v5599
        %v5601 = vlaneseq
        %v5602 = vshrl.u32 %v5601, 7
        %v5603 = vsub.s32 0, %v5602
        %v5604 = vrot.slane %v5600, %v5603
        %v5605 = vadd.f32 %v5583, %v5604
        %v5606 = vadd.f32 %v5584, %v5604
        %v5607 = vadd.f32 %v5585, %v5604
        %v5608 = vadd.f32 %v5586, %v5604
        %v5609 = vadd.f32 %v5587, %v5604
        %v5610 = vadd.f32 %v5588, %v5604
        %v5611 = vadd.f32 %v5589, %v5604
        %v5612 = vadd.f32 %v5590, %v5604
        %v5613 = vadd.f32 %v5591, %v5604
        %v5614 = vadd.f32 %v5592, %v5604
        %v5615 = vadd.f32 %v5593, %v5604
        %v5616 = vadd.f32 %v5594, %v5604
        %v5617 = vadd.f32 %v5595, %v5604
        %v5618 = vadd.f32 %v5596, %v5604
        %v5619 = vadd.f32 %v5597, %v5604
        %v5620 = vadd.f32 %v5598, %v5604
        %5621 = vst [vmem:[%s545] sm:$0xff] %v5605
        %5622 = vst [vmem:[%s545 + $0x8] sm:$0xff] %v5606
        %5623 = vst [vmem:[%s545 + $0x10] sm:$0xff] %v5607
        %5624 = vst [vmem:[%s545 + $0x18] sm:$0xff] %v5608
        %5625 = vst [vmem:[%s545 + $0x20] sm:$0xff] %v5609
        %5626 = vst [vmem:[%s545 + $0x28] sm:$0xff] %v5610
        %5627 = vst [vmem:[%s545 + $0x30] sm:$0xff] %v5611
        %5628 = vst [vmem:[%s545 + $0x38] sm:$0xff] %v5612
        %5629 = vst [vmem:[%s545 + $0x40] sm:$0xff] %v5613
        %5630 = vst [vmem:[%s545 + $0x48] sm:$0xff] %v5614
        %5631 = vst [vmem:[%s545 + $0x50] sm:$0xff] %v5615
        %5632 = vst [vmem:[%s545 + $0x58] sm:$0xff] %v5616
        %5633 = vst [vmem:[%s545 + $0x60] sm:$0xff] %v5617
        %5634 = vst [vmem:[%s545 + $0x68] sm:$0xff] %v5618
        %5635 = vst [vmem:[%s545 + $0x70] sm:$0xff] %v5619
        %5636 = vst [vmem:[%s545 + $0x78] sm:$0xff] %v5620
        %s5637 = sand.u32 %s304, 1
        %s5638 = scalar_lea.sflag [#allocation4], %s5637
        %s5639 = sand.u32 %s304, 1
        %s5640 = smul.addr %s5639, 128
        %s5641 = scalar_lea.vmem [#allocation14], %s5640
        // Predicated region
        $region97: #{tpu_custom_call.1} parent=67 // pred_check
          %p5642 = pneg %p314
        $region98: #{tpu_custom_call.1} parent=67 // pred_check_branch
          %5644 = sbr.rel (%p5642) target = $region100
        $region99: #{tpu_custom_call.1} parent=67 // pred_region
          %s5645 = smul.u32 8, %s34
          %s5647 = ssub.s32 2048, 2048
          %5648 = vsyncadd %s5638, %s5647
          %s5649 = smul.addr %s5645, 2
          %s5650 = smul.addr %s5649, 128
          %s5651 = scalar_lea.hbm %s12, %s5650
          %s5652 = sshll.u32 %s5641, 4
          %s5653 = int_to_ptr.vmem [resolvable:$true] %s5652
          %5658 = dma.vmem_to_hbm [thread:$0]  %s5653, 2048, %s5651, %s5638, 128, 128, 8
        $region100: #{tpu_custom_call.1} parent=67 // pred_fallthru
          _
      $region68: #{tpu_custom_call.1} parent=5 // pred_fallthru
        _
      %p5659 = scmp.le.s32.totalorder 2, %s29
      // Predicated region
      $region101: #{tpu_custom_call.1} parent=5 // pred_check
        %p5660 = pneg %p5659
      $region102: #{tpu_custom_call.1} parent=5 // pred_check_branch
        %5662 = sbr.rel (%p5660) target = $region104
      $region103: #{tpu_custom_call.1} parent=5 // pred_region
        %s5663 = ssub.s32 %s29, 2
        // Predicated region
        $region105: #{tpu_custom_call.1} parent=103 // pred_check
          %p5664 = pneg %p320
        $region106: #{tpu_custom_call.1} parent=103 // pred_check_branch
          %5666 = sbr.rel (%p5664) target = $region108
        $region107: #{tpu_custom_call.1} parent=103 // pred_region
          %s5667 = sand.u32 %s305, 1
          %s5668 = scalar_lea.sflag [#allocation4], %s5667
          %s5669 = sand.u32 %s305, 1
          %s5670 = smul.addr %s5669, 128
          %s5671 = scalar_lea.vmem [#allocation14], %s5670
          %5672 = dma.done %s5668, 2048
        $region108: #{tpu_custom_call.1} parent=103 // pred_fallthru
          _
      $region104: #{tpu_custom_call.1} parent=5 // pred_fallthru
        _
    $region6: #{tpu_custom_call.1} parent=1 // loop_footer
      %s33 = sadd.s32 1, %s29
    $region7: #{tpu_custom_call.1} parent=1 // loop_footer_branch
      %28 = sbr.rel target = $region3
    $region8: #{tpu_custom_call.1} parent=1 // loop_exit
      _
    %5673 = vsyncpa [#allocation3], 1
    %s5674 = scalar_lea.sflag [#allocation3], 1
    %5675 = vsyncpa %s5674, 1
    %5676 = vsyncpa [#allocation6], 1
    %s5677 = scalar_lea.sflag [#allocation6], 1
    %5678 = vsyncpa %s5677, 1
    %5679 = vsyncpa [#allocation9], 1
    %5680 = vsyncpa [#allocation12], 1
    %5681 = vsyncpa [#allocation4], 1
    %s5682 = scalar_lea.sflag [#allocation4], 1
    %5683 = vsyncpa %s5682, 1

</llo_original>
